<compile_context>
chip_gen: v6e
topology: v6e:2x2x1
jax: 0.10.0
libtpu: 0.0.40
codegen_flags: <defaults>
</compile_context>

<pallas_src>
import jax
import jax.numpy as jnp
from jax import lax
from jax.experimental import pallas as pl
from jax.experimental.pallas import tpu as pltpu


def simple_rnn_kernel(x_ref, w_in_ref, b_in_ref,
                      w_ih0_ref, w_hh0_ref, b0_ref,
                      w_ih1_ref, w_hh1_ref, b1_ref,
                      w_out_ref, b_out_ref,
                      out_ref, hn_ref, cn_ref,
                      h0_seq, h1_seq):
    steps = x_ref.shape[0]            # static at trace time
    hp = w_hh0_ref.shape[0]           # lane-padded hidden size (128)

    # ---- hoisted, non-recurrent matmuls (M = steps, dense MXU work) ----
    z = jnp.dot(x_ref[...], w_in_ref[...],
                preferred_element_type=jnp.float32) + b_in_ref[...]
    gx0 = jnp.dot(z, w_ih0_ref[...],
                  preferred_element_type=jnp.float32) + b0_ref[...]

    def cell(gx_row, h, c, w_hh_ref):
        """One LSTM cell step; gx_row already holds x-projection + bias."""
        gates = gx_row + jnp.dot(h, w_hh_ref[...],
                                 preferred_element_type=jnp.float32)
        # Each gate block is a whole 128-lane slice (no masked sub-lane extract).
        i = jax.nn.sigmoid(gates[:, 0 * hp:1 * hp])
        f = jax.nn.sigmoid(gates[:, 1 * hp:2 * hp])
        g = jnp.tanh(gates[:, 2 * hp:3 * hp])
        o = jax.nn.sigmoid(gates[:, 3 * hp:4 * hp])
        c_new = f * c + i * g
        h_new = o * jnp.tanh(c_new)
        return h_new, c_new

    # ---- layer 0 recurrence (statically unrolled; state lives in vregs) ----
    # hidden=None in the PyTorch forward -> zero-initialized (h, c).
    h = jnp.zeros((1, hp), jnp.float32)
    c = jnp.zeros((1, hp), jnp.float32)
    for t in range(steps):            # steps is small/static; full unroll
        h, c = cell(gx0[t:t + 1, :], h, c, w_hh0_ref)
        h0_seq[t:t + 1, :] = h
    hn_ref[0:1, :] = h
    cn_ref[0:1, :] = c

    # TODO(synk): nn.LSTM applies dropout(p=0.05) between layers only in
    # training mode; this forward matches eval semantics (no dropout).

    # ---- hoisted layer-1 input projection over the whole h0 sequence ----
    gx1 = jnp.dot(h0_seq[...], w_ih1_ref[...],
                  preferred_element_type=jnp.float32) + b1_ref[...]

    # ---- layer 1 recurrence ----
    h = jnp.zeros((1, hp), jnp.float32)
    c = jnp.zeros((1, hp), jnp.float32)
    for t in range(steps):
        h, c = cell(gx1[t:t + 1, :], h, c, w_hh1_ref)
        h1_seq[t:t + 1, :] = h
    hn_ref[1:2, :] = h
    cn_ref[1:2, :] = c

    # ---- single lane-dense output matmul + store (steps, 128) ----
    out_ref[...] = (jnp.dot(h1_seq[...], w_out_ref[...],
                            preferred_element_type=jnp.float32)
                    + b_out_ref[...])


def simple_rnn_forward(inputs, params):
    """Pallas implementation of SimpleRNN.forward(inputs, hidden=None, force=True).

    Note: for many independent sequences, batch them into a single pallas_call
    (state scratch (2, B, HP)) rather than calling this per sequence.
    """
    steps = inputs.shape[0]
    hidden = params["w_hh0"].shape[0]
    hp = ((hidden + 127) // 128) * 128        # lane-aligned hidden (128 for H=32)
    op = 128                                  # lane-dense output width (real = 3)

    def pad2d(w, rows, cols):
        return jnp.pad(w, ((0, rows - w.shape[0]), (0, cols - w.shape[1])))

    def pad_gate_mat(w, rows):                # (in, 4H) -> (rows, 4*hp), per-gate pad
        in_dim = w.shape[0]
        w4 = w.reshape(in_dim, 4, hidden)
        w4 = jnp.pad(w4, ((0, rows - in_dim), (0, 0), (0, hp - hidden)))
        return w4.reshape(rows, 4 * hp)

    def pad_gate_bias(b):                     # (1, 4H) -> (1, 4*hp)
        b4 = b.reshape(1, 4, hidden)
        b4 = jnp.pad(b4, ((0, 0), (0, 0), (0, hp - hidden)))
        return b4.reshape(1, 4 * hp)

    args = (
        inputs,
        pad2d(params["w_in"], inputs.shape[1], hp),
        pad2d(params["b_in"], 1, hp),
        pad_gate_mat(params["w_ih0"], hp),
        pad_gate_mat(params["w_hh0"], hp),
        pad_gate_bias(params["b0"]),
        pad_gate_mat(params["w_ih1"], hp),
        pad_gate_mat(params["w_hh1"], hp),
        pad_gate_bias(params["b1"]),
        pad2d(params["w_out"], hp, op),
        pad2d(params["b_out"], 1, op),
    )

    def vmem():
        return pl.BlockSpec(memory_space=pltpu.MemorySpace.VMEM)

    outs, h_n, c_n = pl.pallas_call(
        simple_rnn_kernel,
        out_shape=(jax.ShapeDtypeStruct((steps, op), jnp.float32),
                   jax.ShapeDtypeStruct((2, hp), jnp.float32),
                   jax.ShapeDtypeStruct((2, hp), jnp.float32)),
        in_specs=[vmem() for _ in range(len(args))],
        out_specs=(vmem(), vmem(), vmem()),
        scratch_shapes=[pltpu.VMEM((steps, hp), jnp.float32),   # layer-0 h sequence
                        pltpu.VMEM((steps, hp), jnp.float32)],  # layer-1 h sequence
    )(*args)

    # Match PyTorch result shapes:
    #   outputs: (steps, 3, 1); hidden = (h_n, c_n), each (num_layers=2, batch=1, H)
    outputs = outs[:, :3].reshape(steps, 3, 1)
    return outputs, (h_n[:, :hidden].reshape(2, 1, hidden),
                     c_n[:, :hidden].reshape(2, 1, hidden))


def reference_forward(inputs, params):
    """Pure-JAX reference mirroring the PyTorch module (eval mode), f32-accurate."""
    steps = inputs.shape[0]
    hidden = params["w_hh0"].shape[0]
    prec = lax.Precision.HIGHEST

    def dot(a, b):
        return jnp.dot(a, b, precision=prec, preferred_element_type=jnp.float32)

    def cell(x, h, c, w_ih, w_hh, b):
        gates = dot(x, w_ih) + dot(h, w_hh) + b
        i = jax.nn.sigmoid(gates[:, 0:hidden])
        f = jax.nn.sigmoid(gates[:, hidden:2 * hidden])
        g = jnp.tanh(gates[:, 2 * hidden:3 * hidden])
        o = jax.nn.sigmoid(gates[:, 3 * hidden:4 * hidden])
        c_new = f * c + i * g
        return o * jnp.tanh(c_new), c_new

    h = jnp.zeros((2, hidden), jnp.float32)
    c = jnp.zeros((2, hidden), jnp.float32)
    outs = []
    for t in range(steps):
        z = dot(inputs[t:t + 1, :], params["w_in"]) + params["b_in"]
        h0, c0 = cell(z, h[0:1], c[0:1],
                      params["w_ih0"], params["w_hh0"], params["b0"])
        h1, c1 = cell(h0, h[1:2], c[1:2],
                      params["w_ih1"], params["w_hh1"], params["b1"])
        h = jnp.concatenate([h0, h1], axis=0)
        c = jnp.concatenate([c0, c1], axis=0)
        outs.append(dot(h1, params["w_out"]) + params["b_out"])
    outputs = jnp.stack(outs, axis=0).reshape(steps, 3, 1)
    return outputs, (h.reshape(2, 1, hidden), c.reshape(2, 1, hidden))


def init_params(key, hidden):
    """Deterministic init with PyTorch-style uniform(-1/sqrt(fan_in), 1/sqrt(fan_in))."""
    ks = jax.random.split(key, 12)

    def u(k, shape, fan_in):
        bound = 1.0 / float(jnp.sqrt(float(fan_in)))
        return jax.random.uniform(k, shape, jnp.float32, -bound, bound)

    return {
        "w_in":  u(ks[0], (25, hidden), 25),
        "b_in":  u(ks[1], (1, hidden), 25),
        "w_ih0": u(ks[2], (hidden, 4 * hidden), hidden),
        "w_hh0": u(ks[3], (hidden, 4 * hidden), hidden),
        "b0":    u(ks[4], (1, 4 * hidden), hidden) + u(ks[5], (1, 4 * hidden), hidden),
        "w_ih1": u(ks[6], (hidden, 4 * hidden), hidden),
        "w_hh1": u(ks[7], (hidden, 4 * hidden), hidden),
        "b1":    u(ks[8], (1, 4 * hidden), hidden) + u(ks[9], (1, 4 * hidden), hidden),
        "w_out": u(ks[10], (hidden, 3), hidden),
        "b_out": u(ks[11], (1, 3), hidden),
    }


if __name__ == "__main__":
    HIDDEN = 32
    STEPS = 8

    key = jax.random.PRNGKey(0)
    pkey, xkey = jax.random.split(key)
    params = init_params(pkey, HIDDEN)
    inputs = jax.random.normal(xkey, (STEPS, 25), jnp.float32)

    outputs, (h_n, c_n) = simple_rnn_forward(inputs, params)
    jax.block_until_ready((outputs, h_n, c_n))

    assert outputs.shape == (STEPS, 3, 1)
    assert h_n.shape == (2, 1, HIDDEN) and c_n.shape == (2, 1, HIDDEN)

    ref_out, (ref_h, ref_c) = reference_forward(inputs, params)
    assert jnp.allclose(outputs, ref_out, atol=2e-5, rtol=2e-5), \
        float(jnp.max(jnp.abs(outputs - ref_out)))
    assert jnp.allclose(h_n, ref_h, atol=2e-5, rtol=2e-5), \
        float(jnp.max(jnp.abs(h_n - ref_h)))
    assert jnp.allclose(c_n, ref_c, atol=2e-5, rtol=2e-5), \
        float(jnp.max(jnp.abs(c_n - ref_c)))

    print("KERNEL_OK")
</pallas_src>

<mosaic_0001>
module attributes {stable_mosaic.version = 11 : i64} {
  func.func @simple_rnn_kernel(%arg0: memref<8x25xf32, #tpu.memory_space<vmem>>, %arg1: memref<25x128xf32, #tpu.memory_space<vmem>>, %arg2: memref<1x128xf32, #tpu.memory_space<vmem>>, %arg3: memref<128x512xf32, #tpu.memory_space<vmem>>, %arg4: memref<128x512xf32, #tpu.memory_space<vmem>>, %arg5: memref<1x512xf32, #tpu.memory_space<vmem>>, %arg6: memref<128x512xf32, #tpu.memory_space<vmem>>, %arg7: memref<128x512xf32, #tpu.memory_space<vmem>>, %arg8: memref<1x512xf32, #tpu.memory_space<vmem>>, %arg9: memref<128x128xf32, #tpu.memory_space<vmem>>, %arg10: memref<1x128xf32, #tpu.memory_space<vmem>>, %arg11: memref<8x128xf32, #tpu.memory_space<vmem>>, %arg12: memref<2x128xf32, #tpu.memory_space<vmem>>, %arg13: memref<2x128xf32, #tpu.memory_space<vmem>>, %arg14: memref<8x128xf32, #tpu.memory_space<vmem>>, %arg15: memref<8x128xf32, #tpu.memory_space<vmem>>) attributes {dimension_semantics = [], scalar_prefetch = 0 : i64, scratch_operands = 2 : i64, tpu.core_type = #tpu.core_type<tc>} {
    %c0 = arith.constant 0 : index
    %c0_0 = arith.constant 0 : index
    %0 = vector.load %arg0[%c0, %c0_0] : memref<8x25xf32, #tpu.memory_space<vmem>>, vector<8x25xf32>
    %c0_1 = arith.constant 0 : index
    %c0_2 = arith.constant 0 : index
    %1 = vector.load %arg1[%c0_1, %c0_2] : memref<25x128xf32, #tpu.memory_space<vmem>>, vector<25x128xf32>
    %cst = arith.constant dense<0.000000e+00> : vector<8x128xf32>
    %2 = tpu.matmul %0, %1, %cst {dimension_numbers = #tpu.dot_dimension_numbers<[1], [0], [0], [1], [0, 0, 1, 1], [], []>} : vector<8x25xf32>, vector<25x128xf32>, vector<8x128xf32> -> vector<8x128xf32>
    %c0_3 = arith.constant 0 : index
    %c0_4 = arith.constant 0 : index
    %3 = vector.load %arg2[%c0_3, %c0_4] : memref<1x128xf32, #tpu.memory_space<vmem>>, vector<1x128xf32>
    %4 = vector.broadcast %3 : vector<1x128xf32> to vector<8x128xf32>
    %5 = arith.addf %2, %4 : vector<8x128xf32>
    %c0_5 = arith.constant 0 : index
    %c0_6 = arith.constant 0 : index
    %6 = vector.load %arg3[%c0_5, %c0_6] : memref<128x512xf32, #tpu.memory_space<vmem>>, vector<128x512xf32>
    %cst_7 = arith.constant dense<0.000000e+00> : vector<8x512xf32>
    %7 = tpu.matmul %5, %6, %cst_7 {dimension_numbers = #tpu.dot_dimension_numbers<[1], [0], [0], [1], [0, 0, 1, 1], [], []>} : vector<8x128xf32>, vector<128x512xf32>, vector<8x512xf32> -> vector<8x512xf32>
    %c0_8 = arith.constant 0 : index
    %c0_9 = arith.constant 0 : index
    %8 = vector.load %arg5[%c0_8, %c0_9] : memref<1x512xf32, #tpu.memory_space<vmem>>, vector<1x512xf32>
    %9 = vector.broadcast %8 : vector<1x512xf32> to vector<8x512xf32>
    %10 = arith.addf %7, %9 : vector<8x512xf32>
    %cst_10 = arith.constant 0.000000e+00 : f32
    %11 = vector.broadcast %cst_10 : f32 to vector<1x128xf32>
    %cst_11 = arith.constant 0.000000e+00 : f32
    %12 = vector.broadcast %cst_11 : f32 to vector<1x128xf32>
    %13 = vector.extract_strided_slice %10 {offsets = [0, 0], sizes = [1, 512], strides = [1, 1]} : vector<8x512xf32> to vector<1x512xf32>
    %c0_12 = arith.constant 0 : index
    %c0_13 = arith.constant 0 : index
    %14 = vector.load %arg4[%c0_12, %c0_13] : memref<128x512xf32, #tpu.memory_space<vmem>>, vector<128x512xf32>
    %cst_14 = arith.constant dense<0.000000e+00> : vector<1x512xf32>
    %15 = tpu.matmul %11, %14, %cst_14 {dimension_numbers = #tpu.dot_dimension_numbers<[1], [0], [0], [1], [0, 0, 1, 1], [], []>} : vector<1x128xf32>, vector<128x512xf32>, vector<1x512xf32> -> vector<1x512xf32>
    %16 = arith.addf %13, %15 : vector<1x512xf32>
    %17 = vector.extract_strided_slice %16 {offsets = [0, 0], sizes = [1, 128], strides = [1, 1]} : vector<1x512xf32> to vector<1x128xf32>
    %18 = arith.negf %17 : vector<1x128xf32>
    %19 = math.exp %18 : vector<1x128xf32>
    %cst_15 = arith.constant 1.000000e+00 : f32
    %20 = vector.broadcast %cst_15 : f32 to vector<1x128xf32>
    %21 = arith.addf %20, %19 : vector<1x128xf32>
    %22 = arith.divf %20, %21 : vector<1x128xf32>
    %23 = vector.extract_strided_slice %16 {offsets = [0, 128], sizes = [1, 128], strides = [1, 1]} : vector<1x512xf32> to vector<1x128xf32>
    %24 = arith.negf %23 : vector<1x128xf32>
    %25 = math.exp %24 : vector<1x128xf32>
    %cst_16 = arith.constant 1.000000e+00 : f32
    %26 = vector.broadcast %cst_16 : f32 to vector<1x128xf32>
    %27 = arith.addf %26, %25 : vector<1x128xf32>
    %28 = arith.divf %26, %27 : vector<1x128xf32>
    %29 = vector.extract_strided_slice %16 {offsets = [0, 256], sizes = [1, 128], strides = [1, 1]} : vector<1x512xf32> to vector<1x128xf32>
    %30 = math.tanh %29 : vector<1x128xf32>
    %31 = vector.extract_strided_slice %16 {offsets = [0, 384], sizes = [1, 128], strides = [1, 1]} : vector<1x512xf32> to vector<1x128xf32>
    %32 = arith.negf %31 : vector<1x128xf32>
    %33 = math.exp %32 : vector<1x128xf32>
    %cst_17 = arith.constant 1.000000e+00 : f32
    %34 = vector.broadcast %cst_17 : f32 to vector<1x128xf32>
    %35 = arith.addf %34, %33 : vector<1x128xf32>
    %36 = arith.divf %34, %35 : vector<1x128xf32>
    %37 = arith.mulf %28, %12 : vector<1x128xf32>
    %38 = arith.mulf %22, %30 : vector<1x128xf32>
    %39 = arith.addf %37, %38 : vector<1x128xf32>
    %40 = math.tanh %39 : vector<1x128xf32>
    %41 = arith.mulf %36, %40 : vector<1x128xf32>
    %c0_18 = arith.constant 0 : index
    %c0_19 = arith.constant 0 : index
    %42 = vector.load %arg14[%c0_18, %c0_19] : memref<8x128xf32, #tpu.memory_space<vmem>>, vector<1x128xf32>
    tpu.vector_store %arg14[%c0_18, %c0_19], %41 {strides = array<i32>} : memref<8x128xf32, #tpu.memory_space<vmem>>, vector<1x128xf32>,
    %43 = vector.extract_strided_slice %10 {offsets = [1, 0], sizes = [1, 512], strides = [1, 1]} : vector<8x512xf32> to vector<1x512xf32>
    %c0_20 = arith.constant 0 : index
    %c0_21 = arith.constant 0 : index
    %44 = vector.load %arg4[%c0_20, %c0_21] : memref<128x512xf32, #tpu.memory_space<vmem>>, vector<128x512xf32>
    %cst_22 = arith.constant dense<0.000000e+00> : vector<1x512xf32>
    %45 = tpu.matmul %41, %44, %cst_22 {dimension_numbers = #tpu.dot_dimension_numbers<[1], [0], [0], [1], [0, 0, 1, 1], [], []>} : vector<1x128xf32>, vector<128x512xf32>, vector<1x512xf32> -> vector<1x512xf32>
    %46 = arith.addf %43, %45 : vector<1x512xf32>
    %47 = vector.extract_strided_slice %46 {offsets = [0, 0], sizes = [1, 128], strides = [1, 1]} : vector<1x512xf32> to vector<1x128xf32>
    %48 = arith.negf %47 : vector<1x128xf32>
    %49 = math.exp %48 : vector<1x128xf32>
    %cst_23 = arith.constant 1.000000e+00 : f32
    %50 = vector.broadcast %cst_23 : f32 to vector<1x128xf32>
    %51 = arith.addf %50, %49 : vector<1x128xf32>
    %52 = arith.divf %50, %51 : vector<1x128xf32>
    %53 = vector.extract_strided_slice %46 {offsets = [0, 128], sizes = [1, 128], strides = [1, 1]} : vector<1x512xf32> to vector<1x128xf32>
    %54 = arith.negf %53 : vector<1x128xf32>
    %55 = math.exp %54 : vector<1x128xf32>
    %cst_24 = arith.constant 1.000000e+00 : f32
    %56 = vector.broadcast %cst_24 : f32 to vector<1x128xf32>
    %57 = arith.addf %56, %55 : vector<1x128xf32>
    %58 = arith.divf %56, %57 : vector<1x128xf32>
    %59 = vector.extract_strided_slice %46 {offsets = [0, 256], sizes = [1, 128], strides = [1, 1]} : vector<1x512xf32> to vector<1x128xf32>
    %60 = math.tanh %59 : vector<1x128xf32>
    %61 = vector.extract_strided_slice %46 {offsets = [0, 384], sizes = [1, 128], strides = [1, 1]} : vector<1x512xf32> to vector<1x128xf32>
    %62 = arith.negf %61 : vector<1x128xf32>
    %63 = math.exp %62 : vector<1x128xf32>
    %cst_25 = arith.constant 1.000000e+00 : f32
    %64 = vector.broadcast %cst_25 : f32 to vector<1x128xf32>
    %65 = arith.addf %64, %63 : vector<1x128xf32>
    %66 = arith.divf %64, %65 : vector<1x128xf32>
    %67 = arith.mulf %58, %39 : vector<1x128xf32>
    %68 = arith.mulf %52, %60 : vector<1x128xf32>
    %69 = arith.addf %67, %68 : vector<1x128xf32>
    %70 = math.tanh %69 : vector<1x128xf32>
    %71 = arith.mulf %66, %70 : vector<1x128xf32>
    %c1 = arith.constant 1 : index
    %c0_26 = arith.constant 0 : index
    %72 = vector.load %arg14[%c1, %c0_26] : memref<8x128xf32, #tpu.memory_space<vmem>>, vector<1x128xf32>
    tpu.vector_store %arg14[%c1, %c0_26], %71 {strides = array<i32>} : memref<8x128xf32, #tpu.memory_space<vmem>>, vector<1x128xf32>,
    %73 = vector.extract_strided_slice %10 {offsets = [2, 0], sizes = [1, 512], strides = [1, 1]} : vector<8x512xf32> to vector<1x512xf32>
    %c0_27 = arith.constant 0 : index
    %c0_28 = arith.constant 0 : index
    %74 = vector.load %arg4[%c0_27, %c0_28] : memref<128x512xf32, #tpu.memory_space<vmem>>, vector<128x512xf32>
    %cst_29 = arith.constant dense<0.000000e+00> : vector<1x512xf32>
    %75 = tpu.matmul %71, %74, %cst_29 {dimension_numbers = #tpu.dot_dimension_numbers<[1], [0], [0], [1], [0, 0, 1, 1], [], []>} : vector<1x128xf32>, vector<128x512xf32>, vector<1x512xf32> -> vector<1x512xf32>
    %76 = arith.addf %73, %75 : vector<1x512xf32>
    %77 = vector.extract_strided_slice %76 {offsets = [0, 0], sizes = [1, 128], strides = [1, 1]} : vector<1x512xf32> to vector<1x128xf32>
    %78 = arith.negf %77 : vector<1x128xf32>
    %79 = math.exp %78 : vector<1x128xf32>
    %cst_30 = arith.constant 1.000000e+00 : f32
    %80 = vector.broadcast %cst_30 : f32 to vector<1x128xf32>
    %81 = arith.addf %80, %79 : vector<1x128xf32>
    %82 = arith.divf %80, %81 : vector<1x128xf32>
    %83 = vector.extract_strided_slice %76 {offsets = [0, 128], sizes = [1, 128], strides = [1, 1]} : vector<1x512xf32> to vector<1x128xf32>
    %84 = arith.negf %83 : vector<1x128xf32>
    %85 = math.exp %84 : vector<1x128xf32>
    %cst_31 = arith.constant 1.000000e+00 : f32
    %86 = vector.broadcast %cst_31 : f32 to vector<1x128xf32>
    %87 = arith.addf %86, %85 : vector<1x128xf32>
    %88 = arith.divf %86, %87 : vector<1x128xf32>
    %89 = vector.extract_strided_slice %76 {offsets = [0, 256], sizes = [1, 128], strides = [1, 1]} : vector<1x512xf32> to vector<1x128xf32>
    %90 = math.tanh %89 : vector<1x128xf32>
    %91 = vector.extract_strided_slice %76 {offsets = [0, 384], sizes = [1, 128], strides = [1, 1]} : vector<1x512xf32> to vector<1x128xf32>
    %92 = arith.negf %91 : vector<1x128xf32>
    %93 = math.exp %92 : vector<1x128xf32>
    %cst_32 = arith.constant 1.000000e+00 : f32
    %94 = vector.broadcast %cst_32 : f32 to vector<1x128xf32>
    %95 = arith.addf %94, %93 : vector<1x128xf32>
    %96 = arith.divf %94, %95 : vector<1x128xf32>
    %97 = arith.mulf %88, %69 : vector<1x128xf32>
    %98 = arith.mulf %82, %90 : vector<1x128xf32>
    %99 = arith.addf %97, %98 : vector<1x128xf32>
    %100 = math.tanh %99 : vector<1x128xf32>
    %101 = arith.mulf %96, %100 : vector<1x128xf32>
    %c2 = arith.constant 2 : index
    %c0_33 = arith.constant 0 : index
    %102 = vector.load %arg14[%c2, %c0_33] : memref<8x128xf32, #tpu.memory_space<vmem>>, vector<1x128xf32>
    tpu.vector_store %arg14[%c2, %c0_33], %101 {strides = array<i32>} : memref<8x128xf32, #tpu.memory_space<vmem>>, vector<1x128xf32>,
    %103 = vector.extract_strided_slice %10 {offsets = [3, 0], sizes = [1, 512], strides = [1, 1]} : vector<8x512xf32> to vector<1x512xf32>
    %c0_34 = arith.constant 0 : index
    %c0_35 = arith.constant 0 : index
    %104 = vector.load %arg4[%c0_34, %c0_35] : memref<128x512xf32, #tpu.memory_space<vmem>>, vector<128x512xf32>
    %cst_36 = arith.constant dense<0.000000e+00> : vector<1x512xf32>
    %105 = tpu.matmul %101, %104, %cst_36 {dimension_numbers = #tpu.dot_dimension_numbers<[1], [0], [0], [1], [0, 0, 1, 1], [], []>} : vector<1x128xf32>, vector<128x512xf32>, vector<1x512xf32> -> vector<1x512xf32>
    %106 = arith.addf %103, %105 : vector<1x512xf32>
    %107 = vector.extract_strided_slice %106 {offsets = [0, 0], sizes = [1, 128], strides = [1, 1]} : vector<1x512xf32> to vector<1x128xf32>
    %108 = arith.negf %107 : vector<1x128xf32>
    %109 = math.exp %108 : vector<1x128xf32>
    %cst_37 = arith.constant 1.000000e+00 : f32
    %110 = vector.broadcast %cst_37 : f32 to vector<1x128xf32>
    %111 = arith.addf %110, %109 : vector<1x128xf32>
    %112 = arith.divf %110, %111 : vector<1x128xf32>
    %113 = vector.extract_strided_slice %106 {offsets = [0, 128], sizes = [1, 128], strides = [1, 1]} : vector<1x512xf32> to vector<1x128xf32>
    %114 = arith.negf %113 : vector<1x128xf32>
    %115 = math.exp %114 : vector<1x128xf32>
    %cst_38 = arith.constant 1.000000e+00 : f32
    %116 = vector.broadcast %cst_38 : f32 to vector<1x128xf32>
    %117 = arith.addf %116, %115 : vector<1x128xf32>
    %118 = arith.divf %116, %117 : vector<1x128xf32>
    %119 = vector.extract_strided_slice %106 {offsets = [0, 256], sizes = [1, 128], strides = [1, 1]} : vector<1x512xf32> to vector<1x128xf32>
    %120 = math.tanh %119 : vector<1x128xf32>
    %121 = vector.extract_strided_slice %106 {offsets = [0, 384], sizes = [1, 128], strides = [1, 1]} : vector<1x512xf32> to vector<1x128xf32>
    %122 = arith.negf %121 : vector<1x128xf32>
    %123 = math.exp %122 : vector<1x128xf32>
    %cst_39 = arith.constant 1.000000e+00 : f32
    %124 = vector.broadcast %cst_39 : f32 to vector<1x128xf32>
    %125 = arith.addf %124, %123 : vector<1x128xf32>
    %126 = arith.divf %124, %125 : vector<1x128xf32>
    %127 = arith.mulf %118, %99 : vector<1x128xf32>
    %128 = arith.mulf %112, %120 : vector<1x128xf32>
    %129 = arith.addf %127, %128 : vector<1x128xf32>
    %130 = math.tanh %129 : vector<1x128xf32>
    %131 = arith.mulf %126, %130 : vector<1x128xf32>
    %c3 = arith.constant 3 : index
    %c0_40 = arith.constant 0 : index
    %132 = vector.load %arg14[%c3, %c0_40] : memref<8x128xf32, #tpu.memory_space<vmem>>, vector<1x128xf32>
    tpu.vector_store %arg14[%c3, %c0_40], %131 {strides = array<i32>} : memref<8x128xf32, #tpu.memory_space<vmem>>, vector<1x128xf32>,
    %133 = vector.extract_strided_slice %10 {offsets = [4, 0], sizes = [1, 512], strides = [1, 1]} : vector<8x512xf32> to vector<1x512xf32>
    %c0_41 = arith.constant 0 : index
    %c0_42 = arith.constant 0 : index
    %134 = vector.load %arg4[%c0_41, %c0_42] : memref<128x512xf32, #tpu.memory_space<vmem>>, vector<128x512xf32>
    %cst_43 = arith.constant dense<0.000000e+00> : vector<1x512xf32>
    %135 = tpu.matmul %131, %134, %cst_43 {dimension_numbers = #tpu.dot_dimension_numbers<[1], [0], [0], [1], [0, 0, 1, 1], [], []>} : vector<1x128xf32>, vector<128x512xf32>, vector<1x512xf32> -> vector<1x512xf32>
    %136 = arith.addf %133, %135 : vector<1x512xf32>
    %137 = vector.extract_strided_slice %136 {offsets = [0, 0], sizes = [1, 128], strides = [1, 1]} : vector<1x512xf32> to vector<1x128xf32>
    %138 = arith.negf %137 : vector<1x128xf32>
    %139 = math.exp %138 : vector<1x128xf32>
    %cst_44 = arith.constant 1.000000e+00 : f32
    %140 = vector.broadcast %cst_44 : f32 to vector<1x128xf32>
    %141 = arith.addf %140, %139 : vector<1x128xf32>
    %142 = arith.divf %140, %141 : vector<1x128xf32>
    %143 = vector.extract_strided_slice %136 {offsets = [0, 128], sizes = [1, 128], strides = [1, 1]} : vector<1x512xf32> to vector<1x128xf32>
    %144 = arith.negf %143 : vector<1x128xf32>
    %145 = math.exp %144 : vector<1x128xf32>
    %cst_45 = arith.constant 1.000000e+00 : f32
    %146 = vector.broadcast %cst_45 : f32 to vector<1x128xf32>
    %147 = arith.addf %146, %145 : vector<1x128xf32>
    %148 = arith.divf %146, %147 : vector<1x128xf32>
    %149 = vector.extract_strided_slice %136 {offsets = [0, 256], sizes = [1, 128], strides = [1, 1]} : vector<1x512xf32> to vector<1x128xf32>
    %150 = math.tanh %149 : vector<1x128xf32>
    %151 = vector.extract_strided_slice %136 {offsets = [0, 384], sizes = [1, 128], strides = [1, 1]} : vector<1x512xf32> to vector<1x128xf32>
    %152 = arith.negf %151 : vector<1x128xf32>
    %153 = math.exp %152 : vector<1x128xf32>
    %cst_46 = arith.constant 1.000000e+00 : f32
    %154 = vector.broadcast %cst_46 : f32 to vector<1x128xf32>
    %155 = arith.addf %154, %153 : vector<1x128xf32>
    %156 = arith.divf %154, %155 : vector<1x128xf32>
    %157 = arith.mulf %148, %129 : vector<1x128xf32>
    %158 = arith.mulf %142, %150 : vector<1x128xf32>
    %159 = arith.addf %157, %158 : vector<1x128xf32>
    %160 = math.tanh %159 : vector<1x128xf32>
    %161 = arith.mulf %156, %160 : vector<1x128xf32>
    %c4 = arith.constant 4 : index
    %c0_47 = arith.constant 0 : index
    %162 = vector.load %arg14[%c4, %c0_47] : memref<8x128xf32, #tpu.memory_space<vmem>>, vector<1x128xf32>
    tpu.vector_store %arg14[%c4, %c0_47], %161 {strides = array<i32>} : memref<8x128xf32, #tpu.memory_space<vmem>>, vector<1x128xf32>,
    %163 = vector.extract_strided_slice %10 {offsets = [5, 0], sizes = [1, 512], strides = [1, 1]} : vector<8x512xf32> to vector<1x512xf32>
    %c0_48 = arith.constant 0 : index
    %c0_49 = arith.constant 0 : index
    %164 = vector.load %arg4[%c0_48, %c0_49] : memref<128x512xf32, #tpu.memory_space<vmem>>, vector<128x512xf32>
    %cst_50 = arith.constant dense<0.000000e+00> : vector<1x512xf32>
    %165 = tpu.matmul %161, %164, %cst_50 {dimension_numbers = #tpu.dot_dimension_numbers<[1], [0], [0], [1], [0, 0, 1, 1], [], []>} : vector<1x128xf32>, vector<128x512xf32>, vector<1x512xf32> -> vector<1x512xf32>
    %166 = arith.addf %163, %165 : vector<1x512xf32>
    %167 = vector.extract_strided_slice %166 {offsets = [0, 0], sizes = [1, 128], strides = [1, 1]} : vector<1x512xf32> to vector<1x128xf32>
    %168 = arith.negf %167 : vector<1x128xf32>
    %169 = math.exp %168 : vector<1x128xf32>
    %cst_51 = arith.constant 1.000000e+00 : f32
    %170 = vector.broadcast %cst_51 : f32 to vector<1x128xf32>
    %171 = arith.addf %170, %169 : vector<1x128xf32>
    %172 = arith.divf %170, %171 : vector<1x128xf32>
    %173 = vector.extract_strided_slice %166 {offsets = [0, 128], sizes = [1, 128], strides = [1, 1]} : vector<1x512xf32> to vector<1x128xf32>
    %174 = arith.negf %173 : vector<1x128xf32>
    %175 = math.exp %174 : vector<1x128xf32>
    %cst_52 = arith.constant 1.000000e+00 : f32
    %176 = vector.broadcast %cst_52 : f32 to vector<1x128xf32>
    %177 = arith.addf %176, %175 : vector<1x128xf32>
    %178 = arith.divf %176, %177 : vector<1x128xf32>
    %179 = vector.extract_strided_slice %166 {offsets = [0, 256], sizes = [1, 128], strides = [1, 1]} : vector<1x512xf32> to vector<1x128xf32>
    %180 = math.tanh %179 : vector<1x128xf32>
    %181 = vector.extract_strided_slice %166 {offsets = [0, 384], sizes = [1, 128], strides = [1, 1]} : vector<1x512xf32> to vector<1x128xf32>
    %182 = arith.negf %181 : vector<1x128xf32>
    %183 = math.exp %182 : vector<1x128xf32>
    %cst_53 = arith.constant 1.000000e+00 : f32
    %184 = vector.broadcast %cst_53 : f32 to vector<1x128xf32>
    %185 = arith.addf %184, %183 : vector<1x128xf32>
    %186 = arith.divf %184, %185 : vector<1x128xf32>
    %187 = arith.mulf %178, %159 : vector<1x128xf32>
    %188 = arith.mulf %172, %180 : vector<1x128xf32>
    %189 = arith.addf %187, %188 : vector<1x128xf32>
    %190 = math.tanh %189 : vector<1x128xf32>
    %191 = arith.mulf %186, %190 : vector<1x128xf32>
    %c5 = arith.constant 5 : index
    %c0_54 = arith.constant 0 : index
    %192 = vector.load %arg14[%c5, %c0_54] : memref<8x128xf32, #tpu.memory_space<vmem>>, vector<1x128xf32>
    tpu.vector_store %arg14[%c5, %c0_54], %191 {strides = array<i32>} : memref<8x128xf32, #tpu.memory_space<vmem>>, vector<1x128xf32>,
    %193 = vector.extract_strided_slice %10 {offsets = [6, 0], sizes = [1, 512], strides = [1, 1]} : vector<8x512xf32> to vector<1x512xf32>
    %c0_55 = arith.constant 0 : index
    %c0_56 = arith.constant 0 : index
    %194 = vector.load %arg4[%c0_55, %c0_56] : memref<128x512xf32, #tpu.memory_space<vmem>>, vector<128x512xf32>
    %cst_57 = arith.constant dense<0.000000e+00> : vector<1x512xf32>
    %195 = tpu.matmul %191, %194, %cst_57 {dimension_numbers = #tpu.dot_dimension_numbers<[1], [0], [0], [1], [0, 0, 1, 1], [], []>} : vector<1x128xf32>, vector<128x512xf32>, vector<1x512xf32> -> vector<1x512xf32>
    %196 = arith.addf %193, %195 : vector<1x512xf32>
    %197 = vector.extract_strided_slice %196 {offsets = [0, 0], sizes = [1, 128], strides = [1, 1]} : vector<1x512xf32> to vector<1x128xf32>
    %198 = arith.negf %197 : vector<1x128xf32>
    %199 = math.exp %198 : vector<1x128xf32>
    %cst_58 = arith.constant 1.000000e+00 : f32
    %200 = vector.broadcast %cst_58 : f32 to vector<1x128xf32>
    %201 = arith.addf %200, %199 : vector<1x128xf32>
    %202 = arith.divf %200, %201 : vector<1x128xf32>
    %203 = vector.extract_strided_slice %196 {offsets = [0, 128], sizes = [1, 128], strides = [1, 1]} : vector<1x512xf32> to vector<1x128xf32>
    %204 = arith.negf %203 : vector<1x128xf32>
    %205 = math.exp %204 : vector<1x128xf32>
    %cst_59 = arith.constant 1.000000e+00 : f32
    %206 = vector.broadcast %cst_59 : f32 to vector<1x128xf32>
    %207 = arith.addf %206, %205 : vector<1x128xf32>
    %208 = arith.divf %206, %207 : vector<1x128xf32>
    %209 = vector.extract_strided_slice %196 {offsets = [0, 256], sizes = [1, 128], strides = [1, 1]} : vector<1x512xf32> to vector<1x128xf32>
    %210 = math.tanh %209 : vector<1x128xf32>
    %211 = vector.extract_strided_slice %196 {offsets = [0, 384], sizes = [1, 128], strides = [1, 1]} : vector<1x512xf32> to vector<1x128xf32>
    %212 = arith.negf %211 : vector<1x128xf32>
    %213 = math.exp %212 : vector<1x128xf32>
    %cst_60 = arith.constant 1.000000e+00 : f32
    %214 = vector.broadcast %cst_60 : f32 to vector<1x128xf32>
    %215 = arith.addf %214, %213 : vector<1x128xf32>
    %216 = arith.divf %214, %215 : vector<1x128xf32>
    %217 = arith.mulf %208, %189 : vector<1x128xf32>
    %218 = arith.mulf %202, %210 : vector<1x128xf32>
    %219 = arith.addf %217, %218 : vector<1x128xf32>
    %220 = math.tanh %219 : vector<1x128xf32>
    %221 = arith.mulf %216, %220 : vector<1x128xf32>
    %c6 = arith.constant 6 : index
    %c0_61 = arith.constant 0 : index
    %222 = vector.load %arg14[%c6, %c0_61] : memref<8x128xf32, #tpu.memory_space<vmem>>, vector<1x128xf32>
    tpu.vector_store %arg14[%c6, %c0_61], %221 {strides = array<i32>} : memref<8x128xf32, #tpu.memory_space<vmem>>, vector<1x128xf32>,
    %223 = vector.extract_strided_slice %10 {offsets = [7, 0], sizes = [1, 512], strides = [1, 1]} : vector<8x512xf32> to vector<1x512xf32>
    %c0_62 = arith.constant 0 : index
    %c0_63 = arith.constant 0 : index
    %224 = vector.load %arg4[%c0_62, %c0_63] : memref<128x512xf32, #tpu.memory_space<vmem>>, vector<128x512xf32>
    %cst_64 = arith.constant dense<0.000000e+00> : vector<1x512xf32>
    %225 = tpu.matmul %221, %224, %cst_64 {dimension_numbers = #tpu.dot_dimension_numbers<[1], [0], [0], [1], [0, 0, 1, 1], [], []>} : vector<1x128xf32>, vector<128x512xf32>, vector<1x512xf32> -> vector<1x512xf32>
    %226 = arith.addf %223, %225 : vector<1x512xf32>
    %227 = vector.extract_strided_slice %226 {offsets = [0, 0], sizes = [1, 128], strides = [1, 1]} : vector<1x512xf32> to vector<1x128xf32>
    %228 = arith.negf %227 : vector<1x128xf32>
    %229 = math.exp %228 : vector<1x128xf32>
    %cst_65 = arith.constant 1.000000e+00 : f32
    %230 = vector.broadcast %cst_65 : f32 to vector<1x128xf32>
    %231 = arith.addf %230, %229 : vector<1x128xf32>
    %232 = arith.divf %230, %231 : vector<1x128xf32>
    %233 = vector.extract_strided_slice %226 {offsets = [0, 128], sizes = [1, 128], strides = [1, 1]} : vector<1x512xf32> to vector<1x128xf32>
    %234 = arith.negf %233 : vector<1x128xf32>
    %235 = math.exp %234 : vector<1x128xf32>
    %cst_66 = arith.constant 1.000000e+00 : f32
    %236 = vector.broadcast %cst_66 : f32 to vector<1x128xf32>
    %237 = arith.addf %236, %235 : vector<1x128xf32>
    %238 = arith.divf %236, %237 : vector<1x128xf32>
    %239 = vector.extract_strided_slice %226 {offsets = [0, 256], sizes = [1, 128], strides = [1, 1]} : vector<1x512xf32> to vector<1x128xf32>
    %240 = math.tanh %239 : vector<1x128xf32>
    %241 = vector.extract_strided_slice %226 {offsets = [0, 384], sizes = [1, 128], strides = [1, 1]} : vector<1x512xf32> to vector<1x128xf32>
    %242 = arith.negf %241 : vector<1x128xf32>
    %243 = math.exp %242 : vector<1x128xf32>
    %cst_67 = arith.constant 1.000000e+00 : f32
    %244 = vector.broadcast %cst_67 : f32 to vector<1x128xf32>
    %245 = arith.addf %244, %243 : vector<1x128xf32>
    %246 = arith.divf %244, %245 : vector<1x128xf32>
    %247 = arith.mulf %238, %219 : vector<1x128xf32>
    %248 = arith.mulf %232, %240 : vector<1x128xf32>
    %249 = arith.addf %247, %248 : vector<1x128xf32>
    %250 = math.tanh %249 : vector<1x128xf32>
    %251 = arith.mulf %246, %250 : vector<1x128xf32>
    %c7 = arith.constant 7 : index
    %c0_68 = arith.constant 0 : index
    %252 = vector.load %arg14[%c7, %c0_68] : memref<8x128xf32, #tpu.memory_space<vmem>>, vector<1x128xf32>
    tpu.vector_store %arg14[%c7, %c0_68], %251 {strides = array<i32>} : memref<8x128xf32, #tpu.memory_space<vmem>>, vector<1x128xf32>,
    %c0_69 = arith.constant 0 : index
    %c0_70 = arith.constant 0 : index
    %253 = vector.load %arg12[%c0_69, %c0_70] : memref<2x128xf32, #tpu.memory_space<vmem>>, vector<1x128xf32>
    tpu.vector_store %arg12[%c0_69, %c0_70], %251 {strides = array<i32>} : memref<2x128xf32, #tpu.memory_space<vmem>>, vector<1x128xf32>,
    %c0_71 = arith.constant 0 : index
    %c0_72 = arith.constant 0 : index
    %254 = vector.load %arg13[%c0_71, %c0_72] : memref<2x128xf32, #tpu.memory_space<vmem>>, vector<1x128xf32>
    tpu.vector_store %arg13[%c0_71, %c0_72], %249 {strides = array<i32>} : memref<2x128xf32, #tpu.memory_space<vmem>>, vector<1x128xf32>,
    %c0_73 = arith.constant 0 : index
    %c0_74 = arith.constant 0 : index
    %255 = vector.load %arg14[%c0_73, %c0_74] : memref<8x128xf32, #tpu.memory_space<vmem>>, vector<8x128xf32>
    %c0_75 = arith.constant 0 : index
    %c0_76 = arith.constant 0 : index
    %256 = vector.load %arg6[%c0_75, %c0_76] : memref<128x512xf32, #tpu.memory_space<vmem>>, vector<128x512xf32>
    %cst_77 = arith.constant dense<0.000000e+00> : vector<8x512xf32>
    %257 = tpu.matmul %255, %256, %cst_77 {dimension_numbers = #tpu.dot_dimension_numbers<[1], [0], [0], [1], [0, 0, 1, 1], [], []>} : vector<8x128xf32>, vector<128x512xf32>, vector<8x512xf32> -> vector<8x512xf32>
    %c0_78 = arith.constant 0 : index
    %c0_79 = arith.constant 0 : index
    %258 = vector.load %arg8[%c0_78, %c0_79] : memref<1x512xf32, #tpu.memory_space<vmem>>, vector<1x512xf32>
    %259 = vector.broadcast %258 : vector<1x512xf32> to vector<8x512xf32>
    %260 = arith.addf %257, %259 : vector<8x512xf32>
    %cst_80 = arith.constant 0.000000e+00 : f32
    %261 = vector.broadcast %cst_80 : f32 to vector<1x128xf32>
    %cst_81 = arith.constant 0.000000e+00 : f32
    %262 = vector.broadcast %cst_81 : f32 to vector<1x128xf32>
    %263 = vector.extract_strided_slice %260 {offsets = [0, 0], sizes = [1, 512], strides = [1, 1]} : vector<8x512xf32> to vector<1x512xf32>
    %c0_82 = arith.constant 0 : index
    %c0_83 = arith.constant 0 : index
    %264 = vector.load %arg7[%c0_82, %c0_83] : memref<128x512xf32, #tpu.memory_space<vmem>>, vector<128x512xf32>
    %cst_84 = arith.constant dense<0.000000e+00> : vector<1x512xf32>
    %265 = tpu.matmul %261, %264, %cst_84 {dimension_numbers = #tpu.dot_dimension_numbers<[1], [0], [0], [1], [0, 0, 1, 1], [], []>} : vector<1x128xf32>, vector<128x512xf32>, vector<1x512xf32> -> vector<1x512xf32>
    %266 = arith.addf %263, %265 : vector<1x512xf32>
    %267 = vector.extract_strided_slice %266 {offsets = [0, 0], sizes = [1, 128], strides = [1, 1]} : vector<1x512xf32> to vector<1x128xf32>
    %268 = arith.negf %267 : vector<1x128xf32>
    %269 = math.exp %268 : vector<1x128xf32>
    %cst_85 = arith.constant 1.000000e+00 : f32
    %270 = vector.broadcast %cst_85 : f32 to vector<1x128xf32>
    %271 = arith.addf %270, %269 : vector<1x128xf32>
    %272 = arith.divf %270, %271 : vector<1x128xf32>
    %273 = vector.extract_strided_slice %266 {offsets = [0, 128], sizes = [1, 128], strides = [1, 1]} : vector<1x512xf32> to vector<1x128xf32>
    %274 = arith.negf %273 : vector<1x128xf32>
    %275 = math.exp %274 : vector<1x128xf32>
    %cst_86 = arith.constant 1.000000e+00 : f32
    %276 = vector.broadcast %cst_86 : f32 to vector<1x128xf32>
    %277 = arith.addf %276, %275 : vector<1x128xf32>
    %278 = arith.divf %276, %277 : vector<1x128xf32>
    %279 = vector.extract_strided_slice %266 {offsets = [0, 256], sizes = [1, 128], strides = [1, 1]} : vector<1x512xf32> to vector<1x128xf32>
    %280 = math.tanh %279 : vector<1x128xf32>
    %281 = vector.extract_strided_slice %266 {offsets = [0, 384], sizes = [1, 128], strides = [1, 1]} : vector<1x512xf32> to vector<1x128xf32>
    %282 = arith.negf %281 : vector<1x128xf32>
    %283 = math.exp %282 : vector<1x128xf32>
    %cst_87 = arith.constant 1.000000e+00 : f32
    %284 = vector.broadcast %cst_87 : f32 to vector<1x128xf32>
    %285 = arith.addf %284, %283 : vector<1x128xf32>
    %286 = arith.divf %284, %285 : vector<1x128xf32>
    %287 = arith.mulf %278, %262 : vector<1x128xf32>
    %288 = arith.mulf %272, %280 : vector<1x128xf32>
    %289 = arith.addf %287, %288 : vector<1x128xf32>
    %290 = math.tanh %289 : vector<1x128xf32>
    %291 = arith.mulf %286, %290 : vector<1x128xf32>
    %c0_88 = arith.constant 0 : index
    %c0_89 = arith.constant 0 : index
    %292 = vector.load %arg15[%c0_88, %c0_89] : memref<8x128xf32, #tpu.memory_space<vmem>>, vector<1x128xf32>
    tpu.vector_store %arg15[%c0_88, %c0_89], %291 {strides = array<i32>} : memref<8x128xf32, #tpu.memory_space<vmem>>, vector<1x128xf32>,
    %293 = vector.extract_strided_slice %260 {offsets = [1, 0], sizes = [1, 512], strides = [1, 1]} : vector<8x512xf32> to vector<1x512xf32>
    %c0_90 = arith.constant 0 : index
    %c0_91 = arith.constant 0 : index
    %294 = vector.load %arg7[%c0_90, %c0_91] : memref<128x512xf32, #tpu.memory_space<vmem>>, vector<128x512xf32>
    %cst_92 = arith.constant dense<0.000000e+00> : vector<1x512xf32>
    %295 = tpu.matmul %291, %294, %cst_92 {dimension_numbers = #tpu.dot_dimension_numbers<[1], [0], [0], [1], [0, 0, 1, 1], [], []>} : vector<1x128xf32>, vector<128x512xf32>, vector<1x512xf32> -> vector<1x512xf32>
    %296 = arith.addf %293, %295 : vector<1x512xf32>
    %297 = vector.extract_strided_slice %296 {offsets = [0, 0], sizes = [1, 128], strides = [1, 1]} : vector<1x512xf32> to vector<1x128xf32>
    %298 = arith.negf %297 : vector<1x128xf32>
    %299 = math.exp %298 : vector<1x128xf32>
    %cst_93 = arith.constant 1.000000e+00 : f32
    %300 = vector.broadcast %cst_93 : f32 to vector<1x128xf32>
    %301 = arith.addf %300, %299 : vector<1x128xf32>
    %302 = arith.divf %300, %301 : vector<1x128xf32>
    %303 = vector.extract_strided_slice %296 {offsets = [0, 128], sizes = [1, 128], strides = [1, 1]} : vector<1x512xf32> to vector<1x128xf32>
    %304 = arith.negf %303 : vector<1x128xf32>
    %305 = math.exp %304 : vector<1x128xf32>
    %cst_94 = arith.constant 1.000000e+00 : f32
    %306 = vector.broadcast %cst_94 : f32 to vector<1x128xf32>
    %307 = arith.addf %306, %305 : vector<1x128xf32>
    %308 = arith.divf %306, %307 : vector<1x128xf32>
    %309 = vector.extract_strided_slice %296 {offsets = [0, 256], sizes = [1, 128], strides = [1, 1]} : vector<1x512xf32> to vector<1x128xf32>
    %310 = math.tanh %309 : vector<1x128xf32>
    %311 = vector.extract_strided_slice %296 {offsets = [0, 384], sizes = [1, 128], strides = [1, 1]} : vector<1x512xf32> to vector<1x128xf32>
    %312 = arith.negf %311 : vector<1x128xf32>
    %313 = math.exp %312 : vector<1x128xf32>
    %cst_95 = arith.constant 1.000000e+00 : f32
    %314 = vector.broadcast %cst_95 : f32 to vector<1x128xf32>
    %315 = arith.addf %314, %313 : vector<1x128xf32>
    %316 = arith.divf %314, %315 : vector<1x128xf32>
    %317 = arith.mulf %308, %289 : vector<1x128xf32>
    %318 = arith.mulf %302, %310 : vector<1x128xf32>
    %319 = arith.addf %317, %318 : vector<1x128xf32>
    %320 = math.tanh %319 : vector<1x128xf32>
    %321 = arith.mulf %316, %320 : vector<1x128xf32>
    %c1_96 = arith.constant 1 : index
    %c0_97 = arith.constant 0 : index
    %322 = vector.load %arg15[%c1_96, %c0_97] : memref<8x128xf32, #tpu.memory_space<vmem>>, vector<1x128xf32>
    tpu.vector_store %arg15[%c1_96, %c0_97], %321 {strides = array<i32>} : memref<8x128xf32, #tpu.memory_space<vmem>>, vector<1x128xf32>,
    %323 = vector.extract_strided_slice %260 {offsets = [2, 0], sizes = [1, 512], strides = [1, 1]} : vector<8x512xf32> to vector<1x512xf32>
    %c0_98 = arith.constant 0 : index
    %c0_99 = arith.constant 0 : index
    %324 = vector.load %arg7[%c0_98, %c0_99] : memref<128x512xf32, #tpu.memory_space<vmem>>, vector<128x512xf32>
    %cst_100 = arith.constant dense<0.000000e+00> : vector<1x512xf32>
    %325 = tpu.matmul %321, %324, %cst_100 {dimension_numbers = #tpu.dot_dimension_numbers<[1], [0], [0], [1], [0, 0, 1, 1], [], []>} : vector<1x128xf32>, vector<128x512xf32>, vector<1x512xf32> -> vector<1x512xf32>
    %326 = arith.addf %323, %325 : vector<1x512xf32>
    %327 = vector.extract_strided_slice %326 {offsets = [0, 0], sizes = [1, 128], strides = [1, 1]} : vector<1x512xf32> to vector<1x128xf32>
    %328 = arith.negf %327 : vector<1x128xf32>
    %329 = math.exp %328 : vector<1x128xf32>
    %cst_101 = arith.constant 1.000000e+00 : f32
    %330 = vector.broadcast %cst_101 : f32 to vector<1x128xf32>
    %331 = arith.addf %330, %329 : vector<1x128xf32>
    %332 = arith.divf %330, %331 : vector<1x128xf32>
    %333 = vector.extract_strided_slice %326 {offsets = [0, 128], sizes = [1, 128], strides = [1, 1]} : vector<1x512xf32> to vector<1x128xf32>
    %334 = arith.negf %333 : vector<1x128xf32>
    %335 = math.exp %334 : vector<1x128xf32>
    %cst_102 = arith.constant 1.000000e+00 : f32
    %336 = vector.broadcast %cst_102 : f32 to vector<1x128xf32>
    %337 = arith.addf %336, %335 : vector<1x128xf32>
    %338 = arith.divf %336, %337 : vector<1x128xf32>
    %339 = vector.extract_strided_slice %326 {offsets = [0, 256], sizes = [1, 128], strides = [1, 1]} : vector<1x512xf32> to vector<1x128xf32>
    %340 = math.tanh %339 : vector<1x128xf32>
    %341 = vector.extract_strided_slice %326 {offsets = [0, 384], sizes = [1, 128], strides = [1, 1]} : vector<1x512xf32> to vector<1x128xf32>
    %342 = arith.negf %341 : vector<1x128xf32>
    %343 = math.exp %342 : vector<1x128xf32>
    %cst_103 = arith.constant 1.000000e+00 : f32
    %344 = vector.broadcast %cst_103 : f32 to vector<1x128xf32>
    %345 = arith.addf %344, %343 : vector<1x128xf32>
    %346 = arith.divf %344, %345 : vector<1x128xf32>
    %347 = arith.mulf %338, %319 : vector<1x128xf32>
    %348 = arith.mulf %332, %340 : vector<1x128xf32>
    %349 = arith.addf %347, %348 : vector<1x128xf32>
    %350 = math.tanh %349 : vector<1x128xf32>
    %351 = arith.mulf %346, %350 : vector<1x128xf32>
    %c2_104 = arith.constant 2 : index
    %c0_105 = arith.constant 0 : index
    %352 = vector.load %arg15[%c2_104, %c0_105] : memref<8x128xf32, #tpu.memory_space<vmem>>, vector<1x128xf32>
    tpu.vector_store %arg15[%c2_104, %c0_105], %351 {strides = array<i32>} : memref<8x128xf32, #tpu.memory_space<vmem>>, vector<1x128xf32>,
    %353 = vector.extract_strided_slice %260 {offsets = [3, 0], sizes = [1, 512], strides = [1, 1]} : vector<8x512xf32> to vector<1x512xf32>
    %c0_106 = arith.constant 0 : index
    %c0_107 = arith.constant 0 : index
    %354 = vector.load %arg7[%c0_106, %c0_107] : memref<128x512xf32, #tpu.memory_space<vmem>>, vector<128x512xf32>
    %cst_108 = arith.constant dense<0.000000e+00> : vector<1x512xf32>
    %355 = tpu.matmul %351, %354, %cst_108 {dimension_numbers = #tpu.dot_dimension_numbers<[1], [0], [0], [1], [0, 0, 1, 1], [], []>} : vector<1x128xf32>, vector<128x512xf32>, vector<1x512xf32> -> vector<1x512xf32>
    %356 = arith.addf %353, %355 : vector<1x512xf32>
    %357 = vector.extract_strided_slice %356 {offsets = [0, 0], sizes = [1, 128], strides = [1, 1]} : vector<1x512xf32> to vector<1x128xf32>
    %358 = arith.negf %357 : vector<1x128xf32>
    %359 = math.exp %358 : vector<1x128xf32>
    %cst_109 = arith.constant 1.000000e+00 : f32
    %360 = vector.broadcast %cst_109 : f32 to vector<1x128xf32>
    %361 = arith.addf %360, %359 : vector<1x128xf32>
    %362 = arith.divf %360, %361 : vector<1x128xf32>
    %363 = vector.extract_strided_slice %356 {offsets = [0, 128], sizes = [1, 128], strides = [1, 1]} : vector<1x512xf32> to vector<1x128xf32>
    %364 = arith.negf %363 : vector<1x128xf32>
    %365 = math.exp %364 : vector<1x128xf32>
    %cst_110 = arith.constant 1.000000e+00 : f32
    %366 = vector.broadcast %cst_110 : f32 to vector<1x128xf32>
    %367 = arith.addf %366, %365 : vector<1x128xf32>
    %368 = arith.divf %366, %367 : vector<1x128xf32>
    %369 = vector.extract_strided_slice %356 {offsets = [0, 256], sizes = [1, 128], strides = [1, 1]} : vector<1x512xf32> to vector<1x128xf32>
    %370 = math.tanh %369 : vector<1x128xf32>
    %371 = vector.extract_strided_slice %356 {offsets = [0, 384], sizes = [1, 128], strides = [1, 1]} : vector<1x512xf32> to vector<1x128xf32>
    %372 = arith.negf %371 : vector<1x128xf32>
    %373 = math.exp %372 : vector<1x128xf32>
    %cst_111 = arith.constant 1.000000e+00 : f32
    %374 = vector.broadcast %cst_111 : f32 to vector<1x128xf32>
    %375 = arith.addf %374, %373 : vector<1x128xf32>
    %376 = arith.divf %374, %375 : vector<1x128xf32>
    %377 = arith.mulf %368, %349 : vector<1x128xf32>
    %378 = arith.mulf %362, %370 : vector<1x128xf32>
    %379 = arith.addf %377, %378 : vector<1x128xf32>
    %380 = math.tanh %379 : vector<1x128xf32>
    %381 = arith.mulf %376, %380 : vector<1x128xf32>
    %c3_112 = arith.constant 3 : index
    %c0_113 = arith.constant 0 : index
    %382 = vector.load %arg15[%c3_112, %c0_113] : memref<8x128xf32, #tpu.memory_space<vmem>>, vector<1x128xf32>
    tpu.vector_store %arg15[%c3_112, %c0_113], %381 {strides = array<i32>} : memref<8x128xf32, #tpu.memory_space<vmem>>, vector<1x128xf32>,
    %383 = vector.extract_strided_slice %260 {offsets = [4, 0], sizes = [1, 512], strides = [1, 1]} : vector<8x512xf32> to vector<1x512xf32>
    %c0_114 = arith.constant 0 : index
    %c0_115 = arith.constant 0 : index
    %384 = vector.load %arg7[%c0_114, %c0_115] : memref<128x512xf32, #tpu.memory_space<vmem>>, vector<128x512xf32>
    %cst_116 = arith.constant dense<0.000000e+00> : vector<1x512xf32>
    %385 = tpu.matmul %381, %384, %cst_116 {dimension_numbers = #tpu.dot_dimension_numbers<[1], [0], [0], [1], [0, 0, 1, 1], [], []>} : vector<1x128xf32>, vector<128x512xf32>, vector<1x512xf32> -> vector<1x512xf32>
    %386 = arith.addf %383, %385 : vector<1x512xf32>
    %387 = vector.extract_strided_slice %386 {offsets = [0, 0], sizes = [1, 128], strides = [1, 1]} : vector<1x512xf32> to vector<1x128xf32>
    %388 = arith.negf %387 : vector<1x128xf32>
    %389 = math.exp %388 : vector<1x128xf32>
    %cst_117 = arith.constant 1.000000e+00 : f32
    %390 = vector.broadcast %cst_117 : f32 to vector<1x128xf32>
    %391 = arith.addf %390, %389 : vector<1x128xf32>
    %392 = arith.divf %390, %391 : vector<1x128xf32>
    %393 = vector.extract_strided_slice %386 {offsets = [0, 128], sizes = [1, 128], strides = [1, 1]} : vector<1x512xf32> to vector<1x128xf32>
    %394 = arith.negf %393 : vector<1x128xf32>
    %395 = math.exp %394 : vector<1x128xf32>
    %cst_118 = arith.constant 1.000000e+00 : f32
    %396 = vector.broadcast %cst_118 : f32 to vector<1x128xf32>
    %397 = arith.addf %396, %395 : vector<1x128xf32>
    %398 = arith.divf %396, %397 : vector<1x128xf32>
    %399 = vector.extract_strided_slice %386 {offsets = [0, 256], sizes = [1, 128], strides = [1, 1]} : vector<1x512xf32> to vector<1x128xf32>
    %400 = math.tanh %399 : vector<1x128xf32>
    %401 = vector.extract_strided_slice %386 {offsets = [0, 384], sizes = [1, 128], strides = [1, 1]} : vector<1x512xf32> to vector<1x128xf32>
    %402 = arith.negf %401 : vector<1x128xf32>
    %403 = math.exp %402 : vector<1x128xf32>
    %cst_119 = arith.constant 1.000000e+00 : f32
    %404 = vector.broadcast %cst_119 : f32 to vector<1x128xf32>
    %405 = arith.addf %404, %403 : vector<1x128xf32>
    %406 = arith.divf %404, %405 : vector<1x128xf32>
    %407 = arith.mulf %398, %379 : vector<1x128xf32>
    %408 = arith.mulf %392, %400 : vector<1x128xf32>
    %409 = arith.addf %407, %408 : vector<1x128xf32>
    %410 = math.tanh %409 : vector<1x128xf32>
    %411 = arith.mulf %406, %410 : vector<1x128xf32>
    %c4_120 = arith.constant 4 : index
    %c0_121 = arith.constant 0 : index
    %412 = vector.load %arg15[%c4_120, %c0_121] : memref<8x128xf32, #tpu.memory_space<vmem>>, vector<1x128xf32>
    tpu.vector_store %arg15[%c4_120, %c0_121], %411 {strides = array<i32>} : memref<8x128xf32, #tpu.memory_space<vmem>>, vector<1x128xf32>,
    %413 = vector.extract_strided_slice %260 {offsets = [5, 0], sizes = [1, 512], strides = [1, 1]} : vector<8x512xf32> to vector<1x512xf32>
    %c0_122 = arith.constant 0 : index
    %c0_123 = arith.constant 0 : index
    %414 = vector.load %arg7[%c0_122, %c0_123] : memref<128x512xf32, #tpu.memory_space<vmem>>, vector<128x512xf32>
    %cst_124 = arith.constant dense<0.000000e+00> : vector<1x512xf32>
    %415 = tpu.matmul %411, %414, %cst_124 {dimension_numbers = #tpu.dot_dimension_numbers<[1], [0], [0], [1], [0, 0, 1, 1], [], []>} : vector<1x128xf32>, vector<128x512xf32>, vector<1x512xf32> -> vector<1x512xf32>
    %416 = arith.addf %413, %415 : vector<1x512xf32>
    %417 = vector.extract_strided_slice %416 {offsets = [0, 0], sizes = [1, 128], strides = [1, 1]} : vector<1x512xf32> to vector<1x128xf32>
    %418 = arith.negf %417 : vector<1x128xf32>
    %419 = math.exp %418 : vector<1x128xf32>
    %cst_125 = arith.constant 1.000000e+00 : f32
    %420 = vector.broadcast %cst_125 : f32 to vector<1x128xf32>
    %421 = arith.addf %420, %419 : vector<1x128xf32>
    %422 = arith.divf %420, %421 : vector<1x128xf32>
    %423 = vector.extract_strided_slice %416 {offsets = [0, 128], sizes = [1, 128], strides = [1, 1]} : vector<1x512xf32> to vector<1x128xf32>
    %424 = arith.negf %423 : vector<1x128xf32>
    %425 = math.exp %424 : vector<1x128xf32>
    %cst_126 = arith.constant 1.000000e+00 : f32
    %426 = vector.broadcast %cst_126 : f32 to vector<1x128xf32>
    %427 = arith.addf %426, %425 : vector<1x128xf32>
    %428 = arith.divf %426, %427 : vector<1x128xf32>
    %429 = vector.extract_strided_slice %416 {offsets = [0, 256], sizes = [1, 128], strides = [1, 1]} : vector<1x512xf32> to vector<1x128xf32>
    %430 = math.tanh %429 : vector<1x128xf32>
    %431 = vector.extract_strided_slice %416 {offsets = [0, 384], sizes = [1, 128], strides = [1, 1]} : vector<1x512xf32> to vector<1x128xf32>
    %432 = arith.negf %431 : vector<1x128xf32>
    %433 = math.exp %432 : vector<1x128xf32>
    %cst_127 = arith.constant 1.000000e+00 : f32
    %434 = vector.broadcast %cst_127 : f32 to vector<1x128xf32>
    %435 = arith.addf %434, %433 : vector<1x128xf32>
    %436 = arith.divf %434, %435 : vector<1x128xf32>
    %437 = arith.mulf %428, %409 : vector<1x128xf32>
    %438 = arith.mulf %422, %430 : vector<1x128xf32>
    %439 = arith.addf %437, %438 : vector<1x128xf32>
    %440 = math.tanh %439 : vector<1x128xf32>
    %441 = arith.mulf %436, %440 : vector<1x128xf32>
    %c5_128 = arith.constant 5 : index
    %c0_129 = arith.constant 0 : index
    %442 = vector.load %arg15[%c5_128, %c0_129] : memref<8x128xf32, #tpu.memory_space<vmem>>, vector<1x128xf32>
    tpu.vector_store %arg15[%c5_128, %c0_129], %441 {strides = array<i32>} : memref<8x128xf32, #tpu.memory_space<vmem>>, vector<1x128xf32>,
    %443 = vector.extract_strided_slice %260 {offsets = [6, 0], sizes = [1, 512], strides = [1, 1]} : vector<8x512xf32> to vector<1x512xf32>
    %c0_130 = arith.constant 0 : index
    %c0_131 = arith.constant 0 : index
    %444 = vector.load %arg7[%c0_130, %c0_131] : memref<128x512xf32, #tpu.memory_space<vmem>>, vector<128x512xf32>
    %cst_132 = arith.constant dense<0.000000e+00> : vector<1x512xf32>
    %445 = tpu.matmul %441, %444, %cst_132 {dimension_numbers = #tpu.dot_dimension_numbers<[1], [0], [0], [1], [0, 0, 1, 1], [], []>} : vector<1x128xf32>, vector<128x512xf32>, vector<1x512xf32> -> vector<1x512xf32>
    %446 = arith.addf %443, %445 : vector<1x512xf32>
    %447 = vector.extract_strided_slice %446 {offsets = [0, 0], sizes = [1, 128], strides = [1, 1]} : vector<1x512xf32> to vector<1x128xf32>
    %448 = arith.negf %447 : vector<1x128xf32>
    %449 = math.exp %448 : vector<1x128xf32>
    %cst_133 = arith.constant 1.000000e+00 : f32
    %450 = vector.broadcast %cst_133 : f32 to vector<1x128xf32>
    %451 = arith.addf %450, %449 : vector<1x128xf32>
    %452 = arith.divf %450, %451 : vector<1x128xf32>
    %453 = vector.extract_strided_slice %446 {offsets = [0, 128], sizes = [1, 128], strides = [1, 1]} : vector<1x512xf32> to vector<1x128xf32>
    %454 = arith.negf %453 : vector<1x128xf32>
    %455 = math.exp %454 : vector<1x128xf32>
    %cst_134 = arith.constant 1.000000e+00 : f32
    %456 = vector.broadcast %cst_134 : f32 to vector<1x128xf32>
    %457 = arith.addf %456, %455 : vector<1x128xf32>
    %458 = arith.divf %456, %457 : vector<1x128xf32>
    %459 = vector.extract_strided_slice %446 {offsets = [0, 256], sizes = [1, 128], strides = [1, 1]} : vector<1x512xf32> to vector<1x128xf32>
    %460 = math.tanh %459 : vector<1x128xf32>
    %461 = vector.extract_strided_slice %446 {offsets = [0, 384], sizes = [1, 128], strides = [1, 1]} : vector<1x512xf32> to vector<1x128xf32>
    %462 = arith.negf %461 : vector<1x128xf32>
    %463 = math.exp %462 : vector<1x128xf32>
    %cst_135 = arith.constant 1.000000e+00 : f32
    %464 = vector.broadcast %cst_135 : f32 to vector<1x128xf32>
    %465 = arith.addf %464, %463 : vector<1x128xf32>
    %466 = arith.divf %464, %465 : vector<1x128xf32>
    %467 = arith.mulf %458, %439 : vector<1x128xf32>
    %468 = arith.mulf %452, %460 : vector<1x128xf32>
    %469 = arith.addf %467, %468 : vector<1x128xf32>
    %470 = math.tanh %469 : vector<1x128xf32>
    %471 = arith.mulf %466, %470 : vector<1x128xf32>
    %c6_136 = arith.constant 6 : index
    %c0_137 = arith.constant 0 : index
    %472 = vector.load %arg15[%c6_136, %c0_137] : memref<8x128xf32, #tpu.memory_space<vmem>>, vector<1x128xf32>
    tpu.vector_store %arg15[%c6_136, %c0_137], %471 {strides = array<i32>} : memref<8x128xf32, #tpu.memory_space<vmem>>, vector<1x128xf32>,
    %473 = vector.extract_strided_slice %260 {offsets = [7, 0], sizes = [1, 512], strides = [1, 1]} : vector<8x512xf32> to vector<1x512xf32>
    %c0_138 = arith.constant 0 : index
    %c0_139 = arith.constant 0 : index
    %474 = vector.load %arg7[%c0_138, %c0_139] : memref<128x512xf32, #tpu.memory_space<vmem>>, vector<128x512xf32>
    %cst_140 = arith.constant dense<0.000000e+00> : vector<1x512xf32>
    %475 = tpu.matmul %471, %474, %cst_140 {dimension_numbers = #tpu.dot_dimension_numbers<[1], [0], [0], [1], [0, 0, 1, 1], [], []>} : vector<1x128xf32>, vector<128x512xf32>, vector<1x512xf32> -> vector<1x512xf32>
    %476 = arith.addf %473, %475 : vector<1x512xf32>
    %477 = vector.extract_strided_slice %476 {offsets = [0, 0], sizes = [1, 128], strides = [1, 1]} : vector<1x512xf32> to vector<1x128xf32>
    %478 = arith.negf %477 : vector<1x128xf32>
    %479 = math.exp %478 : vector<1x128xf32>
    %cst_141 = arith.constant 1.000000e+00 : f32
    %480 = vector.broadcast %cst_141 : f32 to vector<1x128xf32>
    %481 = arith.addf %480, %479 : vector<1x128xf32>
    %482 = arith.divf %480, %481 : vector<1x128xf32>
    %483 = vector.extract_strided_slice %476 {offsets = [0, 128], sizes = [1, 128], strides = [1, 1]} : vector<1x512xf32> to vector<1x128xf32>
    %484 = arith.negf %483 : vector<1x128xf32>
    %485 = math.exp %484 : vector<1x128xf32>
    %cst_142 = arith.constant 1.000000e+00 : f32
    %486 = vector.broadcast %cst_142 : f32 to vector<1x128xf32>
    %487 = arith.addf %486, %485 : vector<1x128xf32>
    %488 = arith.divf %486, %487 : vector<1x128xf32>
    %489 = vector.extract_strided_slice %476 {offsets = [0, 256], sizes = [1, 128], strides = [1, 1]} : vector<1x512xf32> to vector<1x128xf32>
    %490 = math.tanh %489 : vector<1x128xf32>
    %491 = vector.extract_strided_slice %476 {offsets = [0, 384], sizes = [1, 128], strides = [1, 1]} : vector<1x512xf32> to vector<1x128xf32>
    %492 = arith.negf %491 : vector<1x128xf32>
    %493 = math.exp %492 : vector<1x128xf32>
    %cst_143 = arith.constant 1.000000e+00 : f32
    %494 = vector.broadcast %cst_143 : f32 to vector<1x128xf32>
    %495 = arith.addf %494, %493 : vector<1x128xf32>
    %496 = arith.divf %494, %495 : vector<1x128xf32>
    %497 = arith.mulf %488, %469 : vector<1x128xf32>
    %498 = arith.mulf %482, %490 : vector<1x128xf32>
    %499 = arith.addf %497, %498 : vector<1x128xf32>
    %500 = math.tanh %499 : vector<1x128xf32>
    %501 = arith.mulf %496, %500 : vector<1x128xf32>
    %c7_144 = arith.constant 7 : index
    %c0_145 = arith.constant 0 : index
    %502 = vector.load %arg15[%c7_144, %c0_145] : memref<8x128xf32, #tpu.memory_space<vmem>>, vector<1x128xf32>
    tpu.vector_store %arg15[%c7_144, %c0_145], %501 {strides = array<i32>} : memref<8x128xf32, #tpu.memory_space<vmem>>, vector<1x128xf32>,
    %c1_146 = arith.constant 1 : index
    %c0_147 = arith.constant 0 : index
    %503 = vector.load %arg12[%c1_146, %c0_147] : memref<2x128xf32, #tpu.memory_space<vmem>>, vector<1x128xf32>
    tpu.vector_store %arg12[%c1_146, %c0_147], %501 {strides = array<i32>} : memref<2x128xf32, #tpu.memory_space<vmem>>, vector<1x128xf32>,
    %c1_148 = arith.constant 1 : index
    %c0_149 = arith.constant 0 : index
    %504 = vector.load %arg13[%c1_148, %c0_149] : memref<2x128xf32, #tpu.memory_space<vmem>>, vector<1x128xf32>
    tpu.vector_store %arg13[%c1_148, %c0_149], %499 {strides = array<i32>} : memref<2x128xf32, #tpu.memory_space<vmem>>, vector<1x128xf32>,
    %c0_150 = arith.constant 0 : index
    %c0_151 = arith.constant 0 : index
    %505 = vector.load %arg15[%c0_150, %c0_151] : memref<8x128xf32, #tpu.memory_space<vmem>>, vector<8x128xf32>
    %c0_152 = arith.constant 0 : index
    %c0_153 = arith.constant 0 : index
    %506 = vector.load %arg9[%c0_152, %c0_153] : memref<128x128xf32, #tpu.memory_space<vmem>>, vector<128x128xf32>
    %cst_154 = arith.constant dense<0.000000e+00> : vector<8x128xf32>
    %507 = tpu.matmul %505, %506, %cst_154 {dimension_numbers = #tpu.dot_dimension_numbers<[1], [0], [0], [1], [0, 0, 1, 1], [], []>} : vector<8x128xf32>, vector<128x128xf32>, vector<8x128xf32> -> vector<8x128xf32>
    %c0_155 = arith.constant 0 : index
    %c0_156 = arith.constant 0 : index
    %508 = vector.load %arg10[%c0_155, %c0_156] : memref<1x128xf32, #tpu.memory_space<vmem>>, vector<1x128xf32>
    %509 = vector.broadcast %508 : vector<1x128xf32> to vector<8x128xf32>
    %510 = arith.addf %507, %509 : vector<8x128xf32>
    %c0_157 = arith.constant 0 : index
    %c0_158 = arith.constant 0 : index
    %511 = vector.load %arg11[%c0_157, %c0_158] : memref<8x128xf32, #tpu.memory_space<vmem>>, vector<8x128xf32>
    tpu.vector_store %arg11[%c0_157, %c0_158], %510 {strides = array<i32>} : memref<8x128xf32, #tpu.memory_space<vmem>>, vector<8x128xf32>,
    return
  }
}

</mosaic_0001>

<llo_original>
// kernel: tpu_custom_call.1
$region0: #{tpu_custom_call.1}
  #allocation0 [shape = 'u32[]', space=smem, size = 0x4, offset = 0x4, fixed_abs, tag = 'smem constant byte address 0x4 - core index']
  #allocation1 [shape = 'u32[144,128]{1,0:T(1,128)}', space=vmem, size = 0x12000, scoped, tag = 'internal scratch']
  #allocation2 [shape = 'f32[8,128]{1,0:T(8,128)}', space=vmem, size = 0x1000, scoped, tag = 'scratch operand']
  #allocation3 [shape = 'f32[8,128]{1,0:T(8,128)}', space=vmem, size = 0x1000, scoped, tag = 'scratch operand']
  %s0 = inlined_call_operand.hbm [shape: f32[8,25], index: 0, kind: input, shape index: {}]
  %s1 = inlined_call_operand.hbm [shape: f32[25,128], index: 1, kind: input, shape index: {}]
  %s2 = inlined_call_operand.vmem [shape: f32[1,128], index: 2, kind: input, shape index: {}]
  %s3 = inlined_call_operand.hbm [shape: f32[128,512], index: 3, kind: input, shape index: {}]
  %s4 = inlined_call_operand.hbm [shape: f32[128,512], index: 4, kind: input, shape index: {}]
  %s5 = inlined_call_operand.vmem [shape: f32[1,512], index: 5, kind: input, shape index: {}]
  %s6 = inlined_call_operand.hbm [shape: f32[128,512], index: 6, kind: input, shape index: {}]
  %s7 = inlined_call_operand.hbm [shape: f32[128,512], index: 7, kind: input, shape index: {}]
  %s8 = inlined_call_operand.vmem [shape: f32[1,512], index: 8, kind: input, shape index: {}]
  %s9 = inlined_call_operand.hbm [shape: f32[128,128], index: 9, kind: input, shape index: {}]
  %s10 = inlined_call_operand.vmem [shape: f32[1,128], index: 10, kind: input, shape index: {}]
  %s11 = inlined_call_operand.hbm [shape: f32[8,128], index: 11, kind: output, shape index: {0}]
  %s12 = inlined_call_operand.hbm [shape: f32[2,128], index: 12, kind: output, shape index: {1}]
  %s13 = inlined_call_operand.hbm [shape: f32[2,128], index: 13, kind: output, shape index: {2}]
  %14 = xla_tuple %s11, %s12, %s13
  %s15 = sld [smem:[#allocation0]]
  $region98: #{tpu_custom_call.1} parent=0
    _
  %s17 = ssub.s32 1, %s15
  %s18 = scalar_select 0, %s17, %s15
  $region1: #{tpu_custom_call.1} parent=0
    #allocation4 [shape = 'u8[4096]{0}', space=vmem, size = 0x1000, scoped, tag = 'input window, operand 0, single buffered']
    #allocation5 [shape = 's32[1]{0}', space=sflag, size = 0x4, scoped, tag = 'scoped memory for tpu_custom_call.1']
    #allocation6 [shape = 's32[1]{0}', space=sflag, size = 0x4, scoped, tag = 'scoped memory for tpu_custom_call.1']
    #allocation7 [shape = 'u8[16384]{0}', space=vmem, size = 0x4000, scoped, tag = 'input window, operand 1, single buffered']
    #allocation8 [shape = 's32[1]{0}', space=sflag, size = 0x4, scoped, tag = 'scoped memory for tpu_custom_call.1']
    #allocation9 [shape = 'u8[262144]{0}', space=vmem, size = 0x40000, scoped, tag = 'input window, operand 3, single buffered']
    #allocation10 [shape = 'u8[262144]{0}', space=vmem, size = 0x40000, scoped, tag = 'input window, operand 4, single buffered']
    #allocation11 [shape = 's32[1]{0}', space=sflag, size = 0x4, scoped, tag = 'scoped memory for tpu_custom_call.1']
    #allocation12 [shape = 'u8[262144]{0}', space=vmem, size = 0x40000, scoped, tag = 'input window, operand 6, single buffered']
    #allocation13 [shape = 'u8[262144]{0}', space=vmem, size = 0x40000, scoped, tag = 'input window, operand 7, single buffered']
    #allocation14 [shape = 's32[1]{0}', space=sflag, size = 0x4, scoped, tag = 'scoped memory for tpu_custom_call.1']
    #allocation15 [shape = 'u8[65536]{0}', space=vmem, size = 0x10000, scoped, tag = 'input window, operand 9, single buffered']
    #allocation16 [shape = 'u8[4096]{0}', space=vmem, size = 0x1000, scoped, tag = 'output window, operand 0, single buffered']
    #allocation17 [shape = 'u8[1024]{0}', space=vmem, size = 0x400, scoped, tag = 'output window, operand 1, single buffered']
    #allocation18 [shape = 's32[1]{0}', space=sflag, size = 0x4, scoped, tag = 'scoped memory for tpu_custom_call.1']
    #allocation19 [shape = 'u8[1024]{0}', space=vmem, size = 0x400, scoped, tag = 'output window, operand 2, single buffered']
    %19 = vsyncpa [#allocation5], 0
    %20 = vsyncpa [#allocation8], 0
    %21 = vsyncpa [#allocation11], 0
    %22 = vsyncpa [#allocation14], 0
    %23 = vsyncpa [#allocation6], 0
    %24 = vsyncpa [#allocation18], 0
    // Predicated region
    $region2: #{tpu_custom_call.1} parent=1 // pred_check
      _
    $region3: #{tpu_custom_call.1} parent=1 // pred_check_branch
      %26 = sbr.rel (0) target = $region5
    $region4: #{tpu_custom_call.1} parent=1 // pred_region
      %s28 = ssub.s32 128, 128
      %29 = vsyncadd [#allocation5], %s28
      %s31 = sshll.u32 [#allocation4], 4
      %s32 = int_to_ptr.vmem [resolvable:$true] %s31
      %34 = dma.hbm_to_vmem [thread:$0]  %s0, 128, %s32, [#allocation5]
    $region5: #{tpu_custom_call.1} parent=1 // pred_fallthru
      _
    // Predicated region
    $region6: #{tpu_custom_call.1} parent=1 // pred_check
      _
    $region7: #{tpu_custom_call.1} parent=1 // pred_check_branch
      %36 = sbr.rel (0) target = $region9
    $region8: #{tpu_custom_call.1} parent=1 // pred_region
      %s38 = ssub.s32 512, 512
      %39 = vsyncadd [#allocation8], %s38
      %s40 = sshll.u32 [#allocation7], 4
      %s41 = int_to_ptr.vmem [resolvable:$true] %s40
      %46 = dma.hbm_to_vmem [thread:$0]  %s1, 512, %s41, [#allocation8], 128, 128, 8
    $region9: #{tpu_custom_call.1} parent=1 // pred_fallthru
      _
    // Predicated region
    $region10: #{tpu_custom_call.1} parent=1 // pred_check
      _
    $region11: #{tpu_custom_call.1} parent=1 // pred_check_branch
      %48 = sbr.rel (0) target = $region13
    $region12: #{tpu_custom_call.1} parent=1 // pred_region
      _
    $region13: #{tpu_custom_call.1} parent=1 // pred_fallthru
      _
    // Predicated region
    $region14: #{tpu_custom_call.1} parent=1 // pred_check
      _
    $region15: #{tpu_custom_call.1} parent=1 // pred_check_branch
      %50 = sbr.rel (0) target = $region17
    $region16: #{tpu_custom_call.1} parent=1 // pred_region
      %s52 = ssub.s32 8192, 8192
      %53 = vsyncadd [#allocation8], %s52
      %s54 = sshll.u32 [#allocation9], 4
      %s55 = int_to_ptr.vmem [resolvable:$true] %s54
      %60 = dma.hbm_to_vmem [thread:$0]  %s3, 8192, %s55, [#allocation8], 512, 512, 32
    $region17: #{tpu_custom_call.1} parent=1 // pred_fallthru
      _
    // Predicated region
    $region18: #{tpu_custom_call.1} parent=1 // pred_check
      _
    $region19: #{tpu_custom_call.1} parent=1 // pred_check_branch
      %62 = sbr.rel (0) target = $region21
    $region20: #{tpu_custom_call.1} parent=1 // pred_region
      %s64 = ssub.s32 8192, 8192
      %65 = vsyncadd [#allocation11], %s64
      %s66 = sshll.u32 [#allocation10], 4
      %s67 = int_to_ptr.vmem [resolvable:$true] %s66
      %72 = dma.hbm_to_vmem [thread:$0]  %s4, 8192, %s67, [#allocation11], 512, 512, 32
    $region21: #{tpu_custom_call.1} parent=1 // pred_fallthru
      _
    // Predicated region
    $region22: #{tpu_custom_call.1} parent=1 // pred_check
      _
    $region23: #{tpu_custom_call.1} parent=1 // pred_check_branch
      %74 = sbr.rel (0) target = $region25
    $region24: #{tpu_custom_call.1} parent=1 // pred_region
      _
    $region25: #{tpu_custom_call.1} parent=1 // pred_fallthru
      _
    // Predicated region
    $region26: #{tpu_custom_call.1} parent=1 // pred_check
      _
    $region27: #{tpu_custom_call.1} parent=1 // pred_check_branch
      %76 = sbr.rel (0) target = $region29
    $region28: #{tpu_custom_call.1} parent=1 // pred_region
      %s78 = ssub.s32 8192, 8192
      %79 = vsyncadd [#allocation11], %s78
      %s80 = sshll.u32 [#allocation12], 4
      %s81 = int_to_ptr.vmem [resolvable:$true] %s80
      %86 = dma.hbm_to_vmem [thread:$0]  %s6, 8192, %s81, [#allocation11], 512, 512, 32
    $region29: #{tpu_custom_call.1} parent=1 // pred_fallthru
      _
    // Predicated region
    $region30: #{tpu_custom_call.1} parent=1 // pred_check
      _
    $region31: #{tpu_custom_call.1} parent=1 // pred_check_branch
      %88 = sbr.rel (0) target = $region33
    $region32: #{tpu_custom_call.1} parent=1 // pred_region
      %s90 = ssub.s32 8192, 8192
      %91 = vsyncadd [#allocation14], %s90
      %s92 = sshll.u32 [#allocation13], 4
      %s93 = int_to_ptr.vmem [resolvable:$true] %s92
      %98 = dma.hbm_to_vmem [thread:$0]  %s7, 8192, %s93, [#allocation14], 512, 512, 32
    $region33: #{tpu_custom_call.1} parent=1 // pred_fallthru
      _
    // Predicated region
    $region34: #{tpu_custom_call.1} parent=1 // pred_check
      _
    $region35: #{tpu_custom_call.1} parent=1 // pred_check_branch
      %100 = sbr.rel (0) target = $region37
    $region36: #{tpu_custom_call.1} parent=1 // pred_region
      _
    $region37: #{tpu_custom_call.1} parent=1 // pred_fallthru
      _
    // Predicated region
    $region38: #{tpu_custom_call.1} parent=1 // pred_check
      _
    $region39: #{tpu_custom_call.1} parent=1 // pred_check_branch
      %102 = sbr.rel (0) target = $region41
    $region40: #{tpu_custom_call.1} parent=1 // pred_region
      %s104 = ssub.s32 2048, 2048
      %105 = vsyncadd [#allocation14], %s104
      %s106 = sshll.u32 [#allocation15], 4
      %s107 = int_to_ptr.vmem [resolvable:$true] %s106
      %112 = dma.hbm_to_vmem [thread:$0]  %s9, 2048, %s107, [#allocation14], 128, 128, 8
    $region41: #{tpu_custom_call.1} parent=1 // pred_fallthru
      _
    // Predicated region
    $region42: #{tpu_custom_call.1} parent=1 // pred_check
      _
    $region43: #{tpu_custom_call.1} parent=1 // pred_check_branch
      %114 = sbr.rel (0) target = $region45
    $region44: #{tpu_custom_call.1} parent=1 // pred_region
      _
    $region45: #{tpu_custom_call.1} parent=1 // pred_fallthru
      _
    // Predicated region
    $region46: #{tpu_custom_call.1} parent=1 // pred_check
      _
    $region47: #{tpu_custom_call.1} parent=1 // pred_check_branch
      %116 = sbr.rel (0) target = $region49
    $region48: #{tpu_custom_call.1} parent=1 // pred_region
      %117 = dma.done [#allocation5], 128
    $region49: #{tpu_custom_call.1} parent=1 // pred_fallthru
      _
    // Predicated region
    $region50: #{tpu_custom_call.1} parent=1 // pred_check
      _
    $region51: #{tpu_custom_call.1} parent=1 // pred_check_branch
      %119 = sbr.rel (0) target = $region53
    $region52: #{tpu_custom_call.1} parent=1 // pred_region
      %120 = dma.done [#allocation8], 512
    $region53: #{tpu_custom_call.1} parent=1 // pred_fallthru
      _
    // Predicated region
    $region54: #{tpu_custom_call.1} parent=1 // pred_check
      _
    $region55: #{tpu_custom_call.1} parent=1 // pred_check_branch
      %122 = sbr.rel (0) target = $region57
    $region56: #{tpu_custom_call.1} parent=1 // pred_region
      %123 = dma.done [#allocation8], 8192
    $region57: #{tpu_custom_call.1} parent=1 // pred_fallthru
      _
    // Predicated region
    $region58: #{tpu_custom_call.1} parent=1 // pred_check
      _
    $region59: #{tpu_custom_call.1} parent=1 // pred_check_branch
      %125 = sbr.rel (0) target = $region61
    $region60: #{tpu_custom_call.1} parent=1 // pred_region
      %126 = dma.done [#allocation11], 8192
    $region61: #{tpu_custom_call.1} parent=1 // pred_fallthru
      _
    // Predicated region
    $region62: #{tpu_custom_call.1} parent=1 // pred_check
      _
    $region63: #{tpu_custom_call.1} parent=1 // pred_check_branch
      %128 = sbr.rel (0) target = $region65
    $region64: #{tpu_custom_call.1} parent=1 // pred_region
      %129 = dma.done [#allocation11], 8192
    $region65: #{tpu_custom_call.1} parent=1 // pred_fallthru
      _
    // Predicated region
    $region66: #{tpu_custom_call.1} parent=1 // pred_check
      _
    $region67: #{tpu_custom_call.1} parent=1 // pred_check_branch
      %131 = sbr.rel (0) target = $region69
    $region68: #{tpu_custom_call.1} parent=1 // pred_region
      %132 = dma.done [#allocation14], 8192
    $region69: #{tpu_custom_call.1} parent=1 // pred_fallthru
      _
    // Predicated region
    $region70: #{tpu_custom_call.1} parent=1 // pred_check
      _
    $region71: #{tpu_custom_call.1} parent=1 // pred_check_branch
      %134 = sbr.rel (0) target = $region73
    $region72: #{tpu_custom_call.1} parent=1 // pred_region
      %135 = dma.done [#allocation14], 2048
    $region73: #{tpu_custom_call.1} parent=1 // pred_fallthru
      _
    %v136 = vld [vmem:[#allocation4] sm:$0xff]
    %v137 = vld [vmem:[#allocation7] sm:$0xff]
    %v138 = vld [vmem:[#allocation7 + $0x8] sm:$0xff]
    %v139 = vld [vmem:[#allocation7 + $0x10] sm:$0xff]
    %v140 = vld [vmem:[#allocation7 + $0x18] sm:$0x1]
    %v141 = vld [vmem:[%s2] sm:$0x1]
    %v143 = vlaneseq
    %v144 = vshrl.u32 %v143, 7
    %v145 = vsub.s32 0, %v144
    %v146 = vrot.slane %v141, %v145
    %vm148 = vcmask 203776
    %v150 = vsel %vm148, %v136, 0
    %vm152 = vcmask 1040384
    %v154 = vsel %vm152, %v140, 0
    %156 = vmatprep.subr.mxu0 0.0
    %157 = vmatpush1.msra.mxu0 0.0
    %158 = vmatprep.subr.mxu0 0.0
    %159 = vmatpush1.msra.mxu0 0.0
    %160 = vmatprep.subr.mxu0 0.0
    %161 = vmatpush1.msra.mxu0 0.0
    %162 = vmatprep.subr.mxu0 0.0
    %163 = vmatpush1.msra.mxu0 0.0
    %164 = vmatprep.subr.mxu0 0.0
    %165 = vmatpush1.msra.mxu0 0.0
    %166 = vmatprep.subr.mxu0 0.0
    %167 = vmatpush1.msra.mxu0 0.0
    %168 = vmatprep.subr.mxu0 0.0
    %169 = vmatpush1.msra.mxu0 0.0
    %170 = vmatprep.subr.mxu0 0.0
    %171 = vmatpush1.msra.mxu0 0.0
    %172 = vmatprep.subr.mxu0 0.0
    %173 = vmatpush1.msra.mxu0 0.0
    %174 = vmatprep.subr.mxu0 0.0
    %175 = vmatpush1.msra.mxu0 0.0
    %176 = vmatprep.subr.mxu0 0.0
    %177 = vmatpush1.msra.mxu0 0.0
    %178 = vmatprep.subr.mxu0 0.0
    %179 = vmatpush1.msra.mxu0 0.0
    %180 = vmatprep.subr.mxu0 0.0
    %181 = vmatpush1.msra.mxu0 %v154
    %182 = vmatprep.subr.mxu0 0.0
    %183 = vmatpush1.msra.mxu0 %v139
    %184 = vmatprep.subr.mxu0 0.0
    %185 = vmatpush1.msra.mxu0 %v138
    %186 = vmatprep.subr.mxu0 0.0
    %187 = vmatpush1.msra.mxu0 %v137
    %188 = vmatprep.subr.mxu0 0.0
    %189 = vmatpush2.msra.mxu0 0.0
    %190 = vmatprep.subr.mxu0 0.0
    %191 = vmatpush2.msra.mxu0 0.0
    %192 = vmatprep.subr.mxu0 0.0
    %193 = vmatpush2.msra.mxu0 0.0
    %194 = vmatprep.subr.mxu0 0.0
    %195 = vmatpush2.msra.mxu0 0.0
    %196 = vmatprep.subr.mxu0 0.0
    %197 = vmatpush2.msra.mxu0 0.0
    %198 = vmatprep.subr.mxu0 0.0
    %199 = vmatpush2.msra.mxu0 0.0
    %200 = vmatprep.subr.mxu0 0.0
    %201 = vmatpush2.msra.mxu0 0.0
    %202 = vmatprep.subr.mxu0 0.0
    %203 = vmatpush2.msra.mxu0 0.0
    %204 = vmatprep.subr.mxu0 0.0
    %205 = vmatpush2.msra.mxu0 0.0
    %206 = vmatprep.subr.mxu0 0.0
    %207 = vmatpush2.msra.mxu0 0.0
    %208 = vmatprep.subr.mxu0 0.0
    %209 = vmatpush2.msra.mxu0 0.0
    %210 = vmatprep.subr.mxu0 0.0
    %211 = vmatpush2.msra.mxu0 0.0
    %212 = vmatprep.subr.mxu0 0.0
    %213 = vmatpush2.msra.mxu0 0.0
    %214 = vmatprep.subr.mxu0 0.0
    %215 = vmatpush2.msra.mxu0 0.0
    %216 = vmatprep.subr.mxu0 0.0
    %217 = vmatpush2.msra.mxu0 0.0
    %218 = vmatprep.subr.mxu0 0.0
    %219 = vmatpush2.msra.mxu0 0.0
    %220 = vmatprep.mubr.f32.mxu0 0.0
    %221 = vmatmul.mubr.f32.gmra.mxu0 %v150
    %v222 = vpop.f32.mrf.mxu0
    %v223 = vadd.f32 %v146, %v222
    %v224 = vpop.f32.mrf.mxu0
    %225 = vdwg.mxu0
    %v226 = vld [vmem:[#allocation9] sm:$0xff]
    %v227 = vld [vmem:[#allocation9 + $0x8] sm:$0xff]
    %v228 = vld [vmem:[#allocation9 + $0x10] sm:$0xff]
    %v229 = vld [vmem:[#allocation9 + $0x18] sm:$0xff]
    %v230 = vld [vmem:[#allocation9 + $0x20] sm:$0xff]
    %v231 = vld [vmem:[#allocation9 + $0x28] sm:$0xff]
    %v232 = vld [vmem:[#allocation9 + $0x30] sm:$0xff]
    %v233 = vld [vmem:[#allocation9 + $0x38] sm:$0xff]
    %v234 = vld [vmem:[#allocation9 + $0x40] sm:$0xff]
    %v235 = vld [vmem:[#allocation9 + $0x48] sm:$0xff]
    %v236 = vld [vmem:[#allocation9 + $0x50] sm:$0xff]
    %v237 = vld [vmem:[#allocation9 + $0x58] sm:$0xff]
    %v238 = vld [vmem:[#allocation9 + $0x60] sm:$0xff]
    %v239 = vld [vmem:[#allocation9 + $0x68] sm:$0xff]
    %v240 = vld [vmem:[#allocation9 + $0x70] sm:$0xff]
    %v241 = vld [vmem:[#allocation9 + $0x78] sm:$0xff]
    %v242 = vld [vmem:[#allocation9 + $0x80] sm:$0xff]
    %v243 = vld [vmem:[#allocation9 + $0x88] sm:$0xff]
    %v244 = vld [vmem:[#allocation9 + $0x90] sm:$0xff]
    %v245 = vld [vmem:[#allocation9 + $0x98] sm:$0xff]
    %v246 = vld [vmem:[#allocation9 + $0xa0] sm:$0xff]
    %v247 = vld [vmem:[#allocation9 + $0xa8] sm:$0xff]
    %v248 = vld [vmem:[#allocation9 + $0xb0] sm:$0xff]
    %v249 = vld [vmem:[#allocation9 + $0xb8] sm:$0xff]
    %v250 = vld [vmem:[#allocation9 + $0xc0] sm:$0xff]
    %v251 = vld [vmem:[#allocation9 + $0xc8] sm:$0xff]
    %v252 = vld [vmem:[#allocation9 + $0xd0] sm:$0xff]
    %v253 = vld [vmem:[#allocation9 + $0xd8] sm:$0xff]
    %v254 = vld [vmem:[#allocation9 + $0xe0] sm:$0xff]
    %v255 = vld [vmem:[#allocation9 + $0xe8] sm:$0xff]
    %v256 = vld [vmem:[#allocation9 + $0xf0] sm:$0xff]
    %v257 = vld [vmem:[#allocation9 + $0xf8] sm:$0xff]
    %v258 = vld [vmem:[#allocation9 + $0x100] sm:$0xff]
    %v259 = vld [vmem:[#allocation9 + $0x108] sm:$0xff]
    %v260 = vld [vmem:[#allocation9 + $0x110] sm:$0xff]
    %v261 = vld [vmem:[#allocation9 + $0x118] sm:$0xff]
    %v262 = vld [vmem:[#allocation9 + $0x120] sm:$0xff]
    %v263 = vld [vmem:[#allocation9 + $0x128] sm:$0xff]
    %v264 = vld [vmem:[#allocation9 + $0x130] sm:$0xff]
    %v265 = vld [vmem:[#allocation9 + $0x138] sm:$0xff]
    %v266 = vld [vmem:[#allocation9 + $0x140] sm:$0xff]
    %v267 = vld [vmem:[#allocation9 + $0x148] sm:$0xff]
    %v268 = vld [vmem:[#allocation9 + $0x150] sm:$0xff]
    %v269 = vld [vmem:[#allocation9 + $0x158] sm:$0xff]
    %v270 = vld [vmem:[#allocation9 + $0x160] sm:$0xff]
    %v271 = vld [vmem:[#allocation9 + $0x168] sm:$0xff]
    %v272 = vld [vmem:[#allocation9 + $0x170] sm:$0xff]
    %v273 = vld [vmem:[#allocation9 + $0x178] sm:$0xff]
    %v274 = vld [vmem:[#allocation9 + $0x180] sm:$0xff]
    %v275 = vld [vmem:[#allocation9 + $0x188] sm:$0xff]
    %v276 = vld [vmem:[#allocation9 + $0x190] sm:$0xff]
    %v277 = vld [vmem:[#allocation9 + $0x198] sm:$0xff]
    %v278 = vld [vmem:[#allocation9 + $0x1a0] sm:$0xff]
    %v279 = vld [vmem:[#allocation9 + $0x1a8] sm:$0xff]
    %v280 = vld [vmem:[#allocation9 + $0x1b0] sm:$0xff]
    %v281 = vld [vmem:[#allocation9 + $0x1b8] sm:$0xff]
    %v282 = vld [vmem:[#allocation9 + $0x1c0] sm:$0xff]
    %v283 = vld [vmem:[#allocation9 + $0x1c8] sm:$0xff]
    %v284 = vld [vmem:[#allocation9 + $0x1d0] sm:$0xff]
    %v285 = vld [vmem:[#allocation9 + $0x1d8] sm:$0xff]
    %v286 = vld [vmem:[#allocation9 + $0x1e0] sm:$0xff]
    %v287 = vld [vmem:[#allocation9 + $0x1e8] sm:$0xff]
    %v288 = vld [vmem:[#allocation9 + $0x1f0] sm:$0xff]
    %v289 = vld [vmem:[#allocation9 + $0x1f8] sm:$0xff]
    %v290 = vld [vmem:[%s5] sm:$0xf]
    %v292 = vlaneseq
    %v293 = vshrl.u32 %v292, 7
    %v294 = vsub.s32 0, %v293
    %v295 = vrot.slane %v290, %v294
    %v296 = vlaneseq
    %v297 = vshrl.u32 %v296, 7
    %v298 = vsub.s32 1, %v297
    %v299 = vrot.slane %v290, %v298
    %v300 = vlaneseq
    %v301 = vshrl.u32 %v300, 7
    %v302 = vsub.s32 2, %v301
    %v303 = vrot.slane %v290, %v302
    %v304 = vlaneseq
    %v305 = vshrl.u32 %v304, 7
    %v306 = vsub.s32 3, %v305
    %v307 = vrot.slane %v290, %v306
    %312 = vmatprep.subr.mxu0 %v287
    %313 = vmatpush1.msra.mxu0 %v286
    %314 = vmatprep.subr.mxu0 %v283
    %315 = vmatpush1.msra.mxu0 %v282
    %316 = vmatprep.subr.mxu0 %v279
    %317 = vmatpush1.msra.mxu0 %v278
    %318 = vmatprep.subr.mxu0 %v275
    %319 = vmatpush1.msra.mxu0 %v274
    %320 = vmatprep.subr.mxu0 %v271
    %321 = vmatpush1.msra.mxu0 %v270
    %322 = vmatprep.subr.mxu0 %v267
    %323 = vmatpush1.msra.mxu0 %v266
    %324 = vmatprep.subr.mxu0 %v263
    %325 = vmatpush1.msra.mxu0 %v262
    %326 = vmatprep.subr.mxu0 %v259
    %327 = vmatpush1.msra.mxu0 %v258
    %328 = vmatprep.subr.mxu0 %v255
    %329 = vmatpush1.msra.mxu0 %v254
    %330 = vmatprep.subr.mxu0 %v251
    %331 = vmatpush1.msra.mxu0 %v250
    %332 = vmatprep.subr.mxu0 %v247
    %333 = vmatpush1.msra.mxu0 %v246
    %334 = vmatprep.subr.mxu0 %v243
    %335 = vmatpush1.msra.mxu0 %v242
    %336 = vmatprep.subr.mxu0 %v239
    %337 = vmatpush1.msra.mxu0 %v238
    %338 = vmatprep.subr.mxu0 %v235
    %339 = vmatpush1.msra.mxu0 %v234
    %340 = vmatprep.subr.mxu0 %v231
    %341 = vmatpush1.msra.mxu0 %v230
    %342 = vmatprep.subr.mxu0 %v227
    %343 = vmatpush1.msra.mxu0 %v226
    %344 = vmatprep.subr.mxu0 0.0
    %345 = vmatpush2.msra.mxu0 0.0
    %346 = vmatprep.subr.mxu0 0.0
    %347 = vmatpush2.msra.mxu0 0.0
    %348 = vmatprep.subr.mxu0 0.0
    %349 = vmatpush2.msra.mxu0 0.0
    %350 = vmatprep.subr.mxu0 0.0
    %351 = vmatpush2.msra.mxu0 0.0
    %352 = vmatprep.subr.mxu0 0.0
    %353 = vmatpush2.msra.mxu0 0.0
    %354 = vmatprep.subr.mxu0 0.0
    %355 = vmatpush2.msra.mxu0 0.0
    %356 = vmatprep.subr.mxu0 0.0
    %357 = vmatpush2.msra.mxu0 0.0
    %358 = vmatprep.subr.mxu0 0.0
    %359 = vmatpush2.msra.mxu0 0.0
    %360 = vmatprep.subr.mxu0 0.0
    %361 = vmatpush2.msra.mxu0 0.0
    %362 = vmatprep.subr.mxu0 0.0
    %363 = vmatpush2.msra.mxu0 0.0
    %364 = vmatprep.subr.mxu0 0.0
    %365 = vmatpush2.msra.mxu0 0.0
    %366 = vmatprep.subr.mxu0 0.0
    %367 = vmatpush2.msra.mxu0 0.0
    %368 = vmatprep.subr.mxu0 0.0
    %369 = vmatpush2.msra.mxu0 0.0
    %370 = vmatprep.subr.mxu0 0.0
    %371 = vmatpush2.msra.mxu0 0.0
    %372 = vmatprep.subr.mxu0 0.0
    %373 = vmatpush2.msra.mxu0 0.0
    %374 = vmatprep.subr.mxu0 0.0
    %375 = vmatpush2.msra.mxu0 0.0
    %376 = vmatprep.mubr.f32.mxu0 0.0
    %377 = vmatmul.mubr.f32.gmra.mxu0 %v223
    %v378 = vpop.f32.mrf.mxu0
    %v379 = vadd.f32 %v295, %v378
    %v380 = vpop.f32.mrf.mxu0
    %v381 = vadd.f32 %v299, %v380
    %382 = vdwg.mxu0
    %383 = vmatprep.subr.mxu0 %v289
    %384 = vmatpush1.msra.mxu0 %v288
    %385 = vmatprep.subr.mxu0 %v285
    %386 = vmatpush1.msra.mxu0 %v284
    %387 = vmatprep.subr.mxu0 %v281
    %388 = vmatpush1.msra.mxu0 %v280
    %389 = vmatprep.subr.mxu0 %v277
    %390 = vmatpush1.msra.mxu0 %v276
    %391 = vmatprep.subr.mxu0 %v273
    %392 = vmatpush1.msra.mxu0 %v272
    %393 = vmatprep.subr.mxu0 %v269
    %394 = vmatpush1.msra.mxu0 %v268
    %395 = vmatprep.subr.mxu0 %v265
    %396 = vmatpush1.msra.mxu0 %v264
    %397 = vmatprep.subr.mxu0 %v261
    %398 = vmatpush1.msra.mxu0 %v260
    %399 = vmatprep.subr.mxu0 %v257
    %400 = vmatpush1.msra.mxu0 %v256
    %401 = vmatprep.subr.mxu0 %v253
    %402 = vmatpush1.msra.mxu0 %v252
    %403 = vmatprep.subr.mxu0 %v249
    %404 = vmatpush1.msra.mxu0 %v248
    %405 = vmatprep.subr.mxu0 %v245
    %406 = vmatpush1.msra.mxu0 %v244
    %407 = vmatprep.subr.mxu0 %v241
    %408 = vmatpush1.msra.mxu0 %v240
    %409 = vmatprep.subr.mxu0 %v237
    %410 = vmatpush1.msra.mxu0 %v236
    %411 = vmatprep.subr.mxu0 %v233
    %412 = vmatpush1.msra.mxu0 %v232
    %413 = vmatprep.subr.mxu0 %v229
    %414 = vmatpush1.msra.mxu0 %v228
    %415 = vmatprep.subr.mxu0 0.0
    %416 = vmatpush2.msra.mxu0 0.0
    %417 = vmatprep.subr.mxu0 0.0
    %418 = vmatpush2.msra.mxu0 0.0
    %419 = vmatprep.subr.mxu0 0.0
    %420 = vmatpush2.msra.mxu0 0.0
    %421 = vmatprep.subr.mxu0 0.0
    %422 = vmatpush2.msra.mxu0 0.0
    %423 = vmatprep.subr.mxu0 0.0
    %424 = vmatpush2.msra.mxu0 0.0
    %425 = vmatprep.subr.mxu0 0.0
    %426 = vmatpush2.msra.mxu0 0.0
    %427 = vmatprep.subr.mxu0 0.0
    %428 = vmatpush2.msra.mxu0 0.0
    %429 = vmatprep.subr.mxu0 0.0
    %430 = vmatpush2.msra.mxu0 0.0
    %431 = vmatprep.subr.mxu0 0.0
    %432 = vmatpush2.msra.mxu0 0.0
    %433 = vmatprep.subr.mxu0 0.0
    %434 = vmatpush2.msra.mxu0 0.0
    %435 = vmatprep.subr.mxu0 0.0
    %436 = vmatpush2.msra.mxu0 0.0
    %437 = vmatprep.subr.mxu0 0.0
    %438 = vmatpush2.msra.mxu0 0.0
    %439 = vmatprep.subr.mxu0 0.0
    %440 = vmatpush2.msra.mxu0 0.0
    %441 = vmatprep.subr.mxu0 0.0
    %442 = vmatpush2.msra.mxu0 0.0
    %443 = vmatprep.subr.mxu0 0.0
    %444 = vmatpush2.msra.mxu0 0.0
    %445 = vmatprep.subr.mxu0 0.0
    %446 = vmatpush2.msra.mxu0 0.0
    %447 = vmatprep.mubr.f32.mxu0 0.0
    %448 = vmatmul.mubr.f32.gmra.mxu0 %v223
    %v449 = vpop.f32.mrf.mxu0
    %v450 = vadd.f32 %v303, %v449
    %v451 = vpop.f32.mrf.mxu0
    %v452 = vadd.f32 %v307, %v451
    %453 = vdwg.mxu0
    %v454 = vld [vmem:[#allocation10] sm:$0xff]
    %v455 = vld [vmem:[#allocation10 + $0x8] sm:$0xff]
    %v456 = vld [vmem:[#allocation10 + $0x10] sm:$0xff]
    %v457 = vld [vmem:[#allocation10 + $0x18] sm:$0xff]
    %v458 = vld [vmem:[#allocation10 + $0x20] sm:$0xff]
    %v459 = vld [vmem:[#allocation10 + $0x28] sm:$0xff]
    %v460 = vld [vmem:[#allocation10 + $0x30] sm:$0xff]
    %v461 = vld [vmem:[#allocation10 + $0x38] sm:$0xff]
    %v462 = vld [vmem:[#allocation10 + $0x40] sm:$0xff]
    %v463 = vld [vmem:[#allocation10 + $0x48] sm:$0xff]
    %v464 = vld [vmem:[#allocation10 + $0x50] sm:$0xff]
    %v465 = vld [vmem:[#allocation10 + $0x58] sm:$0xff]
    %v466 = vld [vmem:[#allocation10 + $0x60] sm:$0xff]
    %v467 = vld [vmem:[#allocation10 + $0x68] sm:$0xff]
    %v468 = vld [vmem:[#allocation10 + $0x70] sm:$0xff]
    %v469 = vld [vmem:[#allocation10 + $0x78] sm:$0xff]
    %v470 = vld [vmem:[#allocation10 + $0x80] sm:$0xff]
    %v471 = vld [vmem:[#allocation10 + $0x88] sm:$0xff]
    %v472 = vld [vmem:[#allocation10 + $0x90] sm:$0xff]
    %v473 = vld [vmem:[#allocation10 + $0x98] sm:$0xff]
    %v474 = vld [vmem:[#allocation10 + $0xa0] sm:$0xff]
    %v475 = vld [vmem:[#allocation10 + $0xa8] sm:$0xff]
    %v476 = vld [vmem:[#allocation10 + $0xb0] sm:$0xff]
    %v477 = vld [vmem:[#allocation10 + $0xb8] sm:$0xff]
    %v478 = vld [vmem:[#allocation10 + $0xc0] sm:$0xff]
    %v479 = vld [vmem:[#allocation10 + $0xc8] sm:$0xff]
    %v480 = vld [vmem:[#allocation10 + $0xd0] sm:$0xff]
    %v481 = vld [vmem:[#allocation10 + $0xd8] sm:$0xff]
    %v482 = vld [vmem:[#allocation10 + $0xe0] sm:$0xff]
    %v483 = vld [vmem:[#allocation10 + $0xe8] sm:$0xff]
    %v484 = vld [vmem:[#allocation10 + $0xf0] sm:$0xff]
    %v485 = vld [vmem:[#allocation10 + $0xf8] sm:$0xff]
    %v486 = vld [vmem:[#allocation10 + $0x100] sm:$0xff]
    %v487 = vld [vmem:[#allocation10 + $0x108] sm:$0xff]
    %v488 = vld [vmem:[#allocation10 + $0x110] sm:$0xff]
    %v489 = vld [vmem:[#allocation10 + $0x118] sm:$0xff]
    %v490 = vld [vmem:[#allocation10 + $0x120] sm:$0xff]
    %v491 = vld [vmem:[#allocation10 + $0x128] sm:$0xff]
    %v492 = vld [vmem:[#allocation10 + $0x130] sm:$0xff]
    %v493 = vld [vmem:[#allocation10 + $0x138] sm:$0xff]
    %v494 = vld [vmem:[#allocation10 + $0x140] sm:$0xff]
    %v495 = vld [vmem:[#allocation10 + $0x148] sm:$0xff]
    %v496 = vld [vmem:[#allocation10 + $0x150] sm:$0xff]
    %v497 = vld [vmem:[#allocation10 + $0x158] sm:$0xff]
    %v498 = vld [vmem:[#allocation10 + $0x160] sm:$0xff]
    %v499 = vld [vmem:[#allocation10 + $0x168] sm:$0xff]
    %v500 = vld [vmem:[#allocation10 + $0x170] sm:$0xff]
    %v501 = vld [vmem:[#allocation10 + $0x178] sm:$0xff]
    %v502 = vld [vmem:[#allocation10 + $0x180] sm:$0xff]
    %v503 = vld [vmem:[#allocation10 + $0x188] sm:$0xff]
    %v504 = vld [vmem:[#allocation10 + $0x190] sm:$0xff]
    %v505 = vld [vmem:[#allocation10 + $0x198] sm:$0xff]
    %v506 = vld [vmem:[#allocation10 + $0x1a0] sm:$0xff]
    %v507 = vld [vmem:[#allocation10 + $0x1a8] sm:$0xff]
    %v508 = vld [vmem:[#allocation10 + $0x1b0] sm:$0xff]
    %v509 = vld [vmem:[#allocation10 + $0x1b8] sm:$0xff]
    %v510 = vld [vmem:[#allocation10 + $0x1c0] sm:$0xff]
    %v511 = vld [vmem:[#allocation10 + $0x1c8] sm:$0xff]
    %v512 = vld [vmem:[#allocation10 + $0x1d0] sm:$0xff]
    %v513 = vld [vmem:[#allocation10 + $0x1d8] sm:$0xff]
    %v514 = vld [vmem:[#allocation10 + $0x1e0] sm:$0xff]
    %v515 = vld [vmem:[#allocation10 + $0x1e8] sm:$0xff]
    %v516 = vld [vmem:[#allocation10 + $0x1f0] sm:$0xff]
    %v517 = vld [vmem:[#allocation10 + $0x1f8] sm:$0xff]
    %518 = vmatprep.subr.mxu0 %v515
    %519 = vmatpush1.msra.mxu0 %v514
    %520 = vmatprep.subr.mxu0 %v511
    %521 = vmatpush1.msra.mxu0 %v510
    %522 = vmatprep.subr.mxu0 %v507
    %523 = vmatpush1.msra.mxu0 %v506
    %524 = vmatprep.subr.mxu0 %v503
    %525 = vmatpush1.msra.mxu0 %v502
    %526 = vmatprep.subr.mxu0 %v499
    %527 = vmatpush1.msra.mxu0 %v498
    %528 = vmatprep.subr.mxu0 %v495
    %529 = vmatpush1.msra.mxu0 %v494
    %530 = vmatprep.subr.mxu0 %v491
    %531 = vmatpush1.msra.mxu0 %v490
    %532 = vmatprep.subr.mxu0 %v487
    %533 = vmatpush1.msra.mxu0 %v486
    %534 = vmatprep.subr.mxu0 %v483
    %535 = vmatpush1.msra.mxu0 %v482
    %536 = vmatprep.subr.mxu0 %v479
    %537 = vmatpush1.msra.mxu0 %v478
    %538 = vmatprep.subr.mxu0 %v475
    %539 = vmatpush1.msra.mxu0 %v474
    %540 = vmatprep.subr.mxu0 %v471
    %541 = vmatpush1.msra.mxu0 %v470
    %542 = vmatprep.subr.mxu0 %v467
    %543 = vmatpush1.msra.mxu0 %v466
    %544 = vmatprep.subr.mxu0 %v463
    %545 = vmatpush1.msra.mxu0 %v462
    %546 = vmatprep.subr.mxu0 %v459
    %547 = vmatpush1.msra.mxu0 %v458
    %548 = vmatprep.subr.mxu0 %v455
    %549 = vmatpush1.msra.mxu0 %v454
    %550 = vmatprep.subr.mxu0 0.0
    %551 = vmatpush2.msra.mxu0 0.0
    %552 = vmatprep.subr.mxu0 0.0
    %553 = vmatpush2.msra.mxu0 0.0
    %554 = vmatprep.subr.mxu0 0.0
    %555 = vmatpush2.msra.mxu0 0.0
    %556 = vmatprep.subr.mxu0 0.0
    %557 = vmatpush2.msra.mxu0 0.0
    %558 = vmatprep.subr.mxu0 0.0
    %559 = vmatpush2.msra.mxu0 0.0
    %560 = vmatprep.subr.mxu0 0.0
    %561 = vmatpush2.msra.mxu0 0.0
    %562 = vmatprep.subr.mxu0 0.0
    %563 = vmatpush2.msra.mxu0 0.0
    %564 = vmatprep.subr.mxu0 0.0
    %565 = vmatpush2.msra.mxu0 0.0
    %566 = vmatprep.subr.mxu0 0.0
    %567 = vmatpush2.msra.mxu0 0.0
    %568 = vmatprep.subr.mxu0 0.0
    %569 = vmatpush2.msra.mxu0 0.0
    %570 = vmatprep.subr.mxu0 0.0
    %571 = vmatpush2.msra.mxu0 0.0
    %572 = vmatprep.subr.mxu0 0.0
    %573 = vmatpush2.msra.mxu0 0.0
    %574 = vmatprep.subr.mxu0 0.0
    %575 = vmatpush2.msra.mxu0 0.0
    %576 = vmatprep.subr.mxu0 0.0
    %577 = vmatpush2.msra.mxu0 0.0
    %578 = vmatprep.subr.mxu0 0.0
    %579 = vmatpush2.msra.mxu0 0.0
    %580 = vmatprep.subr.mxu0 0.0
    %581 = vmatpush2.msra.mxu0 0.0
    %582 = vmatprep.mubr.f32.mxu0 0.0
    %583 = vmatmul.mubr.f32.gmra.mxu0 0.0
    %v584 = vpop.f32.mrf.mxu0
    %v585 = vadd.f32 0.0, %v584
    %v586 = vpop.f32.mrf.mxu0
    %v587 = vadd.f32 0.0, %v586
    %588 = vdwg.mxu0
    %589 = vmatprep.subr.mxu0 %v517
    %590 = vmatpush1.msra.mxu0 %v516
    %591 = vmatprep.subr.mxu0 %v513
    %592 = vmatpush1.msra.mxu0 %v512
    %593 = vmatprep.subr.mxu0 %v509
    %594 = vmatpush1.msra.mxu0 %v508
    %595 = vmatprep.subr.mxu0 %v505
    %596 = vmatpush1.msra.mxu0 %v504
    %597 = vmatprep.subr.mxu0 %v501
    %598 = vmatpush1.msra.mxu0 %v500
    %599 = vmatprep.subr.mxu0 %v497
    %600 = vmatpush1.msra.mxu0 %v496
    %601 = vmatprep.subr.mxu0 %v493
    %602 = vmatpush1.msra.mxu0 %v492
    %603 = vmatprep.subr.mxu0 %v489
    %604 = vmatpush1.msra.mxu0 %v488
    %605 = vmatprep.subr.mxu0 %v485
    %606 = vmatpush1.msra.mxu0 %v484
    %607 = vmatprep.subr.mxu0 %v481
    %608 = vmatpush1.msra.mxu0 %v480
    %609 = vmatprep.subr.mxu0 %v477
    %610 = vmatpush1.msra.mxu0 %v476
    %611 = vmatprep.subr.mxu0 %v473
    %612 = vmatpush1.msra.mxu0 %v472
    %613 = vmatprep.subr.mxu0 %v469
    %614 = vmatpush1.msra.mxu0 %v468
    %615 = vmatprep.subr.mxu0 %v465
    %616 = vmatpush1.msra.mxu0 %v464
    %617 = vmatprep.subr.mxu0 %v461
    %618 = vmatpush1.msra.mxu0 %v460
    %619 = vmatprep.subr.mxu0 %v457
    %620 = vmatpush1.msra.mxu0 %v456
    %621 = vmatprep.subr.mxu0 0.0
    %622 = vmatpush2.msra.mxu0 0.0
    %623 = vmatprep.subr.mxu0 0.0
    %624 = vmatpush2.msra.mxu0 0.0
    %625 = vmatprep.subr.mxu0 0.0
    %626 = vmatpush2.msra.mxu0 0.0
    %627 = vmatprep.subr.mxu0 0.0
    %628 = vmatpush2.msra.mxu0 0.0
    %629 = vmatprep.subr.mxu0 0.0
    %630 = vmatpush2.msra.mxu0 0.0
    %631 = vmatprep.subr.mxu0 0.0
    %632 = vmatpush2.msra.mxu0 0.0
    %633 = vmatprep.subr.mxu0 0.0
    %634 = vmatpush2.msra.mxu0 0.0
    %635 = vmatprep.subr.mxu0 0.0
    %636 = vmatpush2.msra.mxu0 0.0
    %637 = vmatprep.subr.mxu0 0.0
    %638 = vmatpush2.msra.mxu0 0.0
    %639 = vmatprep.subr.mxu0 0.0
    %640 = vmatpush2.msra.mxu0 0.0
    %641 = vmatprep.subr.mxu0 0.0
    %642 = vmatpush2.msra.mxu0 0.0
    %643 = vmatprep.subr.mxu0 0.0
    %644 = vmatpush2.msra.mxu0 0.0
    %645 = vmatprep.subr.mxu0 0.0
    %646 = vmatpush2.msra.mxu0 0.0
    %647 = vmatprep.subr.mxu0 0.0
    %648 = vmatpush2.msra.mxu0 0.0
    %649 = vmatprep.subr.mxu0 0.0
    %650 = vmatpush2.msra.mxu0 0.0
    %651 = vmatprep.subr.mxu0 0.0
    %652 = vmatpush2.msra.mxu0 0.0
    %653 = vmatprep.mubr.f32.mxu0 0.0
    %654 = vmatmul.mubr.f32.gmra.mxu0 0.0
    %v655 = vpop.f32.mrf.mxu0
    %v656 = vadd.f32 0.0, %v655
    %v657 = vpop.f32.mrf.mxu0
    %v658 = vadd.f32 0.0, %v657
    %659 = vdwg.mxu0
    %v660 = vadd.f32 %v379, %v585
    %v661 = vadd.f32 %v381, %v587
    %v662 = vadd.f32 %v450, %v656
    %v663 = vadd.f32 %v452, %v658
    %v664 = vxor.u32 %v660, 2147483648
    %v665 = vmul.f32 %v664, 1.442695
    %v666 = vpow.pop %v665
    %v667 = vadd.f32 %v666, 1.0
    %v668 = vrcp.pop %v667
    %v669 = vmul.f32 1.0, %v668
    %v670 = vxor.u32 %v661, 2147483648
    %v671 = vmul.f32 %v670, 1.442695
    %v672 = vpow.pop %v671
    %v673 = vadd.f32 %v672, 1.0
    %v674 = vrcp.pop %v673
    %v675 = vmul.f32 1.0, %v674
    %v676 = vtanh.pop %v662
    %v677 = vxor.u32 %v663, 2147483648
    %v678 = vmul.f32 %v677, 1.442695
    %v679 = vpow.pop %v678
    %v680 = vadd.f32 %v679, 1.0
    %v681 = vrcp.pop %v680
    %v682 = vmul.f32 1.0, %v681
    %v683 = vmul.f32 %v675, 0.0
    %v684 = vmul.f32 %v669, %v676
    %v685 = vadd.f32 %v683, %v684
    %v686 = vtanh.pop %v685
    %v687 = vmul.f32 %v682, %v686
    %688 = vst [vmem:[#allocation2] sm:$0x1] %v687
    %v689 = vld [vmem:[#allocation10] sm:$0xff]
    %v690 = vld [vmem:[#allocation10 + $0x8] sm:$0xff]
    %v691 = vld [vmem:[#allocation10 + $0x10] sm:$0xff]
    %v692 = vld [vmem:[#allocation10 + $0x18] sm:$0xff]
    %v693 = vld [vmem:[#allocation10 + $0x20] sm:$0xff]
    %v694 = vld [vmem:[#allocation10 + $0x28] sm:$0xff]
    %v695 = vld [vmem:[#allocation10 + $0x30] sm:$0xff]
    %v696 = vld [vmem:[#allocation10 + $0x38] sm:$0xff]
    %v697 = vld [vmem:[#allocation10 + $0x40] sm:$0xff]
    %v698 = vld [vmem:[#allocation10 + $0x48] sm:$0xff]
    %v699 = vld [vmem:[#allocation10 + $0x50] sm:$0xff]
    %v700 = vld [vmem:[#allocation10 + $0x58] sm:$0xff]
    %v701 = vld [vmem:[#allocation10 + $0x60] sm:$0xff]
    %v702 = vld [vmem:[#allocation10 + $0x68] sm:$0xff]
    %v703 = vld [vmem:[#allocation10 + $0x70] sm:$0xff]
    %v704 = vld [vmem:[#allocation10 + $0x78] sm:$0xff]
    %v705 = vld [vmem:[#allocation10 + $0x80] sm:$0xff]
    %v706 = vld [vmem:[#allocation10 + $0x88] sm:$0xff]
    %v707 = vld [vmem:[#allocation10 + $0x90] sm:$0xff]
    %v708 = vld [vmem:[#allocation10 + $0x98] sm:$0xff]
    %v709 = vld [vmem:[#allocation10 + $0xa0] sm:$0xff]
    %v710 = vld [vmem:[#allocation10 + $0xa8] sm:$0xff]
    %v711 = vld [vmem:[#allocation10 + $0xb0] sm:$0xff]
    %v712 = vld [vmem:[#allocation10 + $0xb8] sm:$0xff]
    %v713 = vld [vmem:[#allocation10 + $0xc0] sm:$0xff]
    %v714 = vld [vmem:[#allocation10 + $0xc8] sm:$0xff]
    %v715 = vld [vmem:[#allocation10 + $0xd0] sm:$0xff]
    %v716 = vld [vmem:[#allocation10 + $0xd8] sm:$0xff]
    %v717 = vld [vmem:[#allocation10 + $0xe0] sm:$0xff]
    %v718 = vld [vmem:[#allocation10 + $0xe8] sm:$0xff]
    %v719 = vld [vmem:[#allocation10 + $0xf0] sm:$0xff]
    %v720 = vld [vmem:[#allocation10 + $0xf8] sm:$0xff]
    %v721 = vld [vmem:[#allocation10 + $0x100] sm:$0xff]
    %v722 = vld [vmem:[#allocation10 + $0x108] sm:$0xff]
    %v723 = vld [vmem:[#allocation10 + $0x110] sm:$0xff]
    %v724 = vld [vmem:[#allocation10 + $0x118] sm:$0xff]
    %v725 = vld [vmem:[#allocation10 + $0x120] sm:$0xff]
    %v726 = vld [vmem:[#allocation10 + $0x128] sm:$0xff]
    %v727 = vld [vmem:[#allocation10 + $0x130] sm:$0xff]
    %v728 = vld [vmem:[#allocation10 + $0x138] sm:$0xff]
    %v729 = vld [vmem:[#allocation10 + $0x140] sm:$0xff]
    %v730 = vld [vmem:[#allocation10 + $0x148] sm:$0xff]
    %v731 = vld [vmem:[#allocation10 + $0x150] sm:$0xff]
    %v732 = vld [vmem:[#allocation10 + $0x158] sm:$0xff]
    %v733 = vld [vmem:[#allocation10 + $0x160] sm:$0xff]
    %v734 = vld [vmem:[#allocation10 + $0x168] sm:$0xff]
    %v735 = vld [vmem:[#allocation10 + $0x170] sm:$0xff]
    %v736 = vld [vmem:[#allocation10 + $0x178] sm:$0xff]
    %v737 = vld [vmem:[#allocation10 + $0x180] sm:$0xff]
    %v738 = vld [vmem:[#allocation10 + $0x188] sm:$0xff]
    %v739 = vld [vmem:[#allocation10 + $0x190] sm:$0xff]
    %v740 = vld [vmem:[#allocation10 + $0x198] sm:$0xff]
    %v741 = vld [vmem:[#allocation10 + $0x1a0] sm:$0xff]
    %v742 = vld [vmem:[#allocation10 + $0x1a8] sm:$0xff]
    %v743 = vld [vmem:[#allocation10 + $0x1b0] sm:$0xff]
    %v744 = vld [vmem:[#allocation10 + $0x1b8] sm:$0xff]
    %v745 = vld [vmem:[#allocation10 + $0x1c0] sm:$0xff]
    %v746 = vld [vmem:[#allocation10 + $0x1c8] sm:$0xff]
    %v747 = vld [vmem:[#allocation10 + $0x1d0] sm:$0xff]
    %v748 = vld [vmem:[#allocation10 + $0x1d8] sm:$0xff]
    %v749 = vld [vmem:[#allocation10 + $0x1e0] sm:$0xff]
    %v750 = vld [vmem:[#allocation10 + $0x1e8] sm:$0xff]
    %v751 = vld [vmem:[#allocation10 + $0x1f0] sm:$0xff]
    %v752 = vld [vmem:[#allocation10 + $0x1f8] sm:$0xff]
    %753 = vmatprep.subr.mxu0 %v750
    %754 = vmatpush1.msra.mxu0 %v749
    %755 = vmatprep.subr.mxu0 %v746
    %756 = vmatpush1.msra.mxu0 %v745
    %757 = vmatprep.subr.mxu0 %v742
    %758 = vmatpush1.msra.mxu0 %v741
    %759 = vmatprep.subr.mxu0 %v738
    %760 = vmatpush1.msra.mxu0 %v737
    %761 = vmatprep.subr.mxu0 %v734
    %762 = vmatpush1.msra.mxu0 %v733
    %763 = vmatprep.subr.mxu0 %v730
    %764 = vmatpush1.msra.mxu0 %v729
    %765 = vmatprep.subr.mxu0 %v726
    %766 = vmatpush1.msra.mxu0 %v725
    %767 = vmatprep.subr.mxu0 %v722
    %768 = vmatpush1.msra.mxu0 %v721
    %769 = vmatprep.subr.mxu0 %v718
    %770 = vmatpush1.msra.mxu0 %v717
    %771 = vmatprep.subr.mxu0 %v714
    %772 = vmatpush1.msra.mxu0 %v713
    %773 = vmatprep.subr.mxu0 %v710
    %774 = vmatpush1.msra.mxu0 %v709
    %775 = vmatprep.subr.mxu0 %v706
    %776 = vmatpush1.msra.mxu0 %v705
    %777 = vmatprep.subr.mxu0 %v702
    %778 = vmatpush1.msra.mxu0 %v701
    %779 = vmatprep.subr.mxu0 %v698
    %780 = vmatpush1.msra.mxu0 %v697
    %781 = vmatprep.subr.mxu0 %v694
    %782 = vmatpush1.msra.mxu0 %v693
    %783 = vmatprep.subr.mxu0 %v690
    %784 = vmatpush1.msra.mxu0 %v689
    %785 = vmatprep.subr.mxu0 0.0
    %786 = vmatpush2.msra.mxu0 0.0
    %787 = vmatprep.subr.mxu0 0.0
    %788 = vmatpush2.msra.mxu0 0.0
    %789 = vmatprep.subr.mxu0 0.0
    %790 = vmatpush2.msra.mxu0 0.0
    %791 = vmatprep.subr.mxu0 0.0
    %792 = vmatpush2.msra.mxu0 0.0
    %793 = vmatprep.subr.mxu0 0.0
    %794 = vmatpush2.msra.mxu0 0.0
    %795 = vmatprep.subr.mxu0 0.0
    %796 = vmatpush2.msra.mxu0 0.0
    %797 = vmatprep.subr.mxu0 0.0
    %798 = vmatpush2.msra.mxu0 0.0
    %799 = vmatprep.subr.mxu0 0.0
    %800 = vmatpush2.msra.mxu0 0.0
    %801 = vmatprep.subr.mxu0 0.0
    %802 = vmatpush2.msra.mxu0 0.0
    %803 = vmatprep.subr.mxu0 0.0
    %804 = vmatpush2.msra.mxu0 0.0
    %805 = vmatprep.subr.mxu0 0.0
    %806 = vmatpush2.msra.mxu0 0.0
    %807 = vmatprep.subr.mxu0 0.0
    %808 = vmatpush2.msra.mxu0 0.0
    %809 = vmatprep.subr.mxu0 0.0
    %810 = vmatpush2.msra.mxu0 0.0
    %811 = vmatprep.subr.mxu0 0.0
    %812 = vmatpush2.msra.mxu0 0.0
    %813 = vmatprep.subr.mxu0 0.0
    %814 = vmatpush2.msra.mxu0 0.0
    %815 = vmatprep.subr.mxu0 0.0
    %816 = vmatpush2.msra.mxu0 0.0
    %817 = vmatprep.mubr.f32.mxu0 0.0
    %818 = vmatmul.mubr.f32.gmra.mxu0 %v687
    %v819 = vpop.f32.mrf.mxu0
    %v820 = vadd.f32 0.0, %v819
    %v821 = vpop.f32.mrf.mxu0
    %v822 = vadd.f32 0.0, %v821
    %823 = vdwg.mxu0
    %824 = vmatprep.subr.mxu0 %v752
    %825 = vmatpush1.msra.mxu0 %v751
    %826 = vmatprep.subr.mxu0 %v748
    %827 = vmatpush1.msra.mxu0 %v747
    %828 = vmatprep.subr.mxu0 %v744
    %829 = vmatpush1.msra.mxu0 %v743
    %830 = vmatprep.subr.mxu0 %v740
    %831 = vmatpush1.msra.mxu0 %v739
    %832 = vmatprep.subr.mxu0 %v736
    %833 = vmatpush1.msra.mxu0 %v735
    %834 = vmatprep.subr.mxu0 %v732
    %835 = vmatpush1.msra.mxu0 %v731
    %836 = vmatprep.subr.mxu0 %v728
    %837 = vmatpush1.msra.mxu0 %v727
    %838 = vmatprep.subr.mxu0 %v724
    %839 = vmatpush1.msra.mxu0 %v723
    %840 = vmatprep.subr.mxu0 %v720
    %841 = vmatpush1.msra.mxu0 %v719
    %842 = vmatprep.subr.mxu0 %v716
    %843 = vmatpush1.msra.mxu0 %v715
    %844 = vmatprep.subr.mxu0 %v712
    %845 = vmatpush1.msra.mxu0 %v711
    %846 = vmatprep.subr.mxu0 %v708
    %847 = vmatpush1.msra.mxu0 %v707
    %848 = vmatprep.subr.mxu0 %v704
    %849 = vmatpush1.msra.mxu0 %v703
    %850 = vmatprep.subr.mxu0 %v700
    %851 = vmatpush1.msra.mxu0 %v699
    %852 = vmatprep.subr.mxu0 %v696
    %853 = vmatpush1.msra.mxu0 %v695
    %854 = vmatprep.subr.mxu0 %v692
    %855 = vmatpush1.msra.mxu0 %v691
    %856 = vmatprep.subr.mxu0 0.0
    %857 = vmatpush2.msra.mxu0 0.0
    %858 = vmatprep.subr.mxu0 0.0
    %859 = vmatpush2.msra.mxu0 0.0
    %860 = vmatprep.subr.mxu0 0.0
    %861 = vmatpush2.msra.mxu0 0.0
    %862 = vmatprep.subr.mxu0 0.0
    %863 = vmatpush2.msra.mxu0 0.0
    %864 = vmatprep.subr.mxu0 0.0
    %865 = vmatpush2.msra.mxu0 0.0
    %866 = vmatprep.subr.mxu0 0.0
    %867 = vmatpush2.msra.mxu0 0.0
    %868 = vmatprep.subr.mxu0 0.0
    %869 = vmatpush2.msra.mxu0 0.0
    %870 = vmatprep.subr.mxu0 0.0
    %871 = vmatpush2.msra.mxu0 0.0
    %872 = vmatprep.subr.mxu0 0.0
    %873 = vmatpush2.msra.mxu0 0.0
    %874 = vmatprep.subr.mxu0 0.0
    %875 = vmatpush2.msra.mxu0 0.0
    %876 = vmatprep.subr.mxu0 0.0
    %877 = vmatpush2.msra.mxu0 0.0
    %878 = vmatprep.subr.mxu0 0.0
    %879 = vmatpush2.msra.mxu0 0.0
    %880 = vmatprep.subr.mxu0 0.0
    %881 = vmatpush2.msra.mxu0 0.0
    %882 = vmatprep.subr.mxu0 0.0
    %883 = vmatpush2.msra.mxu0 0.0
    %884 = vmatprep.subr.mxu0 0.0
    %885 = vmatpush2.msra.mxu0 0.0
    %886 = vmatprep.subr.mxu0 0.0
    %887 = vmatpush2.msra.mxu0 0.0
    %888 = vmatprep.mubr.f32.mxu0 0.0
    %889 = vmatmul.mubr.f32.gmra.mxu0 %v687
    %v890 = vpop.f32.mrf.mxu0
    %v891 = vadd.f32 0.0, %v890
    %v892 = vpop.f32.mrf.mxu0
    %v893 = vadd.f32 0.0, %v892
    %894 = vdwg.mxu0
    %v899 = vrot.slane %v820, 7
    %v900 = vrot.slane %v822, 7
    %v901 = vrot.slane %v891, 7
    %v902 = vrot.slane %v893, 7
    %v907 = vadd.f32 %v379, %v899
    %v908 = vadd.f32 %v381, %v900
    %v909 = vadd.f32 %v450, %v901
    %v910 = vadd.f32 %v452, %v902
    %v911 = vxor.u32 %v907, 2147483648
    %v912 = vmul.f32 %v911, 1.442695
    %v913 = vpow.pop %v912
    %v914 = vadd.f32 %v913, 1.0
    %v915 = vrcp.pop %v914
    %v916 = vmul.f32 1.0, %v915
    %v917 = vxor.u32 %v908, 2147483648
    %v918 = vmul.f32 %v917, 1.442695
    %v919 = vpow.pop %v918
    %v920 = vadd.f32 %v919, 1.0
    %v921 = vrcp.pop %v920
    %v922 = vmul.f32 1.0, %v921
    %v923 = vtanh.pop %v909
    %v924 = vxor.u32 %v910, 2147483648
    %v925 = vmul.f32 %v924, 1.442695
    %v926 = vpow.pop %v925
    %v927 = vadd.f32 %v926, 1.0
    %v928 = vrcp.pop %v927
    %v929 = vmul.f32 1.0, %v928
    %v931 = vrot.slane %v685, 7
    %v933 = vmul.f32 %v922, %v931
    %v934 = vmul.f32 %v916, %v923
    %v935 = vadd.f32 %v933, %v934
    %v936 = vtanh.pop %v935
    %v937 = vmul.f32 %v929, %v936
    %938 = vst [vmem:[#allocation2] sm:$0x2] %v937
    %v939 = vld [vmem:[#allocation10] sm:$0xff]
    %v940 = vld [vmem:[#allocation10 + $0x8] sm:$0xff]
    %v941 = vld [vmem:[#allocation10 + $0x10] sm:$0xff]
    %v942 = vld [vmem:[#allocation10 + $0x18] sm:$0xff]
    %v943 = vld [vmem:[#allocation10 + $0x20] sm:$0xff]
    %v944 = vld [vmem:[#allocation10 + $0x28] sm:$0xff]
    %v945 = vld [vmem:[#allocation10 + $0x30] sm:$0xff]
    %v946 = vld [vmem:[#allocation10 + $0x38] sm:$0xff]
    %v947 = vld [vmem:[#allocation10 + $0x40] sm:$0xff]
    %v948 = vld [vmem:[#allocation10 + $0x48] sm:$0xff]
    %v949 = vld [vmem:[#allocation10 + $0x50] sm:$0xff]
    %v950 = vld [vmem:[#allocation10 + $0x58] sm:$0xff]
    %v951 = vld [vmem:[#allocation10 + $0x60] sm:$0xff]
    %v952 = vld [vmem:[#allocation10 + $0x68] sm:$0xff]
    %v953 = vld [vmem:[#allocation10 + $0x70] sm:$0xff]
    %v954 = vld [vmem:[#allocation10 + $0x78] sm:$0xff]
    %v955 = vld [vmem:[#allocation10 + $0x80] sm:$0xff]
    %v956 = vld [vmem:[#allocation10 + $0x88] sm:$0xff]
    %v957 = vld [vmem:[#allocation10 + $0x90] sm:$0xff]
    %v958 = vld [vmem:[#allocation10 + $0x98] sm:$0xff]
    %v959 = vld [vmem:[#allocation10 + $0xa0] sm:$0xff]
    %v960 = vld [vmem:[#allocation10 + $0xa8] sm:$0xff]
    %v961 = vld [vmem:[#allocation10 + $0xb0] sm:$0xff]
    %v962 = vld [vmem:[#allocation10 + $0xb8] sm:$0xff]
    %v963 = vld [vmem:[#allocation10 + $0xc0] sm:$0xff]
    %v964 = vld [vmem:[#allocation10 + $0xc8] sm:$0xff]
    %v965 = vld [vmem:[#allocation10 + $0xd0] sm:$0xff]
    %v966 = vld [vmem:[#allocation10 + $0xd8] sm:$0xff]
    %v967 = vld [vmem:[#allocation10 + $0xe0] sm:$0xff]
    %v968 = vld [vmem:[#allocation10 + $0xe8] sm:$0xff]
    %v969 = vld [vmem:[#allocation10 + $0xf0] sm:$0xff]
    %v970 = vld [vmem:[#allocation10 + $0xf8] sm:$0xff]
    %v971 = vld [vmem:[#allocation10 + $0x100] sm:$0xff]
    %v972 = vld [vmem:[#allocation10 + $0x108] sm:$0xff]
    %v973 = vld [vmem:[#allocation10 + $0x110] sm:$0xff]
    %v974 = vld [vmem:[#allocation10 + $0x118] sm:$0xff]
    %v975 = vld [vmem:[#allocation10 + $0x120] sm:$0xff]
    %v976 = vld [vmem:[#allocation10 + $0x128] sm:$0xff]
    %v977 = vld [vmem:[#allocation10 + $0x130] sm:$0xff]
    %v978 = vld [vmem:[#allocation10 + $0x138] sm:$0xff]
    %v979 = vld [vmem:[#allocation10 + $0x140] sm:$0xff]
    %v980 = vld [vmem:[#allocation10 + $0x148] sm:$0xff]
    %v981 = vld [vmem:[#allocation10 + $0x150] sm:$0xff]
    %v982 = vld [vmem:[#allocation10 + $0x158] sm:$0xff]
    %v983 = vld [vmem:[#allocation10 + $0x160] sm:$0xff]
    %v984 = vld [vmem:[#allocation10 + $0x168] sm:$0xff]
    %v985 = vld [vmem:[#allocation10 + $0x170] sm:$0xff]
    %v986 = vld [vmem:[#allocation10 + $0x178] sm:$0xff]
    %v987 = vld [vmem:[#allocation10 + $0x180] sm:$0xff]
    %v988 = vld [vmem:[#allocation10 + $0x188] sm:$0xff]
    %v989 = vld [vmem:[#allocation10 + $0x190] sm:$0xff]
    %v990 = vld [vmem:[#allocation10 + $0x198] sm:$0xff]
    %v991 = vld [vmem:[#allocation10 + $0x1a0] sm:$0xff]
    %v992 = vld [vmem:[#allocation10 + $0x1a8] sm:$0xff]
    %v993 = vld [vmem:[#allocation10 + $0x1b0] sm:$0xff]
    %v994 = vld [vmem:[#allocation10 + $0x1b8] sm:$0xff]
    %v995 = vld [vmem:[#allocation10 + $0x1c0] sm:$0xff]
    %v996 = vld [vmem:[#allocation10 + $0x1c8] sm:$0xff]
    %v997 = vld [vmem:[#allocation10 + $0x1d0] sm:$0xff]
    %v998 = vld [vmem:[#allocation10 + $0x1d8] sm:$0xff]
    %v999 = vld [vmem:[#allocation10 + $0x1e0] sm:$0xff]
    %v1000 = vld [vmem:[#allocation10 + $0x1e8] sm:$0xff]
    %v1001 = vld [vmem:[#allocation10 + $0x1f0] sm:$0xff]
    %v1002 = vld [vmem:[#allocation10 + $0x1f8] sm:$0xff]
    %v1004 = vrot.slane %v937, 1
    %1006 = vmatprep.subr.mxu0 %v1000
    %1007 = vmatpush1.msra.mxu0 %v999
    %1008 = vmatprep.subr.mxu0 %v996
    %1009 = vmatpush1.msra.mxu0 %v995
    %1010 = vmatprep.subr.mxu0 %v992
    %1011 = vmatpush1.msra.mxu0 %v991
    %1012 = vmatprep.subr.mxu0 %v988
    %1013 = vmatpush1.msra.mxu0 %v987
    %1014 = vmatprep.subr.mxu0 %v984
    %1015 = vmatpush1.msra.mxu0 %v983
    %1016 = vmatprep.subr.mxu0 %v980
    %1017 = vmatpush1.msra.mxu0 %v979
    %1018 = vmatprep.subr.mxu0 %v976
    %1019 = vmatpush1.msra.mxu0 %v975
    %1020 = vmatprep.subr.mxu0 %v972
    %1021 = vmatpush1.msra.mxu0 %v971
    %1022 = vmatprep.subr.mxu0 %v968
    %1023 = vmatpush1.msra.mxu0 %v967
    %1024 = vmatprep.subr.mxu0 %v964
    %1025 = vmatpush1.msra.mxu0 %v963
    %1026 = vmatprep.subr.mxu0 %v960
    %1027 = vmatpush1.msra.mxu0 %v959
    %1028 = vmatprep.subr.mxu0 %v956
    %1029 = vmatpush1.msra.mxu0 %v955
    %1030 = vmatprep.subr.mxu0 %v952
    %1031 = vmatpush1.msra.mxu0 %v951
    %1032 = vmatprep.subr.mxu0 %v948
    %1033 = vmatpush1.msra.mxu0 %v947
    %1034 = vmatprep.subr.mxu0 %v944
    %1035 = vmatpush1.msra.mxu0 %v943
    %1036 = vmatprep.subr.mxu0 %v940
    %1037 = vmatpush1.msra.mxu0 %v939
    %1038 = vmatprep.subr.mxu0 0.0
    %1039 = vmatpush2.msra.mxu0 0.0
    %1040 = vmatprep.subr.mxu0 0.0
    %1041 = vmatpush2.msra.mxu0 0.0
    %1042 = vmatprep.subr.mxu0 0.0
    %1043 = vmatpush2.msra.mxu0 0.0
    %1044 = vmatprep.subr.mxu0 0.0
    %1045 = vmatpush2.msra.mxu0 0.0
    %1046 = vmatprep.subr.mxu0 0.0
    %1047 = vmatpush2.msra.mxu0 0.0
    %1048 = vmatprep.subr.mxu0 0.0
    %1049 = vmatpush2.msra.mxu0 0.0
    %1050 = vmatprep.subr.mxu0 0.0
    %1051 = vmatpush2.msra.mxu0 0.0
    %1052 = vmatprep.subr.mxu0 0.0
    %1053 = vmatpush2.msra.mxu0 0.0
    %1054 = vmatprep.subr.mxu0 0.0
    %1055 = vmatpush2.msra.mxu0 0.0
    %1056 = vmatprep.subr.mxu0 0.0
    %1057 = vmatpush2.msra.mxu0 0.0
    %1058 = vmatprep.subr.mxu0 0.0
    %1059 = vmatpush2.msra.mxu0 0.0
    %1060 = vmatprep.subr.mxu0 0.0
    %1061 = vmatpush2.msra.mxu0 0.0
    %1062 = vmatprep.subr.mxu0 0.0
    %1063 = vmatpush2.msra.mxu0 0.0
    %1064 = vmatprep.subr.mxu0 0.0
    %1065 = vmatpush2.msra.mxu0 0.0
    %1066 = vmatprep.subr.mxu0 0.0
    %1067 = vmatpush2.msra.mxu0 0.0
    %1068 = vmatprep.subr.mxu0 0.0
    %1069 = vmatpush2.msra.mxu0 0.0
    %1070 = vmatprep.mubr.f32.mxu0 0.0
    %1071 = vmatmul.mubr.f32.gmra.mxu0 %v1004
    %v1072 = vpop.f32.mrf.mxu0
    %v1073 = vadd.f32 0.0, %v1072
    %v1074 = vpop.f32.mrf.mxu0
    %v1075 = vadd.f32 0.0, %v1074
    %1076 = vdwg.mxu0
    %1077 = vmatprep.subr.mxu0 %v1002
    %1078 = vmatpush1.msra.mxu0 %v1001
    %1079 = vmatprep.subr.mxu0 %v998
    %1080 = vmatpush1.msra.mxu0 %v997
    %1081 = vmatprep.subr.mxu0 %v994
    %1082 = vmatpush1.msra.mxu0 %v993
    %1083 = vmatprep.subr.mxu0 %v990
    %1084 = vmatpush1.msra.mxu0 %v989
    %1085 = vmatprep.subr.mxu0 %v986
    %1086 = vmatpush1.msra.mxu0 %v985
    %1087 = vmatprep.subr.mxu0 %v982
    %1088 = vmatpush1.msra.mxu0 %v981
    %1089 = vmatprep.subr.mxu0 %v978
    %1090 = vmatpush1.msra.mxu0 %v977
    %1091 = vmatprep.subr.mxu0 %v974
    %1092 = vmatpush1.msra.mxu0 %v973
    %1093 = vmatprep.subr.mxu0 %v970
    %1094 = vmatpush1.msra.mxu0 %v969
    %1095 = vmatprep.subr.mxu0 %v966
    %1096 = vmatpush1.msra.mxu0 %v965
    %1097 = vmatprep.subr.mxu0 %v962
    %1098 = vmatpush1.msra.mxu0 %v961
    %1099 = vmatprep.subr.mxu0 %v958
    %1100 = vmatpush1.msra.mxu0 %v957
    %1101 = vmatprep.subr.mxu0 %v954
    %1102 = vmatpush1.msra.mxu0 %v953
    %1103 = vmatprep.subr.mxu0 %v950
    %1104 = vmatpush1.msra.mxu0 %v949
    %1105 = vmatprep.subr.mxu0 %v946
    %1106 = vmatpush1.msra.mxu0 %v945
    %1107 = vmatprep.subr.mxu0 %v942
    %1108 = vmatpush1.msra.mxu0 %v941
    %1109 = vmatprep.subr.mxu0 0.0
    %1110 = vmatpush2.msra.mxu0 0.0
    %1111 = vmatprep.subr.mxu0 0.0
    %1112 = vmatpush2.msra.mxu0 0.0
    %1113 = vmatprep.subr.mxu0 0.0
    %1114 = vmatpush2.msra.mxu0 0.0
    %1115 = vmatprep.subr.mxu0 0.0
    %1116 = vmatpush2.msra.mxu0 0.0
    %1117 = vmatprep.subr.mxu0 0.0
    %1118 = vmatpush2.msra.mxu0 0.0
    %1119 = vmatprep.subr.mxu0 0.0
    %1120 = vmatpush2.msra.mxu0 0.0
    %1121 = vmatprep.subr.mxu0 0.0
    %1122 = vmatpush2.msra.mxu0 0.0
    %1123 = vmatprep.subr.mxu0 0.0
    %1124 = vmatpush2.msra.mxu0 0.0
    %1125 = vmatprep.subr.mxu0 0.0
    %1126 = vmatpush2.msra.mxu0 0.0
    %1127 = vmatprep.subr.mxu0 0.0
    %1128 = vmatpush2.msra.mxu0 0.0
    %1129 = vmatprep.subr.mxu0 0.0
    %1130 = vmatpush2.msra.mxu0 0.0
    %1131 = vmatprep.subr.mxu0 0.0
    %1132 = vmatpush2.msra.mxu0 0.0
    %1133 = vmatprep.subr.mxu0 0.0
    %1134 = vmatpush2.msra.mxu0 0.0
    %1135 = vmatprep.subr.mxu0 0.0
    %1136 = vmatpush2.msra.mxu0 0.0
    %1137 = vmatprep.subr.mxu0 0.0
    %1138 = vmatpush2.msra.mxu0 0.0
    %1139 = vmatprep.subr.mxu0 0.0
    %1140 = vmatpush2.msra.mxu0 0.0
    %1141 = vmatprep.mubr.f32.mxu0 0.0
    %1142 = vmatmul.mubr.f32.gmra.mxu0 %v1004
    %v1143 = vpop.f32.mrf.mxu0
    %v1144 = vadd.f32 0.0, %v1143
    %v1145 = vpop.f32.mrf.mxu0
    %v1146 = vadd.f32 0.0, %v1145
    %1147 = vdwg.mxu0
    %v1152 = vrot.slane %v1073, 6
    %v1153 = vrot.slane %v1075, 6
    %v1154 = vrot.slane %v1144, 6
    %v1155 = vrot.slane %v1146, 6
    %v1160 = vadd.f32 %v379, %v1152
    %v1161 = vadd.f32 %v381, %v1153
    %v1162 = vadd.f32 %v450, %v1154
    %v1163 = vadd.f32 %v452, %v1155
    %v1164 = vxor.u32 %v1160, 2147483648
    %v1165 = vmul.f32 %v1164, 1.442695
    %v1166 = vpow.pop %v1165
    %v1167 = vadd.f32 %v1166, 1.0
    %v1168 = vrcp.pop %v1167
    %v1169 = vmul.f32 1.0, %v1168
    %v1170 = vxor.u32 %v1161, 2147483648
    %v1171 = vmul.f32 %v1170, 1.442695
    %v1172 = vpow.pop %v1171
    %v1173 = vadd.f32 %v1172, 1.0
    %v1174 = vrcp.pop %v1173
    %v1175 = vmul.f32 1.0, %v1174
    %v1176 = vtanh.pop %v1162
    %v1177 = vxor.u32 %v1163, 2147483648
    %v1178 = vmul.f32 %v1177, 1.442695
    %v1179 = vpow.pop %v1178
    %v1180 = vadd.f32 %v1179, 1.0
    %v1181 = vrcp.pop %v1180
    %v1182 = vmul.f32 1.0, %v1181
    %v1184 = vrot.slane %v935, 7
    %v1186 = vmul.f32 %v1175, %v1184
    %v1187 = vmul.f32 %v1169, %v1176
    %v1188 = vadd.f32 %v1186, %v1187
    %v1189 = vtanh.pop %v1188
    %v1190 = vmul.f32 %v1182, %v1189
    %1191 = vst [vmem:[#allocation2] sm:$0x4] %v1190
    %v1192 = vld [vmem:[#allocation10] sm:$0xff]
    %v1193 = vld [vmem:[#allocation10 + $0x8] sm:$0xff]
    %v1194 = vld [vmem:[#allocation10 + $0x10] sm:$0xff]
    %v1195 = vld [vmem:[#allocation10 + $0x18] sm:$0xff]
    %v1196 = vld [vmem:[#allocation10 + $0x20] sm:$0xff]
    %v1197 = vld [vmem:[#allocation10 + $0x28] sm:$0xff]
    %v1198 = vld [vmem:[#allocation10 + $0x30] sm:$0xff]
    %v1199 = vld [vmem:[#allocation10 + $0x38] sm:$0xff]
    %v1200 = vld [vmem:[#allocation10 + $0x40] sm:$0xff]
    %v1201 = vld [vmem:[#allocation10 + $0x48] sm:$0xff]
    %v1202 = vld [vmem:[#allocation10 + $0x50] sm:$0xff]
    %v1203 = vld [vmem:[#allocation10 + $0x58] sm:$0xff]
    %v1204 = vld [vmem:[#allocation10 + $0x60] sm:$0xff]
    %v1205 = vld [vmem:[#allocation10 + $0x68] sm:$0xff]
    %v1206 = vld [vmem:[#allocation10 + $0x70] sm:$0xff]
    %v1207 = vld [vmem:[#allocation10 + $0x78] sm:$0xff]
    %v1208 = vld [vmem:[#allocation10 + $0x80] sm:$0xff]
    %v1209 = vld [vmem:[#allocation10 + $0x88] sm:$0xff]
    %v1210 = vld [vmem:[#allocation10 + $0x90] sm:$0xff]
    %v1211 = vld [vmem:[#allocation10 + $0x98] sm:$0xff]
    %v1212 = vld [vmem:[#allocation10 + $0xa0] sm:$0xff]
    %v1213 = vld [vmem:[#allocation10 + $0xa8] sm:$0xff]
    %v1214 = vld [vmem:[#allocation10 + $0xb0] sm:$0xff]
    %v1215 = vld [vmem:[#allocation10 + $0xb8] sm:$0xff]
    %v1216 = vld [vmem:[#allocation10 + $0xc0] sm:$0xff]
    %v1217 = vld [vmem:[#allocation10 + $0xc8] sm:$0xff]
    %v1218 = vld [vmem:[#allocation10 + $0xd0] sm:$0xff]
    %v1219 = vld [vmem:[#allocation10 + $0xd8] sm:$0xff]
    %v1220 = vld [vmem:[#allocation10 + $0xe0] sm:$0xff]
    %v1221 = vld [vmem:[#allocation10 + $0xe8] sm:$0xff]
    %v1222 = vld [vmem:[#allocation10 + $0xf0] sm:$0xff]
    %v1223 = vld [vmem:[#allocation10 + $0xf8] sm:$0xff]
    %v1224 = vld [vmem:[#allocation10 + $0x100] sm:$0xff]
    %v1225 = vld [vmem:[#allocation10 + $0x108] sm:$0xff]
    %v1226 = vld [vmem:[#allocation10 + $0x110] sm:$0xff]
    %v1227 = vld [vmem:[#allocation10 + $0x118] sm:$0xff]
    %v1228 = vld [vmem:[#allocation10 + $0x120] sm:$0xff]
    %v1229 = vld [vmem:[#allocation10 + $0x128] sm:$0xff]
    %v1230 = vld [vmem:[#allocation10 + $0x130] sm:$0xff]
    %v1231 = vld [vmem:[#allocation10 + $0x138] sm:$0xff]
    %v1232 = vld [vmem:[#allocation10 + $0x140] sm:$0xff]
    %v1233 = vld [vmem:[#allocation10 + $0x148] sm:$0xff]
    %v1234 = vld [vmem:[#allocation10 + $0x150] sm:$0xff]
    %v1235 = vld [vmem:[#allocation10 + $0x158] sm:$0xff]
    %v1236 = vld [vmem:[#allocation10 + $0x160] sm:$0xff]
    %v1237 = vld [vmem:[#allocation10 + $0x168] sm:$0xff]
    %v1238 = vld [vmem:[#allocation10 + $0x170] sm:$0xff]
    %v1239 = vld [vmem:[#allocation10 + $0x178] sm:$0xff]
    %v1240 = vld [vmem:[#allocation10 + $0x180] sm:$0xff]
    %v1241 = vld [vmem:[#allocation10 + $0x188] sm:$0xff]
    %v1242 = vld [vmem:[#allocation10 + $0x190] sm:$0xff]
    %v1243 = vld [vmem:[#allocation10 + $0x198] sm:$0xff]
    %v1244 = vld [vmem:[#allocation10 + $0x1a0] sm:$0xff]
    %v1245 = vld [vmem:[#allocation10 + $0x1a8] sm:$0xff]
    %v1246 = vld [vmem:[#allocation10 + $0x1b0] sm:$0xff]
    %v1247 = vld [vmem:[#allocation10 + $0x1b8] sm:$0xff]
    %v1248 = vld [vmem:[#allocation10 + $0x1c0] sm:$0xff]
    %v1249 = vld [vmem:[#allocation10 + $0x1c8] sm:$0xff]
    %v1250 = vld [vmem:[#allocation10 + $0x1d0] sm:$0xff]
    %v1251 = vld [vmem:[#allocation10 + $0x1d8] sm:$0xff]
    %v1252 = vld [vmem:[#allocation10 + $0x1e0] sm:$0xff]
    %v1253 = vld [vmem:[#allocation10 + $0x1e8] sm:$0xff]
    %v1254 = vld [vmem:[#allocation10 + $0x1f0] sm:$0xff]
    %v1255 = vld [vmem:[#allocation10 + $0x1f8] sm:$0xff]
    %v1257 = vrot.slane %v1190, 2
    %1259 = vmatprep.subr.mxu0 %v1253
    %1260 = vmatpush1.msra.mxu0 %v1252
    %1261 = vmatprep.subr.mxu0 %v1249
    %1262 = vmatpush1.msra.mxu0 %v1248
    %1263 = vmatprep.subr.mxu0 %v1245
    %1264 = vmatpush1.msra.mxu0 %v1244
    %1265 = vmatprep.subr.mxu0 %v1241
    %1266 = vmatpush1.msra.mxu0 %v1240
    %1267 = vmatprep.subr.mxu0 %v1237
    %1268 = vmatpush1.msra.mxu0 %v1236
    %1269 = vmatprep.subr.mxu0 %v1233
    %1270 = vmatpush1.msra.mxu0 %v1232
    %1271 = vmatprep.subr.mxu0 %v1229
    %1272 = vmatpush1.msra.mxu0 %v1228
    %1273 = vmatprep.subr.mxu0 %v1225
    %1274 = vmatpush1.msra.mxu0 %v1224
    %1275 = vmatprep.subr.mxu0 %v1221
    %1276 = vmatpush1.msra.mxu0 %v1220
    %1277 = vmatprep.subr.mxu0 %v1217
    %1278 = vmatpush1.msra.mxu0 %v1216
    %1279 = vmatprep.subr.mxu0 %v1213
    %1280 = vmatpush1.msra.mxu0 %v1212
    %1281 = vmatprep.subr.mxu0 %v1209
    %1282 = vmatpush1.msra.mxu0 %v1208
    %1283 = vmatprep.subr.mxu0 %v1205
    %1284 = vmatpush1.msra.mxu0 %v1204
    %1285 = vmatprep.subr.mxu0 %v1201
    %1286 = vmatpush1.msra.mxu0 %v1200
    %1287 = vmatprep.subr.mxu0 %v1197
    %1288 = vmatpush1.msra.mxu0 %v1196
    %1289 = vmatprep.subr.mxu0 %v1193
    %1290 = vmatpush1.msra.mxu0 %v1192
    %1291 = vmatprep.subr.mxu0 0.0
    %1292 = vmatpush2.msra.mxu0 0.0
    %1293 = vmatprep.subr.mxu0 0.0
    %1294 = vmatpush2.msra.mxu0 0.0
    %1295 = vmatprep.subr.mxu0 0.0
    %1296 = vmatpush2.msra.mxu0 0.0
    %1297 = vmatprep.subr.mxu0 0.0
    %1298 = vmatpush2.msra.mxu0 0.0
    %1299 = vmatprep.subr.mxu0 0.0
    %1300 = vmatpush2.msra.mxu0 0.0
    %1301 = vmatprep.subr.mxu0 0.0
    %1302 = vmatpush2.msra.mxu0 0.0
    %1303 = vmatprep.subr.mxu0 0.0
    %1304 = vmatpush2.msra.mxu0 0.0
    %1305 = vmatprep.subr.mxu0 0.0
    %1306 = vmatpush2.msra.mxu0 0.0
    %1307 = vmatprep.subr.mxu0 0.0
    %1308 = vmatpush2.msra.mxu0 0.0
    %1309 = vmatprep.subr.mxu0 0.0
    %1310 = vmatpush2.msra.mxu0 0.0
    %1311 = vmatprep.subr.mxu0 0.0
    %1312 = vmatpush2.msra.mxu0 0.0
    %1313 = vmatprep.subr.mxu0 0.0
    %1314 = vmatpush2.msra.mxu0 0.0
    %1315 = vmatprep.subr.mxu0 0.0
    %1316 = vmatpush2.msra.mxu0 0.0
    %1317 = vmatprep.subr.mxu0 0.0
    %1318 = vmatpush2.msra.mxu0 0.0
    %1319 = vmatprep.subr.mxu0 0.0
    %1320 = vmatpush2.msra.mxu0 0.0
    %1321 = vmatprep.subr.mxu0 0.0
    %1322 = vmatpush2.msra.mxu0 0.0
    %1323 = vmatprep.mubr.f32.mxu0 0.0
    %1324 = vmatmul.mubr.f32.gmra.mxu0 %v1257
    %v1325 = vpop.f32.mrf.mxu0
    %v1326 = vadd.f32 0.0, %v1325
    %v1327 = vpop.f32.mrf.mxu0
    %v1328 = vadd.f32 0.0, %v1327
    %1329 = vdwg.mxu0
    %1330 = vmatprep.subr.mxu0 %v1255
    %1331 = vmatpush1.msra.mxu0 %v1254
    %1332 = vmatprep.subr.mxu0 %v1251
    %1333 = vmatpush1.msra.mxu0 %v1250
    %1334 = vmatprep.subr.mxu0 %v1247
    %1335 = vmatpush1.msra.mxu0 %v1246
    %1336 = vmatprep.subr.mxu0 %v1243
    %1337 = vmatpush1.msra.mxu0 %v1242
    %1338 = vmatprep.subr.mxu0 %v1239
    %1339 = vmatpush1.msra.mxu0 %v1238
    %1340 = vmatprep.subr.mxu0 %v1235
    %1341 = vmatpush1.msra.mxu0 %v1234
    %1342 = vmatprep.subr.mxu0 %v1231
    %1343 = vmatpush1.msra.mxu0 %v1230
    %1344 = vmatprep.subr.mxu0 %v1227
    %1345 = vmatpush1.msra.mxu0 %v1226
    %1346 = vmatprep.subr.mxu0 %v1223
    %1347 = vmatpush1.msra.mxu0 %v1222
    %1348 = vmatprep.subr.mxu0 %v1219
    %1349 = vmatpush1.msra.mxu0 %v1218
    %1350 = vmatprep.subr.mxu0 %v1215
    %1351 = vmatpush1.msra.mxu0 %v1214
    %1352 = vmatprep.subr.mxu0 %v1211
    %1353 = vmatpush1.msra.mxu0 %v1210
    %1354 = vmatprep.subr.mxu0 %v1207
    %1355 = vmatpush1.msra.mxu0 %v1206
    %1356 = vmatprep.subr.mxu0 %v1203
    %1357 = vmatpush1.msra.mxu0 %v1202
    %1358 = vmatprep.subr.mxu0 %v1199
    %1359 = vmatpush1.msra.mxu0 %v1198
    %1360 = vmatprep.subr.mxu0 %v1195
    %1361 = vmatpush1.msra.mxu0 %v1194
    %1362 = vmatprep.subr.mxu0 0.0
    %1363 = vmatpush2.msra.mxu0 0.0
    %1364 = vmatprep.subr.mxu0 0.0
    %1365 = vmatpush2.msra.mxu0 0.0
    %1366 = vmatprep.subr.mxu0 0.0
    %1367 = vmatpush2.msra.mxu0 0.0
    %1368 = vmatprep.subr.mxu0 0.0
    %1369 = vmatpush2.msra.mxu0 0.0
    %1370 = vmatprep.subr.mxu0 0.0
    %1371 = vmatpush2.msra.mxu0 0.0
    %1372 = vmatprep.subr.mxu0 0.0
    %1373 = vmatpush2.msra.mxu0 0.0
    %1374 = vmatprep.subr.mxu0 0.0
    %1375 = vmatpush2.msra.mxu0 0.0
    %1376 = vmatprep.subr.mxu0 0.0
    %1377 = vmatpush2.msra.mxu0 0.0
    %1378 = vmatprep.subr.mxu0 0.0
    %1379 = vmatpush2.msra.mxu0 0.0
    %1380 = vmatprep.subr.mxu0 0.0
    %1381 = vmatpush2.msra.mxu0 0.0
    %1382 = vmatprep.subr.mxu0 0.0
    %1383 = vmatpush2.msra.mxu0 0.0
    %1384 = vmatprep.subr.mxu0 0.0
    %1385 = vmatpush2.msra.mxu0 0.0
    %1386 = vmatprep.subr.mxu0 0.0
    %1387 = vmatpush2.msra.mxu0 0.0
    %1388 = vmatprep.subr.mxu0 0.0
    %1389 = vmatpush2.msra.mxu0 0.0
    %1390 = vmatprep.subr.mxu0 0.0
    %1391 = vmatpush2.msra.mxu0 0.0
    %1392 = vmatprep.subr.mxu0 0.0
    %1393 = vmatpush2.msra.mxu0 0.0
    %1394 = vmatprep.mubr.f32.mxu0 0.0
    %1395 = vmatmul.mubr.f32.gmra.mxu0 %v1257
    %v1396 = vpop.f32.mrf.mxu0
    %v1397 = vadd.f32 0.0, %v1396
    %v1398 = vpop.f32.mrf.mxu0
    %v1399 = vadd.f32 0.0, %v1398
    %1400 = vdwg.mxu0
    %v1405 = vrot.slane %v1326, 5
    %v1406 = vrot.slane %v1328, 5
    %v1407 = vrot.slane %v1397, 5
    %v1408 = vrot.slane %v1399, 5
    %v1413 = vadd.f32 %v379, %v1405
    %v1414 = vadd.f32 %v381, %v1406
    %v1415 = vadd.f32 %v450, %v1407
    %v1416 = vadd.f32 %v452, %v1408
    %v1417 = vxor.u32 %v1413, 2147483648
    %v1418 = vmul.f32 %v1417, 1.442695
    %v1419 = vpow.pop %v1418
    %v1420 = vadd.f32 %v1419, 1.0
    %v1421 = vrcp.pop %v1420
    %v1422 = vmul.f32 1.0, %v1421
    %v1423 = vxor.u32 %v1414, 2147483648
    %v1424 = vmul.f32 %v1423, 1.442695
    %v1425 = vpow.pop %v1424
    %v1426 = vadd.f32 %v1425, 1.0
    %v1427 = vrcp.pop %v1426
    %v1428 = vmul.f32 1.0, %v1427
    %v1429 = vtanh.pop %v1415
    %v1430 = vxor.u32 %v1416, 2147483648
    %v1431 = vmul.f32 %v1430, 1.442695
    %v1432 = vpow.pop %v1431
    %v1433 = vadd.f32 %v1432, 1.0
    %v1434 = vrcp.pop %v1433
    %v1435 = vmul.f32 1.0, %v1434
    %v1437 = vrot.slane %v1188, 7
    %v1439 = vmul.f32 %v1428, %v1437
    %v1440 = vmul.f32 %v1422, %v1429
    %v1441 = vadd.f32 %v1439, %v1440
    %v1442 = vtanh.pop %v1441
    %v1443 = vmul.f32 %v1435, %v1442
    %1444 = vst [vmem:[#allocation2] sm:$0x8] %v1443
    %v1445 = vld [vmem:[#allocation10] sm:$0xff]
    %v1446 = vld [vmem:[#allocation10 + $0x8] sm:$0xff]
    %v1447 = vld [vmem:[#allocation10 + $0x10] sm:$0xff]
    %v1448 = vld [vmem:[#allocation10 + $0x18] sm:$0xff]
    %v1449 = vld [vmem:[#allocation10 + $0x20] sm:$0xff]
    %v1450 = vld [vmem:[#allocation10 + $0x28] sm:$0xff]
    %v1451 = vld [vmem:[#allocation10 + $0x30] sm:$0xff]
    %v1452 = vld [vmem:[#allocation10 + $0x38] sm:$0xff]
    %v1453 = vld [vmem:[#allocation10 + $0x40] sm:$0xff]
    %v1454 = vld [vmem:[#allocation10 + $0x48] sm:$0xff]
    %v1455 = vld [vmem:[#allocation10 + $0x50] sm:$0xff]
    %v1456 = vld [vmem:[#allocation10 + $0x58] sm:$0xff]
    %v1457 = vld [vmem:[#allocation10 + $0x60] sm:$0xff]
    %v1458 = vld [vmem:[#allocation10 + $0x68] sm:$0xff]
    %v1459 = vld [vmem:[#allocation10 + $0x70] sm:$0xff]
    %v1460 = vld [vmem:[#allocation10 + $0x78] sm:$0xff]
    %v1461 = vld [vmem:[#allocation10 + $0x80] sm:$0xff]
    %v1462 = vld [vmem:[#allocation10 + $0x88] sm:$0xff]
    %v1463 = vld [vmem:[#allocation10 + $0x90] sm:$0xff]
    %v1464 = vld [vmem:[#allocation10 + $0x98] sm:$0xff]
    %v1465 = vld [vmem:[#allocation10 + $0xa0] sm:$0xff]
    %v1466 = vld [vmem:[#allocation10 + $0xa8] sm:$0xff]
    %v1467 = vld [vmem:[#allocation10 + $0xb0] sm:$0xff]
    %v1468 = vld [vmem:[#allocation10 + $0xb8] sm:$0xff]
    %v1469 = vld [vmem:[#allocation10 + $0xc0] sm:$0xff]
    %v1470 = vld [vmem:[#allocation10 + $0xc8] sm:$0xff]
    %v1471 = vld [vmem:[#allocation10 + $0xd0] sm:$0xff]
    %v1472 = vld [vmem:[#allocation10 + $0xd8] sm:$0xff]
    %v1473 = vld [vmem:[#allocation10 + $0xe0] sm:$0xff]
    %v1474 = vld [vmem:[#allocation10 + $0xe8] sm:$0xff]
    %v1475 = vld [vmem:[#allocation10 + $0xf0] sm:$0xff]
    %v1476 = vld [vmem:[#allocation10 + $0xf8] sm:$0xff]
    %v1477 = vld [vmem:[#allocation10 + $0x100] sm:$0xff]
    %v1478 = vld [vmem:[#allocation10 + $0x108] sm:$0xff]
    %v1479 = vld [vmem:[#allocation10 + $0x110] sm:$0xff]
    %v1480 = vld [vmem:[#allocation10 + $0x118] sm:$0xff]
    %v1481 = vld [vmem:[#allocation10 + $0x120] sm:$0xff]
    %v1482 = vld [vmem:[#allocation10 + $0x128] sm:$0xff]
    %v1483 = vld [vmem:[#allocation10 + $0x130] sm:$0xff]
    %v1484 = vld [vmem:[#allocation10 + $0x138] sm:$0xff]
    %v1485 = vld [vmem:[#allocation10 + $0x140] sm:$0xff]
    %v1486 = vld [vmem:[#allocation10 + $0x148] sm:$0xff]
    %v1487 = vld [vmem:[#allocation10 + $0x150] sm:$0xff]
    %v1488 = vld [vmem:[#allocation10 + $0x158] sm:$0xff]
    %v1489 = vld [vmem:[#allocation10 + $0x160] sm:$0xff]
    %v1490 = vld [vmem:[#allocation10 + $0x168] sm:$0xff]
    %v1491 = vld [vmem:[#allocation10 + $0x170] sm:$0xff]
    %v1492 = vld [vmem:[#allocation10 + $0x178] sm:$0xff]
    %v1493 = vld [vmem:[#allocation10 + $0x180] sm:$0xff]
    %v1494 = vld [vmem:[#allocation10 + $0x188] sm:$0xff]
    %v1495 = vld [vmem:[#allocation10 + $0x190] sm:$0xff]
    %v1496 = vld [vmem:[#allocation10 + $0x198] sm:$0xff]
    %v1497 = vld [vmem:[#allocation10 + $0x1a0] sm:$0xff]
    %v1498 = vld [vmem:[#allocation10 + $0x1a8] sm:$0xff]
    %v1499 = vld [vmem:[#allocation10 + $0x1b0] sm:$0xff]
    %v1500 = vld [vmem:[#allocation10 + $0x1b8] sm:$0xff]
    %v1501 = vld [vmem:[#allocation10 + $0x1c0] sm:$0xff]
    %v1502 = vld [vmem:[#allocation10 + $0x1c8] sm:$0xff]
    %v1503 = vld [vmem:[#allocation10 + $0x1d0] sm:$0xff]
    %v1504 = vld [vmem:[#allocation10 + $0x1d8] sm:$0xff]
    %v1505 = vld [vmem:[#allocation10 + $0x1e0] sm:$0xff]
    %v1506 = vld [vmem:[#allocation10 + $0x1e8] sm:$0xff]
    %v1507 = vld [vmem:[#allocation10 + $0x1f0] sm:$0xff]
    %v1508 = vld [vmem:[#allocation10 + $0x1f8] sm:$0xff]
    %v1510 = vrot.slane %v1443, 3
    %1512 = vmatprep.subr.mxu0 %v1506
    %1513 = vmatpush1.msra.mxu0 %v1505
    %1514 = vmatprep.subr.mxu0 %v1502
    %1515 = vmatpush1.msra.mxu0 %v1501
    %1516 = vmatprep.subr.mxu0 %v1498
    %1517 = vmatpush1.msra.mxu0 %v1497
    %1518 = vmatprep.subr.mxu0 %v1494
    %1519 = vmatpush1.msra.mxu0 %v1493
    %1520 = vmatprep.subr.mxu0 %v1490
    %1521 = vmatpush1.msra.mxu0 %v1489
    %1522 = vmatprep.subr.mxu0 %v1486
    %1523 = vmatpush1.msra.mxu0 %v1485
    %1524 = vmatprep.subr.mxu0 %v1482
    %1525 = vmatpush1.msra.mxu0 %v1481
    %1526 = vmatprep.subr.mxu0 %v1478
    %1527 = vmatpush1.msra.mxu0 %v1477
    %1528 = vmatprep.subr.mxu0 %v1474
    %1529 = vmatpush1.msra.mxu0 %v1473
    %1530 = vmatprep.subr.mxu0 %v1470
    %1531 = vmatpush1.msra.mxu0 %v1469
    %1532 = vmatprep.subr.mxu0 %v1466
    %1533 = vmatpush1.msra.mxu0 %v1465
    %1534 = vmatprep.subr.mxu0 %v1462
    %1535 = vmatpush1.msra.mxu0 %v1461
    %1536 = vmatprep.subr.mxu0 %v1458
    %1537 = vmatpush1.msra.mxu0 %v1457
    %1538 = vmatprep.subr.mxu0 %v1454
    %1539 = vmatpush1.msra.mxu0 %v1453
    %1540 = vmatprep.subr.mxu0 %v1450
    %1541 = vmatpush1.msra.mxu0 %v1449
    %1542 = vmatprep.subr.mxu0 %v1446
    %1543 = vmatpush1.msra.mxu0 %v1445
    %1544 = vmatprep.subr.mxu0 0.0
    %1545 = vmatpush2.msra.mxu0 0.0
    %1546 = vmatprep.subr.mxu0 0.0
    %1547 = vmatpush2.msra.mxu0 0.0
    %1548 = vmatprep.subr.mxu0 0.0
    %1549 = vmatpush2.msra.mxu0 0.0
    %1550 = vmatprep.subr.mxu0 0.0
    %1551 = vmatpush2.msra.mxu0 0.0
    %1552 = vmatprep.subr.mxu0 0.0
    %1553 = vmatpush2.msra.mxu0 0.0
    %1554 = vmatprep.subr.mxu0 0.0
    %1555 = vmatpush2.msra.mxu0 0.0
    %1556 = vmatprep.subr.mxu0 0.0
    %1557 = vmatpush2.msra.mxu0 0.0
    %1558 = vmatprep.subr.mxu0 0.0
    %1559 = vmatpush2.msra.mxu0 0.0
    %1560 = vmatprep.subr.mxu0 0.0
    %1561 = vmatpush2.msra.mxu0 0.0
    %1562 = vmatprep.subr.mxu0 0.0
    %1563 = vmatpush2.msra.mxu0 0.0
    %1564 = vmatprep.subr.mxu0 0.0
    %1565 = vmatpush2.msra.mxu0 0.0
    %1566 = vmatprep.subr.mxu0 0.0
    %1567 = vmatpush2.msra.mxu0 0.0
    %1568 = vmatprep.subr.mxu0 0.0
    %1569 = vmatpush2.msra.mxu0 0.0
    %1570 = vmatprep.subr.mxu0 0.0
    %1571 = vmatpush2.msra.mxu0 0.0
    %1572 = vmatprep.subr.mxu0 0.0
    %1573 = vmatpush2.msra.mxu0 0.0
    %1574 = vmatprep.subr.mxu0 0.0
    %1575 = vmatpush2.msra.mxu0 0.0
    %1576 = vmatprep.mubr.f32.mxu0 0.0
    %1577 = vmatmul.mubr.f32.gmra.mxu0 %v1510
    %v1578 = vpop.f32.mrf.mxu0
    %v1579 = vadd.f32 0.0, %v1578
    %v1580 = vpop.f32.mrf.mxu0
    %v1581 = vadd.f32 0.0, %v1580
    %1582 = vdwg.mxu0
    %1583 = vmatprep.subr.mxu0 %v1508
    %1584 = vmatpush1.msra.mxu0 %v1507
    %1585 = vmatprep.subr.mxu0 %v1504
    %1586 = vmatpush1.msra.mxu0 %v1503
    %1587 = vmatprep.subr.mxu0 %v1500
    %1588 = vmatpush1.msra.mxu0 %v1499
    %1589 = vmatprep.subr.mxu0 %v1496
    %1590 = vmatpush1.msra.mxu0 %v1495
    %1591 = vmatprep.subr.mxu0 %v1492
    %1592 = vmatpush1.msra.mxu0 %v1491
    %1593 = vmatprep.subr.mxu0 %v1488
    %1594 = vmatpush1.msra.mxu0 %v1487
    %1595 = vmatprep.subr.mxu0 %v1484
    %1596 = vmatpush1.msra.mxu0 %v1483
    %1597 = vmatprep.subr.mxu0 %v1480
    %1598 = vmatpush1.msra.mxu0 %v1479
    %1599 = vmatprep.subr.mxu0 %v1476
    %1600 = vmatpush1.msra.mxu0 %v1475
    %1601 = vmatprep.subr.mxu0 %v1472
    %1602 = vmatpush1.msra.mxu0 %v1471
    %1603 = vmatprep.subr.mxu0 %v1468
    %1604 = vmatpush1.msra.mxu0 %v1467
    %1605 = vmatprep.subr.mxu0 %v1464
    %1606 = vmatpush1.msra.mxu0 %v1463
    %1607 = vmatprep.subr.mxu0 %v1460
    %1608 = vmatpush1.msra.mxu0 %v1459
    %1609 = vmatprep.subr.mxu0 %v1456
    %1610 = vmatpush1.msra.mxu0 %v1455
    %1611 = vmatprep.subr.mxu0 %v1452
    %1612 = vmatpush1.msra.mxu0 %v1451
    %1613 = vmatprep.subr.mxu0 %v1448
    %1614 = vmatpush1.msra.mxu0 %v1447
    %1615 = vmatprep.subr.mxu0 0.0
    %1616 = vmatpush2.msra.mxu0 0.0
    %1617 = vmatprep.subr.mxu0 0.0
    %1618 = vmatpush2.msra.mxu0 0.0
    %1619 = vmatprep.subr.mxu0 0.0
    %1620 = vmatpush2.msra.mxu0 0.0
    %1621 = vmatprep.subr.mxu0 0.0
    %1622 = vmatpush2.msra.mxu0 0.0
    %1623 = vmatprep.subr.mxu0 0.0
    %1624 = vmatpush2.msra.mxu0 0.0
    %1625 = vmatprep.subr.mxu0 0.0
    %1626 = vmatpush2.msra.mxu0 0.0
    %1627 = vmatprep.subr.mxu0 0.0
    %1628 = vmatpush2.msra.mxu0 0.0
    %1629 = vmatprep.subr.mxu0 0.0
    %1630 = vmatpush2.msra.mxu0 0.0
    %1631 = vmatprep.subr.mxu0 0.0
    %1632 = vmatpush2.msra.mxu0 0.0
    %1633 = vmatprep.subr.mxu0 0.0
    %1634 = vmatpush2.msra.mxu0 0.0
    %1635 = vmatprep.subr.mxu0 0.0
    %1636 = vmatpush2.msra.mxu0 0.0
    %1637 = vmatprep.subr.mxu0 0.0
    %1638 = vmatpush2.msra.mxu0 0.0
    %1639 = vmatprep.subr.mxu0 0.0
    %1640 = vmatpush2.msra.mxu0 0.0
    %1641 = vmatprep.subr.mxu0 0.0
    %1642 = vmatpush2.msra.mxu0 0.0
    %1643 = vmatprep.subr.mxu0 0.0
    %1644 = vmatpush2.msra.mxu0 0.0
    %1645 = vmatprep.subr.mxu0 0.0
    %1646 = vmatpush2.msra.mxu0 0.0
    %1647 = vmatprep.mubr.f32.mxu0 0.0
    %1648 = vmatmul.mubr.f32.gmra.mxu0 %v1510
    %v1649 = vpop.f32.mrf.mxu0
    %v1650 = vadd.f32 0.0, %v1649
    %v1651 = vpop.f32.mrf.mxu0
    %v1652 = vadd.f32 0.0, %v1651
    %1653 = vdwg.mxu0
    %v1658 = vrot.slane %v1579, 4
    %v1659 = vrot.slane %v1581, 4
    %v1660 = vrot.slane %v1650, 4
    %v1661 = vrot.slane %v1652, 4
    %v1666 = vadd.f32 %v379, %v1658
    %v1667 = vadd.f32 %v381, %v1659
    %v1668 = vadd.f32 %v450, %v1660
    %v1669 = vadd.f32 %v452, %v1661
    %v1670 = vxor.u32 %v1666, 2147483648
    %v1671 = vmul.f32 %v1670, 1.442695
    %v1672 = vpow.pop %v1671
    %v1673 = vadd.f32 %v1672, 1.0
    %v1674 = vrcp.pop %v1673
    %v1675 = vmul.f32 1.0, %v1674
    %v1676 = vxor.u32 %v1667, 2147483648
    %v1677 = vmul.f32 %v1676, 1.442695
    %v1678 = vpow.pop %v1677
    %v1679 = vadd.f32 %v1678, 1.0
    %v1680 = vrcp.pop %v1679
    %v1681 = vmul.f32 1.0, %v1680
    %v1682 = vtanh.pop %v1668
    %v1683 = vxor.u32 %v1669, 2147483648
    %v1684 = vmul.f32 %v1683, 1.442695
    %v1685 = vpow.pop %v1684
    %v1686 = vadd.f32 %v1685, 1.0
    %v1687 = vrcp.pop %v1686
    %v1688 = vmul.f32 1.0, %v1687
    %v1690 = vrot.slane %v1441, 7
    %v1692 = vmul.f32 %v1681, %v1690
    %v1693 = vmul.f32 %v1675, %v1682
    %v1694 = vadd.f32 %v1692, %v1693
    %v1695 = vtanh.pop %v1694
    %v1696 = vmul.f32 %v1688, %v1695
    %1697 = vst [vmem:[#allocation2] sm:$0x10] %v1696
    %v1698 = vld [vmem:[#allocation10] sm:$0xff]
    %v1699 = vld [vmem:[#allocation10 + $0x8] sm:$0xff]
    %v1700 = vld [vmem:[#allocation10 + $0x10] sm:$0xff]
    %v1701 = vld [vmem:[#allocation10 + $0x18] sm:$0xff]
    %v1702 = vld [vmem:[#allocation10 + $0x20] sm:$0xff]
    %v1703 = vld [vmem:[#allocation10 + $0x28] sm:$0xff]
    %v1704 = vld [vmem:[#allocation10 + $0x30] sm:$0xff]
    %v1705 = vld [vmem:[#allocation10 + $0x38] sm:$0xff]
    %v1706 = vld [vmem:[#allocation10 + $0x40] sm:$0xff]
    %v1707 = vld [vmem:[#allocation10 + $0x48] sm:$0xff]
    %v1708 = vld [vmem:[#allocation10 + $0x50] sm:$0xff]
    %v1709 = vld [vmem:[#allocation10 + $0x58] sm:$0xff]
    %v1710 = vld [vmem:[#allocation10 + $0x60] sm:$0xff]
    %v1711 = vld [vmem:[#allocation10 + $0x68] sm:$0xff]
    %v1712 = vld [vmem:[#allocation10 + $0x70] sm:$0xff]
    %v1713 = vld [vmem:[#allocation10 + $0x78] sm:$0xff]
    %v1714 = vld [vmem:[#allocation10 + $0x80] sm:$0xff]
    %v1715 = vld [vmem:[#allocation10 + $0x88] sm:$0xff]
    %v1716 = vld [vmem:[#allocation10 + $0x90] sm:$0xff]
    %v1717 = vld [vmem:[#allocation10 + $0x98] sm:$0xff]
    %v1718 = vld [vmem:[#allocation10 + $0xa0] sm:$0xff]
    %v1719 = vld [vmem:[#allocation10 + $0xa8] sm:$0xff]
    %v1720 = vld [vmem:[#allocation10 + $0xb0] sm:$0xff]
    %v1721 = vld [vmem:[#allocation10 + $0xb8] sm:$0xff]
    %v1722 = vld [vmem:[#allocation10 + $0xc0] sm:$0xff]
    %v1723 = vld [vmem:[#allocation10 + $0xc8] sm:$0xff]
    %v1724 = vld [vmem:[#allocation10 + $0xd0] sm:$0xff]
    %v1725 = vld [vmem:[#allocation10 + $0xd8] sm:$0xff]
    %v1726 = vld [vmem:[#allocation10 + $0xe0] sm:$0xff]
    %v1727 = vld [vmem:[#allocation10 + $0xe8] sm:$0xff]
    %v1728 = vld [vmem:[#allocation10 + $0xf0] sm:$0xff]
    %v1729 = vld [vmem:[#allocation10 + $0xf8] sm:$0xff]
    %v1730 = vld [vmem:[#allocation10 + $0x100] sm:$0xff]
    %v1731 = vld [vmem:[#allocation10 + $0x108] sm:$0xff]
    %v1732 = vld [vmem:[#allocation10 + $0x110] sm:$0xff]
    %v1733 = vld [vmem:[#allocation10 + $0x118] sm:$0xff]
    %v1734 = vld [vmem:[#allocation10 + $0x120] sm:$0xff]
    %v1735 = vld [vmem:[#allocation10 + $0x128] sm:$0xff]
    %v1736 = vld [vmem:[#allocation10 + $0x130] sm:$0xff]
    %v1737 = vld [vmem:[#allocation10 + $0x138] sm:$0xff]
    %v1738 = vld [vmem:[#allocation10 + $0x140] sm:$0xff]
    %v1739 = vld [vmem:[#allocation10 + $0x148] sm:$0xff]
    %v1740 = vld [vmem:[#allocation10 + $0x150] sm:$0xff]
    %v1741 = vld [vmem:[#allocation10 + $0x158] sm:$0xff]
    %v1742 = vld [vmem:[#allocation10 + $0x160] sm:$0xff]
    %v1743 = vld [vmem:[#allocation10 + $0x168] sm:$0xff]
    %v1744 = vld [vmem:[#allocation10 + $0x170] sm:$0xff]
    %v1745 = vld [vmem:[#allocation10 + $0x178] sm:$0xff]
    %v1746 = vld [vmem:[#allocation10 + $0x180] sm:$0xff]
    %v1747 = vld [vmem:[#allocation10 + $0x188] sm:$0xff]
    %v1748 = vld [vmem:[#allocation10 + $0x190] sm:$0xff]
    %v1749 = vld [vmem:[#allocation10 + $0x198] sm:$0xff]
    %v1750 = vld [vmem:[#allocation10 + $0x1a0] sm:$0xff]
    %v1751 = vld [vmem:[#allocation10 + $0x1a8] sm:$0xff]
    %v1752 = vld [vmem:[#allocation10 + $0x1b0] sm:$0xff]
    %v1753 = vld [vmem:[#allocation10 + $0x1b8] sm:$0xff]
    %v1754 = vld [vmem:[#allocation10 + $0x1c0] sm:$0xff]
    %v1755 = vld [vmem:[#allocation10 + $0x1c8] sm:$0xff]
    %v1756 = vld [vmem:[#allocation10 + $0x1d0] sm:$0xff]
    %v1757 = vld [vmem:[#allocation10 + $0x1d8] sm:$0xff]
    %v1758 = vld [vmem:[#allocation10 + $0x1e0] sm:$0xff]
    %v1759 = vld [vmem:[#allocation10 + $0x1e8] sm:$0xff]
    %v1760 = vld [vmem:[#allocation10 + $0x1f0] sm:$0xff]
    %v1761 = vld [vmem:[#allocation10 + $0x1f8] sm:$0xff]
    %v1763 = vrot.slane %v1696, 4
    %1765 = vmatprep.subr.mxu0 %v1759
    %1766 = vmatpush1.msra.mxu0 %v1758
    %1767 = vmatprep.subr.mxu0 %v1755
    %1768 = vmatpush1.msra.mxu0 %v1754
    %1769 = vmatprep.subr.mxu0 %v1751
    %1770 = vmatpush1.msra.mxu0 %v1750
    %1771 = vmatprep.subr.mxu0 %v1747
    %1772 = vmatpush1.msra.mxu0 %v1746
    %1773 = vmatprep.subr.mxu0 %v1743
    %1774 = vmatpush1.msra.mxu0 %v1742
    %1775 = vmatprep.subr.mxu0 %v1739
    %1776 = vmatpush1.msra.mxu0 %v1738
    %1777 = vmatprep.subr.mxu0 %v1735
    %1778 = vmatpush1.msra.mxu0 %v1734
    %1779 = vmatprep.subr.mxu0 %v1731
    %1780 = vmatpush1.msra.mxu0 %v1730
    %1781 = vmatprep.subr.mxu0 %v1727
    %1782 = vmatpush1.msra.mxu0 %v1726
    %1783 = vmatprep.subr.mxu0 %v1723
    %1784 = vmatpush1.msra.mxu0 %v1722
    %1785 = vmatprep.subr.mxu0 %v1719
    %1786 = vmatpush1.msra.mxu0 %v1718
    %1787 = vmatprep.subr.mxu0 %v1715
    %1788 = vmatpush1.msra.mxu0 %v1714
    %1789 = vmatprep.subr.mxu0 %v1711
    %1790 = vmatpush1.msra.mxu0 %v1710
    %1791 = vmatprep.subr.mxu0 %v1707
    %1792 = vmatpush1.msra.mxu0 %v1706
    %1793 = vmatprep.subr.mxu0 %v1703
    %1794 = vmatpush1.msra.mxu0 %v1702
    %1795 = vmatprep.subr.mxu0 %v1699
    %1796 = vmatpush1.msra.mxu0 %v1698
    %1797 = vmatprep.subr.mxu0 0.0
    %1798 = vmatpush2.msra.mxu0 0.0
    %1799 = vmatprep.subr.mxu0 0.0
    %1800 = vmatpush2.msra.mxu0 0.0
    %1801 = vmatprep.subr.mxu0 0.0
    %1802 = vmatpush2.msra.mxu0 0.0
    %1803 = vmatprep.subr.mxu0 0.0
    %1804 = vmatpush2.msra.mxu0 0.0
    %1805 = vmatprep.subr.mxu0 0.0
    %1806 = vmatpush2.msra.mxu0 0.0
    %1807 = vmatprep.subr.mxu0 0.0
    %1808 = vmatpush2.msra.mxu0 0.0
    %1809 = vmatprep.subr.mxu0 0.0
    %1810 = vmatpush2.msra.mxu0 0.0
    %1811 = vmatprep.subr.mxu0 0.0
    %1812 = vmatpush2.msra.mxu0 0.0
    %1813 = vmatprep.subr.mxu0 0.0
    %1814 = vmatpush2.msra.mxu0 0.0
    %1815 = vmatprep.subr.mxu0 0.0
    %1816 = vmatpush2.msra.mxu0 0.0
    %1817 = vmatprep.subr.mxu0 0.0
    %1818 = vmatpush2.msra.mxu0 0.0
    %1819 = vmatprep.subr.mxu0 0.0
    %1820 = vmatpush2.msra.mxu0 0.0
    %1821 = vmatprep.subr.mxu0 0.0
    %1822 = vmatpush2.msra.mxu0 0.0
    %1823 = vmatprep.subr.mxu0 0.0
    %1824 = vmatpush2.msra.mxu0 0.0
    %1825 = vmatprep.subr.mxu0 0.0
    %1826 = vmatpush2.msra.mxu0 0.0
    %1827 = vmatprep.subr.mxu0 0.0
    %1828 = vmatpush2.msra.mxu0 0.0
    %1829 = vmatprep.mubr.f32.mxu0 0.0
    %1830 = vmatmul.mubr.f32.gmra.mxu0 %v1763
    %v1831 = vpop.f32.mrf.mxu0
    %v1832 = vadd.f32 0.0, %v1831
    %v1833 = vpop.f32.mrf.mxu0
    %v1834 = vadd.f32 0.0, %v1833
    %1835 = vdwg.mxu0
    %1836 = vmatprep.subr.mxu0 %v1761
    %1837 = vmatpush1.msra.mxu0 %v1760
    %1838 = vmatprep.subr.mxu0 %v1757
    %1839 = vmatpush1.msra.mxu0 %v1756
    %1840 = vmatprep.subr.mxu0 %v1753
    %1841 = vmatpush1.msra.mxu0 %v1752
    %1842 = vmatprep.subr.mxu0 %v1749
    %1843 = vmatpush1.msra.mxu0 %v1748
    %1844 = vmatprep.subr.mxu0 %v1745
    %1845 = vmatpush1.msra.mxu0 %v1744
    %1846 = vmatprep.subr.mxu0 %v1741
    %1847 = vmatpush1.msra.mxu0 %v1740
    %1848 = vmatprep.subr.mxu0 %v1737
    %1849 = vmatpush1.msra.mxu0 %v1736
    %1850 = vmatprep.subr.mxu0 %v1733
    %1851 = vmatpush1.msra.mxu0 %v1732
    %1852 = vmatprep.subr.mxu0 %v1729
    %1853 = vmatpush1.msra.mxu0 %v1728
    %1854 = vmatprep.subr.mxu0 %v1725
    %1855 = vmatpush1.msra.mxu0 %v1724
    %1856 = vmatprep.subr.mxu0 %v1721
    %1857 = vmatpush1.msra.mxu0 %v1720
    %1858 = vmatprep.subr.mxu0 %v1717
    %1859 = vmatpush1.msra.mxu0 %v1716
    %1860 = vmatprep.subr.mxu0 %v1713
    %1861 = vmatpush1.msra.mxu0 %v1712
    %1862 = vmatprep.subr.mxu0 %v1709
    %1863 = vmatpush1.msra.mxu0 %v1708
    %1864 = vmatprep.subr.mxu0 %v1705
    %1865 = vmatpush1.msra.mxu0 %v1704
    %1866 = vmatprep.subr.mxu0 %v1701
    %1867 = vmatpush1.msra.mxu0 %v1700
    %1868 = vmatprep.subr.mxu0 0.0
    %1869 = vmatpush2.msra.mxu0 0.0
    %1870 = vmatprep.subr.mxu0 0.0
    %1871 = vmatpush2.msra.mxu0 0.0
    %1872 = vmatprep.subr.mxu0 0.0
    %1873 = vmatpush2.msra.mxu0 0.0
    %1874 = vmatprep.subr.mxu0 0.0
    %1875 = vmatpush2.msra.mxu0 0.0
    %1876 = vmatprep.subr.mxu0 0.0
    %1877 = vmatpush2.msra.mxu0 0.0
    %1878 = vmatprep.subr.mxu0 0.0
    %1879 = vmatpush2.msra.mxu0 0.0
    %1880 = vmatprep.subr.mxu0 0.0
    %1881 = vmatpush2.msra.mxu0 0.0
    %1882 = vmatprep.subr.mxu0 0.0
    %1883 = vmatpush2.msra.mxu0 0.0
    %1884 = vmatprep.subr.mxu0 0.0
    %1885 = vmatpush2.msra.mxu0 0.0
    %1886 = vmatprep.subr.mxu0 0.0
    %1887 = vmatpush2.msra.mxu0 0.0
    %1888 = vmatprep.subr.mxu0 0.0
    %1889 = vmatpush2.msra.mxu0 0.0
    %1890 = vmatprep.subr.mxu0 0.0
    %1891 = vmatpush2.msra.mxu0 0.0
    %1892 = vmatprep.subr.mxu0 0.0
    %1893 = vmatpush2.msra.mxu0 0.0
    %1894 = vmatprep.subr.mxu0 0.0
    %1895 = vmatpush2.msra.mxu0 0.0
    %1896 = vmatprep.subr.mxu0 0.0
    %1897 = vmatpush2.msra.mxu0 0.0
    %1898 = vmatprep.subr.mxu0 0.0
    %1899 = vmatpush2.msra.mxu0 0.0
    %1900 = vmatprep.mubr.f32.mxu0 0.0
    %1901 = vmatmul.mubr.f32.gmra.mxu0 %v1763
    %v1902 = vpop.f32.mrf.mxu0
    %v1903 = vadd.f32 0.0, %v1902
    %v1904 = vpop.f32.mrf.mxu0
    %v1905 = vadd.f32 0.0, %v1904
    %1906 = vdwg.mxu0
    %v1911 = vrot.slane %v1832, 3
    %v1912 = vrot.slane %v1834, 3
    %v1913 = vrot.slane %v1903, 3
    %v1914 = vrot.slane %v1905, 3
    %v1919 = vadd.f32 %v379, %v1911
    %v1920 = vadd.f32 %v381, %v1912
    %v1921 = vadd.f32 %v450, %v1913
    %v1922 = vadd.f32 %v452, %v1914
    %v1923 = vxor.u32 %v1919, 2147483648
    %v1924 = vmul.f32 %v1923, 1.442695
    %v1925 = vpow.pop %v1924
    %v1926 = vadd.f32 %v1925, 1.0
    %v1927 = vrcp.pop %v1926
    %v1928 = vmul.f32 1.0, %v1927
    %v1929 = vxor.u32 %v1920, 2147483648
    %v1930 = vmul.f32 %v1929, 1.442695
    %v1931 = vpow.pop %v1930
    %v1932 = vadd.f32 %v1931, 1.0
    %v1933 = vrcp.pop %v1932
    %v1934 = vmul.f32 1.0, %v1933
    %v1935 = vtanh.pop %v1921
    %v1936 = vxor.u32 %v1922, 2147483648
    %v1937 = vmul.f32 %v1936, 1.442695
    %v1938 = vpow.pop %v1937
    %v1939 = vadd.f32 %v1938, 1.0
    %v1940 = vrcp.pop %v1939
    %v1941 = vmul.f32 1.0, %v1940
    %v1943 = vrot.slane %v1694, 7
    %v1945 = vmul.f32 %v1934, %v1943
    %v1946 = vmul.f32 %v1928, %v1935
    %v1947 = vadd.f32 %v1945, %v1946
    %v1948 = vtanh.pop %v1947
    %v1949 = vmul.f32 %v1941, %v1948
    %1950 = vst [vmem:[#allocation2] sm:$0x20] %v1949
    %v1951 = vld [vmem:[#allocation10] sm:$0xff]
    %v1952 = vld [vmem:[#allocation10 + $0x8] sm:$0xff]
    %v1953 = vld [vmem:[#allocation10 + $0x10] sm:$0xff]
    %v1954 = vld [vmem:[#allocation10 + $0x18] sm:$0xff]
    %v1955 = vld [vmem:[#allocation10 + $0x20] sm:$0xff]
    %v1956 = vld [vmem:[#allocation10 + $0x28] sm:$0xff]
    %v1957 = vld [vmem:[#allocation10 + $0x30] sm:$0xff]
    %v1958 = vld [vmem:[#allocation10 + $0x38] sm:$0xff]
    %v1959 = vld [vmem:[#allocation10 + $0x40] sm:$0xff]
    %v1960 = vld [vmem:[#allocation10 + $0x48] sm:$0xff]
    %v1961 = vld [vmem:[#allocation10 + $0x50] sm:$0xff]
    %v1962 = vld [vmem:[#allocation10 + $0x58] sm:$0xff]
    %v1963 = vld [vmem:[#allocation10 + $0x60] sm:$0xff]
    %v1964 = vld [vmem:[#allocation10 + $0x68] sm:$0xff]
    %v1965 = vld [vmem:[#allocation10 + $0x70] sm:$0xff]
    %v1966 = vld [vmem:[#allocation10 + $0x78] sm:$0xff]
    %v1967 = vld [vmem:[#allocation10 + $0x80] sm:$0xff]
    %v1968 = vld [vmem:[#allocation10 + $0x88] sm:$0xff]
    %v1969 = vld [vmem:[#allocation10 + $0x90] sm:$0xff]
    %v1970 = vld [vmem:[#allocation10 + $0x98] sm:$0xff]
    %v1971 = vld [vmem:[#allocation10 + $0xa0] sm:$0xff]
    %v1972 = vld [vmem:[#allocation10 + $0xa8] sm:$0xff]
    %v1973 = vld [vmem:[#allocation10 + $0xb0] sm:$0xff]
    %v1974 = vld [vmem:[#allocation10 + $0xb8] sm:$0xff]
    %v1975 = vld [vmem:[#allocation10 + $0xc0] sm:$0xff]
    %v1976 = vld [vmem:[#allocation10 + $0xc8] sm:$0xff]
    %v1977 = vld [vmem:[#allocation10 + $0xd0] sm:$0xff]
    %v1978 = vld [vmem:[#allocation10 + $0xd8] sm:$0xff]
    %v1979 = vld [vmem:[#allocation10 + $0xe0] sm:$0xff]
    %v1980 = vld [vmem:[#allocation10 + $0xe8] sm:$0xff]
    %v1981 = vld [vmem:[#allocation10 + $0xf0] sm:$0xff]
    %v1982 = vld [vmem:[#allocation10 + $0xf8] sm:$0xff]
    %v1983 = vld [vmem:[#allocation10 + $0x100] sm:$0xff]
    %v1984 = vld [vmem:[#allocation10 + $0x108] sm:$0xff]
    %v1985 = vld [vmem:[#allocation10 + $0x110] sm:$0xff]
    %v1986 = vld [vmem:[#allocation10 + $0x118] sm:$0xff]
    %v1987 = vld [vmem:[#allocation10 + $0x120] sm:$0xff]
    %v1988 = vld [vmem:[#allocation10 + $0x128] sm:$0xff]
    %v1989 = vld [vmem:[#allocation10 + $0x130] sm:$0xff]
    %v1990 = vld [vmem:[#allocation10 + $0x138] sm:$0xff]
    %v1991 = vld [vmem:[#allocation10 + $0x140] sm:$0xff]
    %v1992 = vld [vmem:[#allocation10 + $0x148] sm:$0xff]
    %v1993 = vld [vmem:[#allocation10 + $0x150] sm:$0xff]
    %v1994 = vld [vmem:[#allocation10 + $0x158] sm:$0xff]
    %v1995 = vld [vmem:[#allocation10 + $0x160] sm:$0xff]
    %v1996 = vld [vmem:[#allocation10 + $0x168] sm:$0xff]
    %v1997 = vld [vmem:[#allocation10 + $0x170] sm:$0xff]
    %v1998 = vld [vmem:[#allocation10 + $0x178] sm:$0xff]
    %v1999 = vld [vmem:[#allocation10 + $0x180] sm:$0xff]
    %v2000 = vld [vmem:[#allocation10 + $0x188] sm:$0xff]
    %v2001 = vld [vmem:[#allocation10 + $0x190] sm:$0xff]
    %v2002 = vld [vmem:[#allocation10 + $0x198] sm:$0xff]
    %v2003 = vld [vmem:[#allocation10 + $0x1a0] sm:$0xff]
    %v2004 = vld [vmem:[#allocation10 + $0x1a8] sm:$0xff]
    %v2005 = vld [vmem:[#allocation10 + $0x1b0] sm:$0xff]
    %v2006 = vld [vmem:[#allocation10 + $0x1b8] sm:$0xff]
    %v2007 = vld [vmem:[#allocation10 + $0x1c0] sm:$0xff]
    %v2008 = vld [vmem:[#allocation10 + $0x1c8] sm:$0xff]
    %v2009 = vld [vmem:[#allocation10 + $0x1d0] sm:$0xff]
    %v2010 = vld [vmem:[#allocation10 + $0x1d8] sm:$0xff]
    %v2011 = vld [vmem:[#allocation10 + $0x1e0] sm:$0xff]
    %v2012 = vld [vmem:[#allocation10 + $0x1e8] sm:$0xff]
    %v2013 = vld [vmem:[#allocation10 + $0x1f0] sm:$0xff]
    %v2014 = vld [vmem:[#allocation10 + $0x1f8] sm:$0xff]
    %v2016 = vrot.slane %v1949, 5
    %2018 = vmatprep.subr.mxu0 %v2012
    %2019 = vmatpush1.msra.mxu0 %v2011
    %2020 = vmatprep.subr.mxu0 %v2008
    %2021 = vmatpush1.msra.mxu0 %v2007
    %2022 = vmatprep.subr.mxu0 %v2004
    %2023 = vmatpush1.msra.mxu0 %v2003
    %2024 = vmatprep.subr.mxu0 %v2000
    %2025 = vmatpush1.msra.mxu0 %v1999
    %2026 = vmatprep.subr.mxu0 %v1996
    %2027 = vmatpush1.msra.mxu0 %v1995
    %2028 = vmatprep.subr.mxu0 %v1992
    %2029 = vmatpush1.msra.mxu0 %v1991
    %2030 = vmatprep.subr.mxu0 %v1988
    %2031 = vmatpush1.msra.mxu0 %v1987
    %2032 = vmatprep.subr.mxu0 %v1984
    %2033 = vmatpush1.msra.mxu0 %v1983
    %2034 = vmatprep.subr.mxu0 %v1980
    %2035 = vmatpush1.msra.mxu0 %v1979
    %2036 = vmatprep.subr.mxu0 %v1976
    %2037 = vmatpush1.msra.mxu0 %v1975
    %2038 = vmatprep.subr.mxu0 %v1972
    %2039 = vmatpush1.msra.mxu0 %v1971
    %2040 = vmatprep.subr.mxu0 %v1968
    %2041 = vmatpush1.msra.mxu0 %v1967
    %2042 = vmatprep.subr.mxu0 %v1964
    %2043 = vmatpush1.msra.mxu0 %v1963
    %2044 = vmatprep.subr.mxu0 %v1960
    %2045 = vmatpush1.msra.mxu0 %v1959
    %2046 = vmatprep.subr.mxu0 %v1956
    %2047 = vmatpush1.msra.mxu0 %v1955
    %2048 = vmatprep.subr.mxu0 %v1952
    %2049 = vmatpush1.msra.mxu0 %v1951
    %2050 = vmatprep.subr.mxu0 0.0
    %2051 = vmatpush2.msra.mxu0 0.0
    %2052 = vmatprep.subr.mxu0 0.0
    %2053 = vmatpush2.msra.mxu0 0.0
    %2054 = vmatprep.subr.mxu0 0.0
    %2055 = vmatpush2.msra.mxu0 0.0
    %2056 = vmatprep.subr.mxu0 0.0
    %2057 = vmatpush2.msra.mxu0 0.0
    %2058 = vmatprep.subr.mxu0 0.0
    %2059 = vmatpush2.msra.mxu0 0.0
    %2060 = vmatprep.subr.mxu0 0.0
    %2061 = vmatpush2.msra.mxu0 0.0
    %2062 = vmatprep.subr.mxu0 0.0
    %2063 = vmatpush2.msra.mxu0 0.0
    %2064 = vmatprep.subr.mxu0 0.0
    %2065 = vmatpush2.msra.mxu0 0.0
    %2066 = vmatprep.subr.mxu0 0.0
    %2067 = vmatpush2.msra.mxu0 0.0
    %2068 = vmatprep.subr.mxu0 0.0
    %2069 = vmatpush2.msra.mxu0 0.0
    %2070 = vmatprep.subr.mxu0 0.0
    %2071 = vmatpush2.msra.mxu0 0.0
    %2072 = vmatprep.subr.mxu0 0.0
    %2073 = vmatpush2.msra.mxu0 0.0
    %2074 = vmatprep.subr.mxu0 0.0
    %2075 = vmatpush2.msra.mxu0 0.0
    %2076 = vmatprep.subr.mxu0 0.0
    %2077 = vmatpush2.msra.mxu0 0.0
    %2078 = vmatprep.subr.mxu0 0.0
    %2079 = vmatpush2.msra.mxu0 0.0
    %2080 = vmatprep.subr.mxu0 0.0
    %2081 = vmatpush2.msra.mxu0 0.0
    %2082 = vmatprep.mubr.f32.mxu0 0.0
    %2083 = vmatmul.mubr.f32.gmra.mxu0 %v2016
    %v2084 = vpop.f32.mrf.mxu0
    %v2085 = vadd.f32 0.0, %v2084
    %v2086 = vpop.f32.mrf.mxu0
    %v2087 = vadd.f32 0.0, %v2086
    %2088 = vdwg.mxu0
    %2089 = vmatprep.subr.mxu0 %v2014
    %2090 = vmatpush1.msra.mxu0 %v2013
    %2091 = vmatprep.subr.mxu0 %v2010
    %2092 = vmatpush1.msra.mxu0 %v2009
    %2093 = vmatprep.subr.mxu0 %v2006
    %2094 = vmatpush1.msra.mxu0 %v2005
    %2095 = vmatprep.subr.mxu0 %v2002
    %2096 = vmatpush1.msra.mxu0 %v2001
    %2097 = vmatprep.subr.mxu0 %v1998
    %2098 = vmatpush1.msra.mxu0 %v1997
    %2099 = vmatprep.subr.mxu0 %v1994
    %2100 = vmatpush1.msra.mxu0 %v1993
    %2101 = vmatprep.subr.mxu0 %v1990
    %2102 = vmatpush1.msra.mxu0 %v1989
    %2103 = vmatprep.subr.mxu0 %v1986
    %2104 = vmatpush1.msra.mxu0 %v1985
    %2105 = vmatprep.subr.mxu0 %v1982
    %2106 = vmatpush1.msra.mxu0 %v1981
    %2107 = vmatprep.subr.mxu0 %v1978
    %2108 = vmatpush1.msra.mxu0 %v1977
    %2109 = vmatprep.subr.mxu0 %v1974
    %2110 = vmatpush1.msra.mxu0 %v1973
    %2111 = vmatprep.subr.mxu0 %v1970
    %2112 = vmatpush1.msra.mxu0 %v1969
    %2113 = vmatprep.subr.mxu0 %v1966
    %2114 = vmatpush1.msra.mxu0 %v1965
    %2115 = vmatprep.subr.mxu0 %v1962
    %2116 = vmatpush1.msra.mxu0 %v1961
    %2117 = vmatprep.subr.mxu0 %v1958
    %2118 = vmatpush1.msra.mxu0 %v1957
    %2119 = vmatprep.subr.mxu0 %v1954
    %2120 = vmatpush1.msra.mxu0 %v1953
    %2121 = vmatprep.subr.mxu0 0.0
    %2122 = vmatpush2.msra.mxu0 0.0
    %2123 = vmatprep.subr.mxu0 0.0
    %2124 = vmatpush2.msra.mxu0 0.0
    %2125 = vmatprep.subr.mxu0 0.0
    %2126 = vmatpush2.msra.mxu0 0.0
    %2127 = vmatprep.subr.mxu0 0.0
    %2128 = vmatpush2.msra.mxu0 0.0
    %2129 = vmatprep.subr.mxu0 0.0
    %2130 = vmatpush2.msra.mxu0 0.0
    %2131 = vmatprep.subr.mxu0 0.0
    %2132 = vmatpush2.msra.mxu0 0.0
    %2133 = vmatprep.subr.mxu0 0.0
    %2134 = vmatpush2.msra.mxu0 0.0
    %2135 = vmatprep.subr.mxu0 0.0
    %2136 = vmatpush2.msra.mxu0 0.0
    %2137 = vmatprep.subr.mxu0 0.0
    %2138 = vmatpush2.msra.mxu0 0.0
    %2139 = vmatprep.subr.mxu0 0.0
    %2140 = vmatpush2.msra.mxu0 0.0
    %2141 = vmatprep.subr.mxu0 0.0
    %2142 = vmatpush2.msra.mxu0 0.0
    %2143 = vmatprep.subr.mxu0 0.0
    %2144 = vmatpush2.msra.mxu0 0.0
    %2145 = vmatprep.subr.mxu0 0.0
    %2146 = vmatpush2.msra.mxu0 0.0
    %2147 = vmatprep.subr.mxu0 0.0
    %2148 = vmatpush2.msra.mxu0 0.0
    %2149 = vmatprep.subr.mxu0 0.0
    %2150 = vmatpush2.msra.mxu0 0.0
    %2151 = vmatprep.subr.mxu0 0.0
    %2152 = vmatpush2.msra.mxu0 0.0
    %2153 = vmatprep.mubr.f32.mxu0 0.0
    %2154 = vmatmul.mubr.f32.gmra.mxu0 %v2016
    %v2155 = vpop.f32.mrf.mxu0
    %v2156 = vadd.f32 0.0, %v2155
    %v2157 = vpop.f32.mrf.mxu0
    %v2158 = vadd.f32 0.0, %v2157
    %2159 = vdwg.mxu0
    %v2164 = vrot.slane %v2085, 2
    %v2165 = vrot.slane %v2087, 2
    %v2166 = vrot.slane %v2156, 2
    %v2167 = vrot.slane %v2158, 2
    %v2172 = vadd.f32 %v379, %v2164
    %v2173 = vadd.f32 %v381, %v2165
    %v2174 = vadd.f32 %v450, %v2166
    %v2175 = vadd.f32 %v452, %v2167
    %v2176 = vxor.u32 %v2172, 2147483648
    %v2177 = vmul.f32 %v2176, 1.442695
    %v2178 = vpow.pop %v2177
    %v2179 = vadd.f32 %v2178, 1.0
    %v2180 = vrcp.pop %v2179
    %v2181 = vmul.f32 1.0, %v2180
    %v2182 = vxor.u32 %v2173, 2147483648
    %v2183 = vmul.f32 %v2182, 1.442695
    %v2184 = vpow.pop %v2183
    %v2185 = vadd.f32 %v2184, 1.0
    %v2186 = vrcp.pop %v2185
    %v2187 = vmul.f32 1.0, %v2186
    %v2188 = vtanh.pop %v2174
    %v2189 = vxor.u32 %v2175, 2147483648
    %v2190 = vmul.f32 %v2189, 1.442695
    %v2191 = vpow.pop %v2190
    %v2192 = vadd.f32 %v2191, 1.0
    %v2193 = vrcp.pop %v2192
    %v2194 = vmul.f32 1.0, %v2193
    %v2196 = vrot.slane %v1947, 7
    %v2198 = vmul.f32 %v2187, %v2196
    %v2199 = vmul.f32 %v2181, %v2188
    %v2200 = vadd.f32 %v2198, %v2199
    %v2201 = vtanh.pop %v2200
    %v2202 = vmul.f32 %v2194, %v2201
    %2203 = vst [vmem:[#allocation2] sm:$0x40] %v2202
    %v2204 = vld [vmem:[#allocation10] sm:$0xff]
    %v2205 = vld [vmem:[#allocation10 + $0x8] sm:$0xff]
    %v2206 = vld [vmem:[#allocation10 + $0x10] sm:$0xff]
    %v2207 = vld [vmem:[#allocation10 + $0x18] sm:$0xff]
    %v2208 = vld [vmem:[#allocation10 + $0x20] sm:$0xff]
    %v2209 = vld [vmem:[#allocation10 + $0x28] sm:$0xff]
    %v2210 = vld [vmem:[#allocation10 + $0x30] sm:$0xff]
    %v2211 = vld [vmem:[#allocation10 + $0x38] sm:$0xff]
    %v2212 = vld [vmem:[#allocation10 + $0x40] sm:$0xff]
    %v2213 = vld [vmem:[#allocation10 + $0x48] sm:$0xff]
    %v2214 = vld [vmem:[#allocation10 + $0x50] sm:$0xff]
    %v2215 = vld [vmem:[#allocation10 + $0x58] sm:$0xff]
    %v2216 = vld [vmem:[#allocation10 + $0x60] sm:$0xff]
    %v2217 = vld [vmem:[#allocation10 + $0x68] sm:$0xff]
    %v2218 = vld [vmem:[#allocation10 + $0x70] sm:$0xff]
    %v2219 = vld [vmem:[#allocation10 + $0x78] sm:$0xff]
    %v2220 = vld [vmem:[#allocation10 + $0x80] sm:$0xff]
    %v2221 = vld [vmem:[#allocation10 + $0x88] sm:$0xff]
    %v2222 = vld [vmem:[#allocation10 + $0x90] sm:$0xff]
    %v2223 = vld [vmem:[#allocation10 + $0x98] sm:$0xff]
    %v2224 = vld [vmem:[#allocation10 + $0xa0] sm:$0xff]
    %v2225 = vld [vmem:[#allocation10 + $0xa8] sm:$0xff]
    %v2226 = vld [vmem:[#allocation10 + $0xb0] sm:$0xff]
    %v2227 = vld [vmem:[#allocation10 + $0xb8] sm:$0xff]
    %v2228 = vld [vmem:[#allocation10 + $0xc0] sm:$0xff]
    %v2229 = vld [vmem:[#allocation10 + $0xc8] sm:$0xff]
    %v2230 = vld [vmem:[#allocation10 + $0xd0] sm:$0xff]
    %v2231 = vld [vmem:[#allocation10 + $0xd8] sm:$0xff]
    %v2232 = vld [vmem:[#allocation10 + $0xe0] sm:$0xff]
    %v2233 = vld [vmem:[#allocation10 + $0xe8] sm:$0xff]
    %v2234 = vld [vmem:[#allocation10 + $0xf0] sm:$0xff]
    %v2235 = vld [vmem:[#allocation10 + $0xf8] sm:$0xff]
    %v2236 = vld [vmem:[#allocation10 + $0x100] sm:$0xff]
    %v2237 = vld [vmem:[#allocation10 + $0x108] sm:$0xff]
    %v2238 = vld [vmem:[#allocation10 + $0x110] sm:$0xff]
    %v2239 = vld [vmem:[#allocation10 + $0x118] sm:$0xff]
    %v2240 = vld [vmem:[#allocation10 + $0x120] sm:$0xff]
    %v2241 = vld [vmem:[#allocation10 + $0x128] sm:$0xff]
    %v2242 = vld [vmem:[#allocation10 + $0x130] sm:$0xff]
    %v2243 = vld [vmem:[#allocation10 + $0x138] sm:$0xff]
    %v2244 = vld [vmem:[#allocation10 + $0x140] sm:$0xff]
    %v2245 = vld [vmem:[#allocation10 + $0x148] sm:$0xff]
    %v2246 = vld [vmem:[#allocation10 + $0x150] sm:$0xff]
    %v2247 = vld [vmem:[#allocation10 + $0x158] sm:$0xff]
    %v2248 = vld [vmem:[#allocation10 + $0x160] sm:$0xff]
    %v2249 = vld [vmem:[#allocation10 + $0x168] sm:$0xff]
    %v2250 = vld [vmem:[#allocation10 + $0x170] sm:$0xff]
    %v2251 = vld [vmem:[#allocation10 + $0x178] sm:$0xff]
    %v2252 = vld [vmem:[#allocation10 + $0x180] sm:$0xff]
    %v2253 = vld [vmem:[#allocation10 + $0x188] sm:$0xff]
    %v2254 = vld [vmem:[#allocation10 + $0x190] sm:$0xff]
    %v2255 = vld [vmem:[#allocation10 + $0x198] sm:$0xff]
    %v2256 = vld [vmem:[#allocation10 + $0x1a0] sm:$0xff]
    %v2257 = vld [vmem:[#allocation10 + $0x1a8] sm:$0xff]
    %v2258 = vld [vmem:[#allocation10 + $0x1b0] sm:$0xff]
    %v2259 = vld [vmem:[#allocation10 + $0x1b8] sm:$0xff]
    %v2260 = vld [vmem:[#allocation10 + $0x1c0] sm:$0xff]
    %v2261 = vld [vmem:[#allocation10 + $0x1c8] sm:$0xff]
    %v2262 = vld [vmem:[#allocation10 + $0x1d0] sm:$0xff]
    %v2263 = vld [vmem:[#allocation10 + $0x1d8] sm:$0xff]
    %v2264 = vld [vmem:[#allocation10 + $0x1e0] sm:$0xff]
    %v2265 = vld [vmem:[#allocation10 + $0x1e8] sm:$0xff]
    %v2266 = vld [vmem:[#allocation10 + $0x1f0] sm:$0xff]
    %v2267 = vld [vmem:[#allocation10 + $0x1f8] sm:$0xff]
    %v2269 = vrot.slane %v2202, 6
    %2271 = vmatprep.subr.mxu0 %v2265
    %2272 = vmatpush1.msra.mxu0 %v2264
    %2273 = vmatprep.subr.mxu0 %v2261
    %2274 = vmatpush1.msra.mxu0 %v2260
    %2275 = vmatprep.subr.mxu0 %v2257
    %2276 = vmatpush1.msra.mxu0 %v2256
    %2277 = vmatprep.subr.mxu0 %v2253
    %2278 = vmatpush1.msra.mxu0 %v2252
    %2279 = vmatprep.subr.mxu0 %v2249
    %2280 = vmatpush1.msra.mxu0 %v2248
    %2281 = vmatprep.subr.mxu0 %v2245
    %2282 = vmatpush1.msra.mxu0 %v2244
    %2283 = vmatprep.subr.mxu0 %v2241
    %2284 = vmatpush1.msra.mxu0 %v2240
    %2285 = vmatprep.subr.mxu0 %v2237
    %2286 = vmatpush1.msra.mxu0 %v2236
    %2287 = vmatprep.subr.mxu0 %v2233
    %2288 = vmatpush1.msra.mxu0 %v2232
    %2289 = vmatprep.subr.mxu0 %v2229
    %2290 = vmatpush1.msra.mxu0 %v2228
    %2291 = vmatprep.subr.mxu0 %v2225
    %2292 = vmatpush1.msra.mxu0 %v2224
    %2293 = vmatprep.subr.mxu0 %v2221
    %2294 = vmatpush1.msra.mxu0 %v2220
    %2295 = vmatprep.subr.mxu0 %v2217
    %2296 = vmatpush1.msra.mxu0 %v2216
    %2297 = vmatprep.subr.mxu0 %v2213
    %2298 = vmatpush1.msra.mxu0 %v2212
    %2299 = vmatprep.subr.mxu0 %v2209
    %2300 = vmatpush1.msra.mxu0 %v2208
    %2301 = vmatprep.subr.mxu0 %v2205
    %2302 = vmatpush1.msra.mxu0 %v2204
    %2303 = vmatprep.subr.mxu0 0.0
    %2304 = vmatpush2.msra.mxu0 0.0
    %2305 = vmatprep.subr.mxu0 0.0
    %2306 = vmatpush2.msra.mxu0 0.0
    %2307 = vmatprep.subr.mxu0 0.0
    %2308 = vmatpush2.msra.mxu0 0.0
    %2309 = vmatprep.subr.mxu0 0.0
    %2310 = vmatpush2.msra.mxu0 0.0
    %2311 = vmatprep.subr.mxu0 0.0
    %2312 = vmatpush2.msra.mxu0 0.0
    %2313 = vmatprep.subr.mxu0 0.0
    %2314 = vmatpush2.msra.mxu0 0.0
    %2315 = vmatprep.subr.mxu0 0.0
    %2316 = vmatpush2.msra.mxu0 0.0
    %2317 = vmatprep.subr.mxu0 0.0
    %2318 = vmatpush2.msra.mxu0 0.0
    %2319 = vmatprep.subr.mxu0 0.0
    %2320 = vmatpush2.msra.mxu0 0.0
    %2321 = vmatprep.subr.mxu0 0.0
    %2322 = vmatpush2.msra.mxu0 0.0
    %2323 = vmatprep.subr.mxu0 0.0
    %2324 = vmatpush2.msra.mxu0 0.0
    %2325 = vmatprep.subr.mxu0 0.0
    %2326 = vmatpush2.msra.mxu0 0.0
    %2327 = vmatprep.subr.mxu0 0.0
    %2328 = vmatpush2.msra.mxu0 0.0
    %2329 = vmatprep.subr.mxu0 0.0
    %2330 = vmatpush2.msra.mxu0 0.0
    %2331 = vmatprep.subr.mxu0 0.0
    %2332 = vmatpush2.msra.mxu0 0.0
    %2333 = vmatprep.subr.mxu0 0.0
    %2334 = vmatpush2.msra.mxu0 0.0
    %2335 = vmatprep.mubr.f32.mxu0 0.0
    %2336 = vmatmul.mubr.f32.gmra.mxu0 %v2269
    %v2337 = vpop.f32.mrf.mxu0
    %v2338 = vadd.f32 0.0, %v2337
    %v2339 = vpop.f32.mrf.mxu0
    %v2340 = vadd.f32 0.0, %v2339
    %2341 = vdwg.mxu0
    %2342 = vmatprep.subr.mxu0 %v2267
    %2343 = vmatpush1.msra.mxu0 %v2266
    %2344 = vmatprep.subr.mxu0 %v2263
    %2345 = vmatpush1.msra.mxu0 %v2262
    %2346 = vmatprep.subr.mxu0 %v2259
    %2347 = vmatpush1.msra.mxu0 %v2258
    %2348 = vmatprep.subr.mxu0 %v2255
    %2349 = vmatpush1.msra.mxu0 %v2254
    %2350 = vmatprep.subr.mxu0 %v2251
    %2351 = vmatpush1.msra.mxu0 %v2250
    %2352 = vmatprep.subr.mxu0 %v2247
    %2353 = vmatpush1.msra.mxu0 %v2246
    %2354 = vmatprep.subr.mxu0 %v2243
    %2355 = vmatpush1.msra.mxu0 %v2242
    %2356 = vmatprep.subr.mxu0 %v2239
    %2357 = vmatpush1.msra.mxu0 %v2238
    %2358 = vmatprep.subr.mxu0 %v2235
    %2359 = vmatpush1.msra.mxu0 %v2234
    %2360 = vmatprep.subr.mxu0 %v2231
    %2361 = vmatpush1.msra.mxu0 %v2230
    %2362 = vmatprep.subr.mxu0 %v2227
    %2363 = vmatpush1.msra.mxu0 %v2226
    %2364 = vmatprep.subr.mxu0 %v2223
    %2365 = vmatpush1.msra.mxu0 %v2222
    %2366 = vmatprep.subr.mxu0 %v2219
    %2367 = vmatpush1.msra.mxu0 %v2218
    %2368 = vmatprep.subr.mxu0 %v2215
    %2369 = vmatpush1.msra.mxu0 %v2214
    %2370 = vmatprep.subr.mxu0 %v2211
    %2371 = vmatpush1.msra.mxu0 %v2210
    %2372 = vmatprep.subr.mxu0 %v2207
    %2373 = vmatpush1.msra.mxu0 %v2206
    %2374 = vmatprep.subr.mxu0 0.0
    %2375 = vmatpush2.msra.mxu0 0.0
    %2376 = vmatprep.subr.mxu0 0.0
    %2377 = vmatpush2.msra.mxu0 0.0
    %2378 = vmatprep.subr.mxu0 0.0
    %2379 = vmatpush2.msra.mxu0 0.0
    %2380 = vmatprep.subr.mxu0 0.0
    %2381 = vmatpush2.msra.mxu0 0.0
    %2382 = vmatprep.subr.mxu0 0.0
    %2383 = vmatpush2.msra.mxu0 0.0
    %2384 = vmatprep.subr.mxu0 0.0
    %2385 = vmatpush2.msra.mxu0 0.0
    %2386 = vmatprep.subr.mxu0 0.0
    %2387 = vmatpush2.msra.mxu0 0.0
    %2388 = vmatprep.subr.mxu0 0.0
    %2389 = vmatpush2.msra.mxu0 0.0
    %2390 = vmatprep.subr.mxu0 0.0
    %2391 = vmatpush2.msra.mxu0 0.0
    %2392 = vmatprep.subr.mxu0 0.0
    %2393 = vmatpush2.msra.mxu0 0.0
    %2394 = vmatprep.subr.mxu0 0.0
    %2395 = vmatpush2.msra.mxu0 0.0
    %2396 = vmatprep.subr.mxu0 0.0
    %2397 = vmatpush2.msra.mxu0 0.0
    %2398 = vmatprep.subr.mxu0 0.0
    %2399 = vmatpush2.msra.mxu0 0.0
    %2400 = vmatprep.subr.mxu0 0.0
    %2401 = vmatpush2.msra.mxu0 0.0
    %2402 = vmatprep.subr.mxu0 0.0
    %2403 = vmatpush2.msra.mxu0 0.0
    %2404 = vmatprep.subr.mxu0 0.0
    %2405 = vmatpush2.msra.mxu0 0.0
    %2406 = vmatprep.mubr.f32.mxu0 0.0
    %2407 = vmatmul.mubr.f32.gmra.mxu0 %v2269
    %v2408 = vpop.f32.mrf.mxu0
    %v2409 = vadd.f32 0.0, %v2408
    %v2410 = vpop.f32.mrf.mxu0
    %v2411 = vadd.f32 0.0, %v2410
    %2412 = vdwg.mxu0
    %v2417 = vrot.slane %v2338, 1
    %v2418 = vrot.slane %v2340, 1
    %v2419 = vrot.slane %v2409, 1
    %v2420 = vrot.slane %v2411, 1
    %v2425 = vadd.f32 %v379, %v2417
    %v2426 = vadd.f32 %v381, %v2418
    %v2427 = vadd.f32 %v450, %v2419
    %v2428 = vadd.f32 %v452, %v2420
    %v2429 = vxor.u32 %v2425, 2147483648
    %v2430 = vmul.f32 %v2429, 1.442695
    %v2431 = vpow.pop %v2430
    %v2432 = vadd.f32 %v2431, 1.0
    %v2433 = vrcp.pop %v2432
    %v2434 = vmul.f32 1.0, %v2433
    %v2435 = vxor.u32 %v2426, 2147483648
    %v2436 = vmul.f32 %v2435, 1.442695
    %v2437 = vpow.pop %v2436
    %v2438 = vadd.f32 %v2437, 1.0
    %v2439 = vrcp.pop %v2438
    %v2440 = vmul.f32 1.0, %v2439
    %v2441 = vtanh.pop %v2427
    %v2442 = vxor.u32 %v2428, 2147483648
    %v2443 = vmul.f32 %v2442, 1.442695
    %v2444 = vpow.pop %v2443
    %v2445 = vadd.f32 %v2444, 1.0
    %v2446 = vrcp.pop %v2445
    %v2447 = vmul.f32 1.0, %v2446
    %v2449 = vrot.slane %v2200, 7
    %v2451 = vmul.f32 %v2440, %v2449
    %v2452 = vmul.f32 %v2434, %v2441
    %v2453 = vadd.f32 %v2451, %v2452
    %v2454 = vtanh.pop %v2453
    %v2455 = vmul.f32 %v2447, %v2454
    %2456 = vst [vmem:[#allocation2] sm:$0x80] %v2455
    %2457 = vst [vmem:[#allocation17 - $0x7] sm:$0x80] %v2455
    %2458 = vst [vmem:[#allocation19 - $0x7] sm:$0x80] %v2453
    %v2459 = vld [vmem:[#allocation2] sm:$0xff]
    %v2460 = vld [vmem:[#allocation12] sm:$0xff]
    %v2461 = vld [vmem:[#allocation12 + $0x8] sm:$0xff]
    %v2462 = vld [vmem:[#allocation12 + $0x10] sm:$0xff]
    %v2463 = vld [vmem:[#allocation12 + $0x18] sm:$0xff]
    %v2464 = vld [vmem:[#allocation12 + $0x20] sm:$0xff]
    %v2465 = vld [vmem:[#allocation12 + $0x28] sm:$0xff]
    %v2466 = vld [vmem:[#allocation12 + $0x30] sm:$0xff]
    %v2467 = vld [vmem:[#allocation12 + $0x38] sm:$0xff]
    %v2468 = vld [vmem:[#allocation12 + $0x40] sm:$0xff]
    %v2469 = vld [vmem:[#allocation12 + $0x48] sm:$0xff]
    %v2470 = vld [vmem:[#allocation12 + $0x50] sm:$0xff]
    %v2471 = vld [vmem:[#allocation12 + $0x58] sm:$0xff]
    %v2472 = vld [vmem:[#allocation12 + $0x60] sm:$0xff]
    %v2473 = vld [vmem:[#allocation12 + $0x68] sm:$0xff]
    %v2474 = vld [vmem:[#allocation12 + $0x70] sm:$0xff]
    %v2475 = vld [vmem:[#allocation12 + $0x78] sm:$0xff]
    %v2476 = vld [vmem:[#allocation12 + $0x80] sm:$0xff]
    %v2477 = vld [vmem:[#allocation12 + $0x88] sm:$0xff]
    %v2478 = vld [vmem:[#allocation12 + $0x90] sm:$0xff]
    %v2479 = vld [vmem:[#allocation12 + $0x98] sm:$0xff]
    %v2480 = vld [vmem:[#allocation12 + $0xa0] sm:$0xff]
    %v2481 = vld [vmem:[#allocation12 + $0xa8] sm:$0xff]
    %v2482 = vld [vmem:[#allocation12 + $0xb0] sm:$0xff]
    %v2483 = vld [vmem:[#allocation12 + $0xb8] sm:$0xff]
    %v2484 = vld [vmem:[#allocation12 + $0xc0] sm:$0xff]
    %v2485 = vld [vmem:[#allocation12 + $0xc8] sm:$0xff]
    %v2486 = vld [vmem:[#allocation12 + $0xd0] sm:$0xff]
    %v2487 = vld [vmem:[#allocation12 + $0xd8] sm:$0xff]
    %v2488 = vld [vmem:[#allocation12 + $0xe0] sm:$0xff]
    %v2489 = vld [vmem:[#allocation12 + $0xe8] sm:$0xff]
    %v2490 = vld [vmem:[#allocation12 + $0xf0] sm:$0xff]
    %v2491 = vld [vmem:[#allocation12 + $0xf8] sm:$0xff]
    %v2492 = vld [vmem:[#allocation12 + $0x100] sm:$0xff]
    %v2493 = vld [vmem:[#allocation12 + $0x108] sm:$0xff]
    %v2494 = vld [vmem:[#allocation12 + $0x110] sm:$0xff]
    %v2495 = vld [vmem:[#allocation12 + $0x118] sm:$0xff]
    %v2496 = vld [vmem:[#allocation12 + $0x120] sm:$0xff]
    %v2497 = vld [vmem:[#allocation12 + $0x128] sm:$0xff]
    %v2498 = vld [vmem:[#allocation12 + $0x130] sm:$0xff]
    %v2499 = vld [vmem:[#allocation12 + $0x138] sm:$0xff]
    %v2500 = vld [vmem:[#allocation12 + $0x140] sm:$0xff]
    %v2501 = vld [vmem:[#allocation12 + $0x148] sm:$0xff]
    %v2502 = vld [vmem:[#allocation12 + $0x150] sm:$0xff]
    %v2503 = vld [vmem:[#allocation12 + $0x158] sm:$0xff]
    %v2504 = vld [vmem:[#allocation12 + $0x160] sm:$0xff]
    %v2505 = vld [vmem:[#allocation12 + $0x168] sm:$0xff]
    %v2506 = vld [vmem:[#allocation12 + $0x170] sm:$0xff]
    %v2507 = vld [vmem:[#allocation12 + $0x178] sm:$0xff]
    %v2508 = vld [vmem:[#allocation12 + $0x180] sm:$0xff]
    %v2509 = vld [vmem:[#allocation12 + $0x188] sm:$0xff]
    %v2510 = vld [vmem:[#allocation12 + $0x190] sm:$0xff]
    %v2511 = vld [vmem:[#allocation12 + $0x198] sm:$0xff]
    %v2512 = vld [vmem:[#allocation12 + $0x1a0] sm:$0xff]
    %v2513 = vld [vmem:[#allocation12 + $0x1a8] sm:$0xff]
    %v2514 = vld [vmem:[#allocation12 + $0x1b0] sm:$0xff]
    %v2515 = vld [vmem:[#allocation12 + $0x1b8] sm:$0xff]
    %v2516 = vld [vmem:[#allocation12 + $0x1c0] sm:$0xff]
    %v2517 = vld [vmem:[#allocation12 + $0x1c8] sm:$0xff]
    %v2518 = vld [vmem:[#allocation12 + $0x1d0] sm:$0xff]
    %v2519 = vld [vmem:[#allocation12 + $0x1d8] sm:$0xff]
    %v2520 = vld [vmem:[#allocation12 + $0x1e0] sm:$0xff]
    %v2521 = vld [vmem:[#allocation12 + $0x1e8] sm:$0xff]
    %v2522 = vld [vmem:[#allocation12 + $0x1f0] sm:$0xff]
    %v2523 = vld [vmem:[#allocation12 + $0x1f8] sm:$0xff]
    %v2524 = vld [vmem:[%s8] sm:$0xf]
    %v2526 = vlaneseq
    %v2527 = vshrl.u32 %v2526, 7
    %v2528 = vsub.s32 0, %v2527
    %v2529 = vrot.slane %v2524, %v2528
    %v2530 = vlaneseq
    %v2531 = vshrl.u32 %v2530, 7
    %v2532 = vsub.s32 1, %v2531
    %v2533 = vrot.slane %v2524, %v2532
    %v2534 = vlaneseq
    %v2535 = vshrl.u32 %v2534, 7
    %v2536 = vsub.s32 2, %v2535
    %v2537 = vrot.slane %v2524, %v2536
    %v2538 = vlaneseq
    %v2539 = vshrl.u32 %v2538, 7
    %v2540 = vsub.s32 3, %v2539
    %v2541 = vrot.slane %v2524, %v2540
    %2546 = vmatprep.subr.mxu0 %v2521
    %2547 = vmatpush1.msra.mxu0 %v2520
    %2548 = vmatprep.subr.mxu0 %v2517
    %2549 = vmatpush1.msra.mxu0 %v2516
    %2550 = vmatprep.subr.mxu0 %v2513
    %2551 = vmatpush1.msra.mxu0 %v2512
    %2552 = vmatprep.subr.mxu0 %v2509
    %2553 = vmatpush1.msra.mxu0 %v2508
    %2554 = vmatprep.subr.mxu0 %v2505
    %2555 = vmatpush1.msra.mxu0 %v2504
    %2556 = vmatprep.subr.mxu0 %v2501
    %2557 = vmatpush1.msra.mxu0 %v2500
    %2558 = vmatprep.subr.mxu0 %v2497
    %2559 = vmatpush1.msra.mxu0 %v2496
    %2560 = vmatprep.subr.mxu0 %v2493
    %2561 = vmatpush1.msra.mxu0 %v2492
    %2562 = vmatprep.subr.mxu0 %v2489
    %2563 = vmatpush1.msra.mxu0 %v2488
    %2564 = vmatprep.subr.mxu0 %v2485
    %2565 = vmatpush1.msra.mxu0 %v2484
    %2566 = vmatprep.subr.mxu0 %v2481
    %2567 = vmatpush1.msra.mxu0 %v2480
    %2568 = vmatprep.subr.mxu0 %v2477
    %2569 = vmatpush1.msra.mxu0 %v2476
    %2570 = vmatprep.subr.mxu0 %v2473
    %2571 = vmatpush1.msra.mxu0 %v2472
    %2572 = vmatprep.subr.mxu0 %v2469
    %2573 = vmatpush1.msra.mxu0 %v2468
    %2574 = vmatprep.subr.mxu0 %v2465
    %2575 = vmatpush1.msra.mxu0 %v2464
    %2576 = vmatprep.subr.mxu0 %v2461
    %2577 = vmatpush1.msra.mxu0 %v2460
    %2578 = vmatprep.subr.mxu0 0.0
    %2579 = vmatpush2.msra.mxu0 0.0
    %2580 = vmatprep.subr.mxu0 0.0
    %2581 = vmatpush2.msra.mxu0 0.0
    %2582 = vmatprep.subr.mxu0 0.0
    %2583 = vmatpush2.msra.mxu0 0.0
    %2584 = vmatprep.subr.mxu0 0.0
    %2585 = vmatpush2.msra.mxu0 0.0
    %2586 = vmatprep.subr.mxu0 0.0
    %2587 = vmatpush2.msra.mxu0 0.0
    %2588 = vmatprep.subr.mxu0 0.0
    %2589 = vmatpush2.msra.mxu0 0.0
    %2590 = vmatprep.subr.mxu0 0.0
    %2591 = vmatpush2.msra.mxu0 0.0
    %2592 = vmatprep.subr.mxu0 0.0
    %2593 = vmatpush2.msra.mxu0 0.0
    %2594 = vmatprep.subr.mxu0 0.0
    %2595 = vmatpush2.msra.mxu0 0.0
    %2596 = vmatprep.subr.mxu0 0.0
    %2597 = vmatpush2.msra.mxu0 0.0
    %2598 = vmatprep.subr.mxu0 0.0
    %2599 = vmatpush2.msra.mxu0 0.0
    %2600 = vmatprep.subr.mxu0 0.0
    %2601 = vmatpush2.msra.mxu0 0.0
    %2602 = vmatprep.subr.mxu0 0.0
    %2603 = vmatpush2.msra.mxu0 0.0
    %2604 = vmatprep.subr.mxu0 0.0
    %2605 = vmatpush2.msra.mxu0 0.0
    %2606 = vmatprep.subr.mxu0 0.0
    %2607 = vmatpush2.msra.mxu0 0.0
    %2608 = vmatprep.subr.mxu0 0.0
    %2609 = vmatpush2.msra.mxu0 0.0
    %2610 = vmatprep.mubr.f32.mxu0 0.0
    %2611 = vmatmul.mubr.f32.gmra.mxu0 %v2459
    %v2612 = vpop.f32.mrf.mxu0
    %v2613 = vadd.f32 %v2529, %v2612
    %v2614 = vpop.f32.mrf.mxu0
    %v2615 = vadd.f32 %v2533, %v2614
    %2616 = vdwg.mxu0
    %2617 = vmatprep.subr.mxu0 %v2523
    %2618 = vmatpush1.msra.mxu0 %v2522
    %2619 = vmatprep.subr.mxu0 %v2519
    %2620 = vmatpush1.msra.mxu0 %v2518
    %2621 = vmatprep.subr.mxu0 %v2515
    %2622 = vmatpush1.msra.mxu0 %v2514
    %2623 = vmatprep.subr.mxu0 %v2511
    %2624 = vmatpush1.msra.mxu0 %v2510
    %2625 = vmatprep.subr.mxu0 %v2507
    %2626 = vmatpush1.msra.mxu0 %v2506
    %2627 = vmatprep.subr.mxu0 %v2503
    %2628 = vmatpush1.msra.mxu0 %v2502
    %2629 = vmatprep.subr.mxu0 %v2499
    %2630 = vmatpush1.msra.mxu0 %v2498
    %2631 = vmatprep.subr.mxu0 %v2495
    %2632 = vmatpush1.msra.mxu0 %v2494
    %2633 = vmatprep.subr.mxu0 %v2491
    %2634 = vmatpush1.msra.mxu0 %v2490
    %2635 = vmatprep.subr.mxu0 %v2487
    %2636 = vmatpush1.msra.mxu0 %v2486
    %2637 = vmatprep.subr.mxu0 %v2483
    %2638 = vmatpush1.msra.mxu0 %v2482
    %2639 = vmatprep.subr.mxu0 %v2479
    %2640 = vmatpush1.msra.mxu0 %v2478
    %2641 = vmatprep.subr.mxu0 %v2475
    %2642 = vmatpush1.msra.mxu0 %v2474
    %2643 = vmatprep.subr.mxu0 %v2471
    %2644 = vmatpush1.msra.mxu0 %v2470
    %2645 = vmatprep.subr.mxu0 %v2467
    %2646 = vmatpush1.msra.mxu0 %v2466
    %2647 = vmatprep.subr.mxu0 %v2463
    %2648 = vmatpush1.msra.mxu0 %v2462
    %2649 = vmatprep.subr.mxu0 0.0
    %2650 = vmatpush2.msra.mxu0 0.0
    %2651 = vmatprep.subr.mxu0 0.0
    %2652 = vmatpush2.msra.mxu0 0.0
    %2653 = vmatprep.subr.mxu0 0.0
    %2654 = vmatpush2.msra.mxu0 0.0
    %2655 = vmatprep.subr.mxu0 0.0
    %2656 = vmatpush2.msra.mxu0 0.0
    %2657 = vmatprep.subr.mxu0 0.0
    %2658 = vmatpush2.msra.mxu0 0.0
    %2659 = vmatprep.subr.mxu0 0.0
    %2660 = vmatpush2.msra.mxu0 0.0
    %2661 = vmatprep.subr.mxu0 0.0
    %2662 = vmatpush2.msra.mxu0 0.0
    %2663 = vmatprep.subr.mxu0 0.0
    %2664 = vmatpush2.msra.mxu0 0.0
    %2665 = vmatprep.subr.mxu0 0.0
    %2666 = vmatpush2.msra.mxu0 0.0
    %2667 = vmatprep.subr.mxu0 0.0
    %2668 = vmatpush2.msra.mxu0 0.0
    %2669 = vmatprep.subr.mxu0 0.0
    %2670 = vmatpush2.msra.mxu0 0.0
    %2671 = vmatprep.subr.mxu0 0.0
    %2672 = vmatpush2.msra.mxu0 0.0
    %2673 = vmatprep.subr.mxu0 0.0
    %2674 = vmatpush2.msra.mxu0 0.0
    %2675 = vmatprep.subr.mxu0 0.0
    %2676 = vmatpush2.msra.mxu0 0.0
    %2677 = vmatprep.subr.mxu0 0.0
    %2678 = vmatpush2.msra.mxu0 0.0
    %2679 = vmatprep.subr.mxu0 0.0
    %2680 = vmatpush2.msra.mxu0 0.0
    %2681 = vmatprep.mubr.f32.mxu0 0.0
    %2682 = vmatmul.mubr.f32.gmra.mxu0 %v2459
    %v2683 = vpop.f32.mrf.mxu0
    %v2684 = vadd.f32 %v2537, %v2683
    %v2685 = vpop.f32.mrf.mxu0
    %v2686 = vadd.f32 %v2541, %v2685
    %2687 = vdwg.mxu0
    %v2688 = vld [vmem:[#allocation13] sm:$0xff]
    %v2689 = vld [vmem:[#allocation13 + $0x8] sm:$0xff]
    %v2690 = vld [vmem:[#allocation13 + $0x10] sm:$0xff]
    %v2691 = vld [vmem:[#allocation13 + $0x18] sm:$0xff]
    %v2692 = vld [vmem:[#allocation13 + $0x20] sm:$0xff]
    %v2693 = vld [vmem:[#allocation13 + $0x28] sm:$0xff]
    %v2694 = vld [vmem:[#allocation13 + $0x30] sm:$0xff]
    %v2695 = vld [vmem:[#allocation13 + $0x38] sm:$0xff]
    %v2696 = vld [vmem:[#allocation13 + $0x40] sm:$0xff]
    %v2697 = vld [vmem:[#allocation13 + $0x48] sm:$0xff]
    %v2698 = vld [vmem:[#allocation13 + $0x50] sm:$0xff]
    %v2699 = vld [vmem:[#allocation13 + $0x58] sm:$0xff]
    %v2700 = vld [vmem:[#allocation13 + $0x60] sm:$0xff]
    %v2701 = vld [vmem:[#allocation13 + $0x68] sm:$0xff]
    %v2702 = vld [vmem:[#allocation13 + $0x70] sm:$0xff]
    %v2703 = vld [vmem:[#allocation13 + $0x78] sm:$0xff]
    %v2704 = vld [vmem:[#allocation13 + $0x80] sm:$0xff]
    %v2705 = vld [vmem:[#allocation13 + $0x88] sm:$0xff]
    %v2706 = vld [vmem:[#allocation13 + $0x90] sm:$0xff]
    %v2707 = vld [vmem:[#allocation13 + $0x98] sm:$0xff]
    %v2708 = vld [vmem:[#allocation13 + $0xa0] sm:$0xff]
    %v2709 = vld [vmem:[#allocation13 + $0xa8] sm:$0xff]
    %v2710 = vld [vmem:[#allocation13 + $0xb0] sm:$0xff]
    %v2711 = vld [vmem:[#allocation13 + $0xb8] sm:$0xff]
    %v2712 = vld [vmem:[#allocation13 + $0xc0] sm:$0xff]
    %v2713 = vld [vmem:[#allocation13 + $0xc8] sm:$0xff]
    %v2714 = vld [vmem:[#allocation13 + $0xd0] sm:$0xff]
    %v2715 = vld [vmem:[#allocation13 + $0xd8] sm:$0xff]
    %v2716 = vld [vmem:[#allocation13 + $0xe0] sm:$0xff]
    %v2717 = vld [vmem:[#allocation13 + $0xe8] sm:$0xff]
    %v2718 = vld [vmem:[#allocation13 + $0xf0] sm:$0xff]
    %v2719 = vld [vmem:[#allocation13 + $0xf8] sm:$0xff]
    %v2720 = vld [vmem:[#allocation13 + $0x100] sm:$0xff]
    %v2721 = vld [vmem:[#allocation13 + $0x108] sm:$0xff]
    %v2722 = vld [vmem:[#allocation13 + $0x110] sm:$0xff]
    %v2723 = vld [vmem:[#allocation13 + $0x118] sm:$0xff]
    %v2724 = vld [vmem:[#allocation13 + $0x120] sm:$0xff]
    %v2725 = vld [vmem:[#allocation13 + $0x128] sm:$0xff]
    %v2726 = vld [vmem:[#allocation13 + $0x130] sm:$0xff]
    %v2727 = vld [vmem:[#allocation13 + $0x138] sm:$0xff]
    %v2728 = vld [vmem:[#allocation13 + $0x140] sm:$0xff]
    %v2729 = vld [vmem:[#allocation13 + $0x148] sm:$0xff]
    %v2730 = vld [vmem:[#allocation13 + $0x150] sm:$0xff]
    %v2731 = vld [vmem:[#allocation13 + $0x158] sm:$0xff]
    %v2732 = vld [vmem:[#allocation13 + $0x160] sm:$0xff]
    %v2733 = vld [vmem:[#allocation13 + $0x168] sm:$0xff]
    %v2734 = vld [vmem:[#allocation13 + $0x170] sm:$0xff]
    %v2735 = vld [vmem:[#allocation13 + $0x178] sm:$0xff]
    %v2736 = vld [vmem:[#allocation13 + $0x180] sm:$0xff]
    %v2737 = vld [vmem:[#allocation13 + $0x188] sm:$0xff]
    %v2738 = vld [vmem:[#allocation13 + $0x190] sm:$0xff]
    %v2739 = vld [vmem:[#allocation13 + $0x198] sm:$0xff]
    %v2740 = vld [vmem:[#allocation13 + $0x1a0] sm:$0xff]
    %v2741 = vld [vmem:[#allocation13 + $0x1a8] sm:$0xff]
    %v2742 = vld [vmem:[#allocation13 + $0x1b0] sm:$0xff]
    %v2743 = vld [vmem:[#allocation13 + $0x1b8] sm:$0xff]
    %v2744 = vld [vmem:[#allocation13 + $0x1c0] sm:$0xff]
    %v2745 = vld [vmem:[#allocation13 + $0x1c8] sm:$0xff]
    %v2746 = vld [vmem:[#allocation13 + $0x1d0] sm:$0xff]
    %v2747 = vld [vmem:[#allocation13 + $0x1d8] sm:$0xff]
    %v2748 = vld [vmem:[#allocation13 + $0x1e0] sm:$0xff]
    %v2749 = vld [vmem:[#allocation13 + $0x1e8] sm:$0xff]
    %v2750 = vld [vmem:[#allocation13 + $0x1f0] sm:$0xff]
    %v2751 = vld [vmem:[#allocation13 + $0x1f8] sm:$0xff]
    %2752 = vmatprep.subr.mxu0 %v2749
    %2753 = vmatpush1.msra.mxu0 %v2748
    %2754 = vmatprep.subr.mxu0 %v2745
    %2755 = vmatpush1.msra.mxu0 %v2744
    %2756 = vmatprep.subr.mxu0 %v2741
    %2757 = vmatpush1.msra.mxu0 %v2740
    %2758 = vmatprep.subr.mxu0 %v2737
    %2759 = vmatpush1.msra.mxu0 %v2736
    %2760 = vmatprep.subr.mxu0 %v2733
    %2761 = vmatpush1.msra.mxu0 %v2732
    %2762 = vmatprep.subr.mxu0 %v2729
    %2763 = vmatpush1.msra.mxu0 %v2728
    %2764 = vmatprep.subr.mxu0 %v2725
    %2765 = vmatpush1.msra.mxu0 %v2724
    %2766 = vmatprep.subr.mxu0 %v2721
    %2767 = vmatpush1.msra.mxu0 %v2720
    %2768 = vmatprep.subr.mxu0 %v2717
    %2769 = vmatpush1.msra.mxu0 %v2716
    %2770 = vmatprep.subr.mxu0 %v2713
    %2771 = vmatpush1.msra.mxu0 %v2712
    %2772 = vmatprep.subr.mxu0 %v2709
    %2773 = vmatpush1.msra.mxu0 %v2708
    %2774 = vmatprep.subr.mxu0 %v2705
    %2775 = vmatpush1.msra.mxu0 %v2704
    %2776 = vmatprep.subr.mxu0 %v2701
    %2777 = vmatpush1.msra.mxu0 %v2700
    %2778 = vmatprep.subr.mxu0 %v2697
    %2779 = vmatpush1.msra.mxu0 %v2696
    %2780 = vmatprep.subr.mxu0 %v2693
    %2781 = vmatpush1.msra.mxu0 %v2692
    %2782 = vmatprep.subr.mxu0 %v2689
    %2783 = vmatpush1.msra.mxu0 %v2688
    %2784 = vmatprep.subr.mxu0 0.0
    %2785 = vmatpush2.msra.mxu0 0.0
    %2786 = vmatprep.subr.mxu0 0.0
    %2787 = vmatpush2.msra.mxu0 0.0
    %2788 = vmatprep.subr.mxu0 0.0
    %2789 = vmatpush2.msra.mxu0 0.0
    %2790 = vmatprep.subr.mxu0 0.0
    %2791 = vmatpush2.msra.mxu0 0.0
    %2792 = vmatprep.subr.mxu0 0.0
    %2793 = vmatpush2.msra.mxu0 0.0
    %2794 = vmatprep.subr.mxu0 0.0
    %2795 = vmatpush2.msra.mxu0 0.0
    %2796 = vmatprep.subr.mxu0 0.0
    %2797 = vmatpush2.msra.mxu0 0.0
    %2798 = vmatprep.subr.mxu0 0.0
    %2799 = vmatpush2.msra.mxu0 0.0
    %2800 = vmatprep.subr.mxu0 0.0
    %2801 = vmatpush2.msra.mxu0 0.0
    %2802 = vmatprep.subr.mxu0 0.0
    %2803 = vmatpush2.msra.mxu0 0.0
    %2804 = vmatprep.subr.mxu0 0.0
    %2805 = vmatpush2.msra.mxu0 0.0
    %2806 = vmatprep.subr.mxu0 0.0
    %2807 = vmatpush2.msra.mxu0 0.0
    %2808 = vmatprep.subr.mxu0 0.0
    %2809 = vmatpush2.msra.mxu0 0.0
    %2810 = vmatprep.subr.mxu0 0.0
    %2811 = vmatpush2.msra.mxu0 0.0
    %2812 = vmatprep.subr.mxu0 0.0
    %2813 = vmatpush2.msra.mxu0 0.0
    %2814 = vmatprep.subr.mxu0 0.0
    %2815 = vmatpush2.msra.mxu0 0.0
    %2816 = vmatprep.mubr.f32.mxu0 0.0
    %2817 = vmatmul.mubr.f32.gmra.mxu0 0.0
    %v2818 = vpop.f32.mrf.mxu0
    %v2819 = vadd.f32 0.0, %v2818
    %v2820 = vpop.f32.mrf.mxu0
    %v2821 = vadd.f32 0.0, %v2820
    %2822 = vdwg.mxu0
    %2823 = vmatprep.subr.mxu0 %v2751
    %2824 = vmatpush1.msra.mxu0 %v2750
    %2825 = vmatprep.subr.mxu0 %v2747
    %2826 = vmatpush1.msra.mxu0 %v2746
    %2827 = vmatprep.subr.mxu0 %v2743
    %2828 = vmatpush1.msra.mxu0 %v2742
    %2829 = vmatprep.subr.mxu0 %v2739
    %2830 = vmatpush1.msra.mxu0 %v2738
    %2831 = vmatprep.subr.mxu0 %v2735
    %2832 = vmatpush1.msra.mxu0 %v2734
    %2833 = vmatprep.subr.mxu0 %v2731
    %2834 = vmatpush1.msra.mxu0 %v2730
    %2835 = vmatprep.subr.mxu0 %v2727
    %2836 = vmatpush1.msra.mxu0 %v2726
    %2837 = vmatprep.subr.mxu0 %v2723
    %2838 = vmatpush1.msra.mxu0 %v2722
    %2839 = vmatprep.subr.mxu0 %v2719
    %2840 = vmatpush1.msra.mxu0 %v2718
    %2841 = vmatprep.subr.mxu0 %v2715
    %2842 = vmatpush1.msra.mxu0 %v2714
    %2843 = vmatprep.subr.mxu0 %v2711
    %2844 = vmatpush1.msra.mxu0 %v2710
    %2845 = vmatprep.subr.mxu0 %v2707
    %2846 = vmatpush1.msra.mxu0 %v2706
    %2847 = vmatprep.subr.mxu0 %v2703
    %2848 = vmatpush1.msra.mxu0 %v2702
    %2849 = vmatprep.subr.mxu0 %v2699
    %2850 = vmatpush1.msra.mxu0 %v2698
    %2851 = vmatprep.subr.mxu0 %v2695
    %2852 = vmatpush1.msra.mxu0 %v2694
    %2853 = vmatprep.subr.mxu0 %v2691
    %2854 = vmatpush1.msra.mxu0 %v2690
    %2855 = vmatprep.subr.mxu0 0.0
    %2856 = vmatpush2.msra.mxu0 0.0
    %2857 = vmatprep.subr.mxu0 0.0
    %2858 = vmatpush2.msra.mxu0 0.0
    %2859 = vmatprep.subr.mxu0 0.0
    %2860 = vmatpush2.msra.mxu0 0.0
    %2861 = vmatprep.subr.mxu0 0.0
    %2862 = vmatpush2.msra.mxu0 0.0
    %2863 = vmatprep.subr.mxu0 0.0
    %2864 = vmatpush2.msra.mxu0 0.0
    %2865 = vmatprep.subr.mxu0 0.0
    %2866 = vmatpush2.msra.mxu0 0.0
    %2867 = vmatprep.subr.mxu0 0.0
    %2868 = vmatpush2.msra.mxu0 0.0
    %2869 = vmatprep.subr.mxu0 0.0
    %2870 = vmatpush2.msra.mxu0 0.0
    %2871 = vmatprep.subr.mxu0 0.0
    %2872 = vmatpush2.msra.mxu0 0.0
    %2873 = vmatprep.subr.mxu0 0.0
    %2874 = vmatpush2.msra.mxu0 0.0
    %2875 = vmatprep.subr.mxu0 0.0
    %2876 = vmatpush2.msra.mxu0 0.0
    %2877 = vmatprep.subr.mxu0 0.0
    %2878 = vmatpush2.msra.mxu0 0.0
    %2879 = vmatprep.subr.mxu0 0.0
    %2880 = vmatpush2.msra.mxu0 0.0
    %2881 = vmatprep.subr.mxu0 0.0
    %2882 = vmatpush2.msra.mxu0 0.0
    %2883 = vmatprep.subr.mxu0 0.0
    %2884 = vmatpush2.msra.mxu0 0.0
    %2885 = vmatprep.subr.mxu0 0.0
    %2886 = vmatpush2.msra.mxu0 0.0
    %2887 = vmatprep.mubr.f32.mxu0 0.0
    %2888 = vmatmul.mubr.f32.gmra.mxu0 0.0
    %v2889 = vpop.f32.mrf.mxu0
    %v2890 = vadd.f32 0.0, %v2889
    %v2891 = vpop.f32.mrf.mxu0
    %v2892 = vadd.f32 0.0, %v2891
    %2893 = vdwg.mxu0
    %v2894 = vadd.f32 %v2613, %v2819
    %v2895 = vadd.f32 %v2615, %v2821
    %v2896 = vadd.f32 %v2684, %v2890
    %v2897 = vadd.f32 %v2686, %v2892
    %v2898 = vxor.u32 %v2894, 2147483648
    %v2899 = vmul.f32 %v2898, 1.442695
    %v2900 = vpow.pop %v2899
    %v2901 = vadd.f32 %v2900, 1.0
    %v2902 = vrcp.pop %v2901
    %v2903 = vmul.f32 1.0, %v2902
    %v2904 = vxor.u32 %v2895, 2147483648
    %v2905 = vmul.f32 %v2904, 1.442695
    %v2906 = vpow.pop %v2905
    %v2907 = vadd.f32 %v2906, 1.0
    %v2908 = vrcp.pop %v2907
    %v2909 = vmul.f32 1.0, %v2908
    %v2910 = vtanh.pop %v2896
    %v2911 = vxor.u32 %v2897, 2147483648
    %v2912 = vmul.f32 %v2911, 1.442695
    %v2913 = vpow.pop %v2912
    %v2914 = vadd.f32 %v2913, 1.0
    %v2915 = vrcp.pop %v2914
    %v2916 = vmul.f32 1.0, %v2915
    %v2917 = vmul.f32 %v2909, 0.0
    %v2918 = vmul.f32 %v2903, %v2910
    %v2919 = vadd.f32 %v2917, %v2918
    %v2920 = vtanh.pop %v2919
    %v2921 = vmul.f32 %v2916, %v2920
    %2922 = vst [vmem:[#allocation3] sm:$0x1] %v2921
    %v2923 = vld [vmem:[#allocation13] sm:$0xff]
    %v2924 = vld [vmem:[#allocation13 + $0x8] sm:$0xff]
    %v2925 = vld [vmem:[#allocation13 + $0x10] sm:$0xff]
    %v2926 = vld [vmem:[#allocation13 + $0x18] sm:$0xff]
    %v2927 = vld [vmem:[#allocation13 + $0x20] sm:$0xff]
    %v2928 = vld [vmem:[#allocation13 + $0x28] sm:$0xff]
    %v2929 = vld [vmem:[#allocation13 + $0x30] sm:$0xff]
    %v2930 = vld [vmem:[#allocation13 + $0x38] sm:$0xff]
    %v2931 = vld [vmem:[#allocation13 + $0x40] sm:$0xff]
    %v2932 = vld [vmem:[#allocation13 + $0x48] sm:$0xff]
    %v2933 = vld [vmem:[#allocation13 + $0x50] sm:$0xff]
    %v2934 = vld [vmem:[#allocation13 + $0x58] sm:$0xff]
    %v2935 = vld [vmem:[#allocation13 + $0x60] sm:$0xff]
    %v2936 = vld [vmem:[#allocation13 + $0x68] sm:$0xff]
    %v2937 = vld [vmem:[#allocation13 + $0x70] sm:$0xff]
    %v2938 = vld [vmem:[#allocation13 + $0x78] sm:$0xff]
    %v2939 = vld [vmem:[#allocation13 + $0x80] sm:$0xff]
    %v2940 = vld [vmem:[#allocation13 + $0x88] sm:$0xff]
    %v2941 = vld [vmem:[#allocation13 + $0x90] sm:$0xff]
    %v2942 = vld [vmem:[#allocation13 + $0x98] sm:$0xff]
    %v2943 = vld [vmem:[#allocation13 + $0xa0] sm:$0xff]
    %v2944 = vld [vmem:[#allocation13 + $0xa8] sm:$0xff]
    %v2945 = vld [vmem:[#allocation13 + $0xb0] sm:$0xff]
    %v2946 = vld [vmem:[#allocation13 + $0xb8] sm:$0xff]
    %v2947 = vld [vmem:[#allocation13 + $0xc0] sm:$0xff]
    %v2948 = vld [vmem:[#allocation13 + $0xc8] sm:$0xff]
    %v2949 = vld [vmem:[#allocation13 + $0xd0] sm:$0xff]
    %v2950 = vld [vmem:[#allocation13 + $0xd8] sm:$0xff]
    %v2951 = vld [vmem:[#allocation13 + $0xe0] sm:$0xff]
    %v2952 = vld [vmem:[#allocation13 + $0xe8] sm:$0xff]
    %v2953 = vld [vmem:[#allocation13 + $0xf0] sm:$0xff]
    %v2954 = vld [vmem:[#allocation13 + $0xf8] sm:$0xff]
    %v2955 = vld [vmem:[#allocation13 + $0x100] sm:$0xff]
    %v2956 = vld [vmem:[#allocation13 + $0x108] sm:$0xff]
    %v2957 = vld [vmem:[#allocation13 + $0x110] sm:$0xff]
    %v2958 = vld [vmem:[#allocation13 + $0x118] sm:$0xff]
    %v2959 = vld [vmem:[#allocation13 + $0x120] sm:$0xff]
    %v2960 = vld [vmem:[#allocation13 + $0x128] sm:$0xff]
    %v2961 = vld [vmem:[#allocation13 + $0x130] sm:$0xff]
    %v2962 = vld [vmem:[#allocation13 + $0x138] sm:$0xff]
    %v2963 = vld [vmem:[#allocation13 + $0x140] sm:$0xff]
    %v2964 = vld [vmem:[#allocation13 + $0x148] sm:$0xff]
    %v2965 = vld [vmem:[#allocation13 + $0x150] sm:$0xff]
    %v2966 = vld [vmem:[#allocation13 + $0x158] sm:$0xff]
    %v2967 = vld [vmem:[#allocation13 + $0x160] sm:$0xff]
    %v2968 = vld [vmem:[#allocation13 + $0x168] sm:$0xff]
    %v2969 = vld [vmem:[#allocation13 + $0x170] sm:$0xff]
    %v2970 = vld [vmem:[#allocation13 + $0x178] sm:$0xff]
    %v2971 = vld [vmem:[#allocation13 + $0x180] sm:$0xff]
    %v2972 = vld [vmem:[#allocation13 + $0x188] sm:$0xff]
    %v2973 = vld [vmem:[#allocation13 + $0x190] sm:$0xff]
    %v2974 = vld [vmem:[#allocation13 + $0x198] sm:$0xff]
    %v2975 = vld [vmem:[#allocation13 + $0x1a0] sm:$0xff]
    %v2976 = vld [vmem:[#allocation13 + $0x1a8] sm:$0xff]
    %v2977 = vld [vmem:[#allocation13 + $0x1b0] sm:$0xff]
    %v2978 = vld [vmem:[#allocation13 + $0x1b8] sm:$0xff]
    %v2979 = vld [vmem:[#allocation13 + $0x1c0] sm:$0xff]
    %v2980 = vld [vmem:[#allocation13 + $0x1c8] sm:$0xff]
    %v2981 = vld [vmem:[#allocation13 + $0x1d0] sm:$0xff]
    %v2982 = vld [vmem:[#allocation13 + $0x1d8] sm:$0xff]
    %v2983 = vld [vmem:[#allocation13 + $0x1e0] sm:$0xff]
    %v2984 = vld [vmem:[#allocation13 + $0x1e8] sm:$0xff]
    %v2985 = vld [vmem:[#allocation13 + $0x1f0] sm:$0xff]
    %v2986 = vld [vmem:[#allocation13 + $0x1f8] sm:$0xff]
    %2987 = vmatprep.subr.mxu0 %v2984
    %2988 = vmatpush1.msra.mxu0 %v2983
    %2989 = vmatprep.subr.mxu0 %v2980
    %2990 = vmatpush1.msra.mxu0 %v2979
    %2991 = vmatprep.subr.mxu0 %v2976
    %2992 = vmatpush1.msra.mxu0 %v2975
    %2993 = vmatprep.subr.mxu0 %v2972
    %2994 = vmatpush1.msra.mxu0 %v2971
    %2995 = vmatprep.subr.mxu0 %v2968
    %2996 = vmatpush1.msra.mxu0 %v2967
    %2997 = vmatprep.subr.mxu0 %v2964
    %2998 = vmatpush1.msra.mxu0 %v2963
    %2999 = vmatprep.subr.mxu0 %v2960
    %3000 = vmatpush1.msra.mxu0 %v2959
    %3001 = vmatprep.subr.mxu0 %v2956
    %3002 = vmatpush1.msra.mxu0 %v2955
    %3003 = vmatprep.subr.mxu0 %v2952
    %3004 = vmatpush1.msra.mxu0 %v2951
    %3005 = vmatprep.subr.mxu0 %v2948
    %3006 = vmatpush1.msra.mxu0 %v2947
    %3007 = vmatprep.subr.mxu0 %v2944
    %3008 = vmatpush1.msra.mxu0 %v2943
    %3009 = vmatprep.subr.mxu0 %v2940
    %3010 = vmatpush1.msra.mxu0 %v2939
    %3011 = vmatprep.subr.mxu0 %v2936
    %3012 = vmatpush1.msra.mxu0 %v2935
    %3013 = vmatprep.subr.mxu0 %v2932
    %3014 = vmatpush1.msra.mxu0 %v2931
    %3015 = vmatprep.subr.mxu0 %v2928
    %3016 = vmatpush1.msra.mxu0 %v2927
    %3017 = vmatprep.subr.mxu0 %v2924
    %3018 = vmatpush1.msra.mxu0 %v2923
    %3019 = vmatprep.subr.mxu0 0.0
    %3020 = vmatpush2.msra.mxu0 0.0
    %3021 = vmatprep.subr.mxu0 0.0
    %3022 = vmatpush2.msra.mxu0 0.0
    %3023 = vmatprep.subr.mxu0 0.0
    %3024 = vmatpush2.msra.mxu0 0.0
    %3025 = vmatprep.subr.mxu0 0.0
    %3026 = vmatpush2.msra.mxu0 0.0
    %3027 = vmatprep.subr.mxu0 0.0
    %3028 = vmatpush2.msra.mxu0 0.0
    %3029 = vmatprep.subr.mxu0 0.0
    %3030 = vmatpush2.msra.mxu0 0.0
    %3031 = vmatprep.subr.mxu0 0.0
    %3032 = vmatpush2.msra.mxu0 0.0
    %3033 = vmatprep.subr.mxu0 0.0
    %3034 = vmatpush2.msra.mxu0 0.0
    %3035 = vmatprep.subr.mxu0 0.0
    %3036 = vmatpush2.msra.mxu0 0.0
    %3037 = vmatprep.subr.mxu0 0.0
    %3038 = vmatpush2.msra.mxu0 0.0
    %3039 = vmatprep.subr.mxu0 0.0
    %3040 = vmatpush2.msra.mxu0 0.0
    %3041 = vmatprep.subr.mxu0 0.0
    %3042 = vmatpush2.msra.mxu0 0.0
    %3043 = vmatprep.subr.mxu0 0.0
    %3044 = vmatpush2.msra.mxu0 0.0
    %3045 = vmatprep.subr.mxu0 0.0
    %3046 = vmatpush2.msra.mxu0 0.0
    %3047 = vmatprep.subr.mxu0 0.0
    %3048 = vmatpush2.msra.mxu0 0.0
    %3049 = vmatprep.subr.mxu0 0.0
    %3050 = vmatpush2.msra.mxu0 0.0
    %3051 = vmatprep.mubr.f32.mxu0 0.0
    %3052 = vmatmul.mubr.f32.gmra.mxu0 %v2921
    %v3053 = vpop.f32.mrf.mxu0
    %v3054 = vadd.f32 0.0, %v3053
    %v3055 = vpop.f32.mrf.mxu0
    %v3056 = vadd.f32 0.0, %v3055
    %3057 = vdwg.mxu0
    %3058 = vmatprep.subr.mxu0 %v2986
    %3059 = vmatpush1.msra.mxu0 %v2985
    %3060 = vmatprep.subr.mxu0 %v2982
    %3061 = vmatpush1.msra.mxu0 %v2981
    %3062 = vmatprep.subr.mxu0 %v2978
    %3063 = vmatpush1.msra.mxu0 %v2977
    %3064 = vmatprep.subr.mxu0 %v2974
    %3065 = vmatpush1.msra.mxu0 %v2973
    %3066 = vmatprep.subr.mxu0 %v2970
    %3067 = vmatpush1.msra.mxu0 %v2969
    %3068 = vmatprep.subr.mxu0 %v2966
    %3069 = vmatpush1.msra.mxu0 %v2965
    %3070 = vmatprep.subr.mxu0 %v2962
    %3071 = vmatpush1.msra.mxu0 %v2961
    %3072 = vmatprep.subr.mxu0 %v2958
    %3073 = vmatpush1.msra.mxu0 %v2957
    %3074 = vmatprep.subr.mxu0 %v2954
    %3075 = vmatpush1.msra.mxu0 %v2953
    %3076 = vmatprep.subr.mxu0 %v2950
    %3077 = vmatpush1.msra.mxu0 %v2949
    %3078 = vmatprep.subr.mxu0 %v2946
    %3079 = vmatpush1.msra.mxu0 %v2945
    %3080 = vmatprep.subr.mxu0 %v2942
    %3081 = vmatpush1.msra.mxu0 %v2941
    %3082 = vmatprep.subr.mxu0 %v2938
    %3083 = vmatpush1.msra.mxu0 %v2937
    %3084 = vmatprep.subr.mxu0 %v2934
    %3085 = vmatpush1.msra.mxu0 %v2933
    %3086 = vmatprep.subr.mxu0 %v2930
    %3087 = vmatpush1.msra.mxu0 %v2929
    %3088 = vmatprep.subr.mxu0 %v2926
    %3089 = vmatpush1.msra.mxu0 %v2925
    %3090 = vmatprep.subr.mxu0 0.0
    %3091 = vmatpush2.msra.mxu0 0.0
    %3092 = vmatprep.subr.mxu0 0.0
    %3093 = vmatpush2.msra.mxu0 0.0
    %3094 = vmatprep.subr.mxu0 0.0
    %3095 = vmatpush2.msra.mxu0 0.0
    %3096 = vmatprep.subr.mxu0 0.0
    %3097 = vmatpush2.msra.mxu0 0.0
    %3098 = vmatprep.subr.mxu0 0.0
    %3099 = vmatpush2.msra.mxu0 0.0
    %3100 = vmatprep.subr.mxu0 0.0
    %3101 = vmatpush2.msra.mxu0 0.0
    %3102 = vmatprep.subr.mxu0 0.0
    %3103 = vmatpush2.msra.mxu0 0.0
    %3104 = vmatprep.subr.mxu0 0.0
    %3105 = vmatpush2.msra.mxu0 0.0
    %3106 = vmatprep.subr.mxu0 0.0
    %3107 = vmatpush2.msra.mxu0 0.0
    %3108 = vmatprep.subr.mxu0 0.0
    %3109 = vmatpush2.msra.mxu0 0.0
    %3110 = vmatprep.subr.mxu0 0.0
    %3111 = vmatpush2.msra.mxu0 0.0
    %3112 = vmatprep.subr.mxu0 0.0
    %3113 = vmatpush2.msra.mxu0 0.0
    %3114 = vmatprep.subr.mxu0 0.0
    %3115 = vmatpush2.msra.mxu0 0.0
    %3116 = vmatprep.subr.mxu0 0.0
    %3117 = vmatpush2.msra.mxu0 0.0
    %3118 = vmatprep.subr.mxu0 0.0
    %3119 = vmatpush2.msra.mxu0 0.0
    %3120 = vmatprep.subr.mxu0 0.0
    %3121 = vmatpush2.msra.mxu0 0.0
    %3122 = vmatprep.mubr.f32.mxu0 0.0
    %3123 = vmatmul.mubr.f32.gmra.mxu0 %v2921
    %v3124 = vpop.f32.mrf.mxu0
    %v3125 = vadd.f32 0.0, %v3124
    %v3126 = vpop.f32.mrf.mxu0
    %v3127 = vadd.f32 0.0, %v3126
    %3128 = vdwg.mxu0
    %v3133 = vrot.slane %v3054, 7
    %v3134 = vrot.slane %v3056, 7
    %v3135 = vrot.slane %v3125, 7
    %v3136 = vrot.slane %v3127, 7
    %v3141 = vadd.f32 %v2613, %v3133
    %v3142 = vadd.f32 %v2615, %v3134
    %v3143 = vadd.f32 %v2684, %v3135
    %v3144 = vadd.f32 %v2686, %v3136
    %v3145 = vxor.u32 %v3141, 2147483648
    %v3146 = vmul.f32 %v3145, 1.442695
    %v3147 = vpow.pop %v3146
    %v3148 = vadd.f32 %v3147, 1.0
    %v3149 = vrcp.pop %v3148
    %v3150 = vmul.f32 1.0, %v3149
    %v3151 = vxor.u32 %v3142, 2147483648
    %v3152 = vmul.f32 %v3151, 1.442695
    %v3153 = vpow.pop %v3152
    %v3154 = vadd.f32 %v3153, 1.0
    %v3155 = vrcp.pop %v3154
    %v3156 = vmul.f32 1.0, %v3155
    %v3157 = vtanh.pop %v3143
    %v3158 = vxor.u32 %v3144, 2147483648
    %v3159 = vmul.f32 %v3158, 1.442695
    %v3160 = vpow.pop %v3159
    %v3161 = vadd.f32 %v3160, 1.0
    %v3162 = vrcp.pop %v3161
    %v3163 = vmul.f32 1.0, %v3162
    %v3165 = vrot.slane %v2919, 7
    %v3167 = vmul.f32 %v3156, %v3165
    %v3168 = vmul.f32 %v3150, %v3157
    %v3169 = vadd.f32 %v3167, %v3168
    %v3170 = vtanh.pop %v3169
    %v3171 = vmul.f32 %v3163, %v3170
    %3172 = vst [vmem:[#allocation3] sm:$0x2] %v3171
    %v3173 = vld [vmem:[#allocation13] sm:$0xff]
    %v3174 = vld [vmem:[#allocation13 + $0x8] sm:$0xff]
    %v3175 = vld [vmem:[#allocation13 + $0x10] sm:$0xff]
    %v3176 = vld [vmem:[#allocation13 + $0x18] sm:$0xff]
    %v3177 = vld [vmem:[#allocation13 + $0x20] sm:$0xff]
    %v3178 = vld [vmem:[#allocation13 + $0x28] sm:$0xff]
    %v3179 = vld [vmem:[#allocation13 + $0x30] sm:$0xff]
    %v3180 = vld [vmem:[#allocation13 + $0x38] sm:$0xff]
    %v3181 = vld [vmem:[#allocation13 + $0x40] sm:$0xff]
    %v3182 = vld [vmem:[#allocation13 + $0x48] sm:$0xff]
    %v3183 = vld [vmem:[#allocation13 + $0x50] sm:$0xff]
    %v3184 = vld [vmem:[#allocation13 + $0x58] sm:$0xff]
    %v3185 = vld [vmem:[#allocation13 + $0x60] sm:$0xff]
    %v3186 = vld [vmem:[#allocation13 + $0x68] sm:$0xff]
    %v3187 = vld [vmem:[#allocation13 + $0x70] sm:$0xff]
    %v3188 = vld [vmem:[#allocation13 + $0x78] sm:$0xff]
    %v3189 = vld [vmem:[#allocation13 + $0x80] sm:$0xff]
    %v3190 = vld [vmem:[#allocation13 + $0x88] sm:$0xff]
    %v3191 = vld [vmem:[#allocation13 + $0x90] sm:$0xff]
    %v3192 = vld [vmem:[#allocation13 + $0x98] sm:$0xff]
    %v3193 = vld [vmem:[#allocation13 + $0xa0] sm:$0xff]
    %v3194 = vld [vmem:[#allocation13 + $0xa8] sm:$0xff]
    %v3195 = vld [vmem:[#allocation13 + $0xb0] sm:$0xff]
    %v3196 = vld [vmem:[#allocation13 + $0xb8] sm:$0xff]
    %v3197 = vld [vmem:[#allocation13 + $0xc0] sm:$0xff]
    %v3198 = vld [vmem:[#allocation13 + $0xc8] sm:$0xff]
    %v3199 = vld [vmem:[#allocation13 + $0xd0] sm:$0xff]
    %v3200 = vld [vmem:[#allocation13 + $0xd8] sm:$0xff]
    %v3201 = vld [vmem:[#allocation13 + $0xe0] sm:$0xff]
    %v3202 = vld [vmem:[#allocation13 + $0xe8] sm:$0xff]
    %v3203 = vld [vmem:[#allocation13 + $0xf0] sm:$0xff]
    %v3204 = vld [vmem:[#allocation13 + $0xf8] sm:$0xff]
    %v3205 = vld [vmem:[#allocation13 + $0x100] sm:$0xff]
    %v3206 = vld [vmem:[#allocation13 + $0x108] sm:$0xff]
    %v3207 = vld [vmem:[#allocation13 + $0x110] sm:$0xff]
    %v3208 = vld [vmem:[#allocation13 + $0x118] sm:$0xff]
    %v3209 = vld [vmem:[#allocation13 + $0x120] sm:$0xff]
    %v3210 = vld [vmem:[#allocation13 + $0x128] sm:$0xff]
    %v3211 = vld [vmem:[#allocation13 + $0x130] sm:$0xff]
    %v3212 = vld [vmem:[#allocation13 + $0x138] sm:$0xff]
    %v3213 = vld [vmem:[#allocation13 + $0x140] sm:$0xff]
    %v3214 = vld [vmem:[#allocation13 + $0x148] sm:$0xff]
    %v3215 = vld [vmem:[#allocation13 + $0x150] sm:$0xff]
    %v3216 = vld [vmem:[#allocation13 + $0x158] sm:$0xff]
    %v3217 = vld [vmem:[#allocation13 + $0x160] sm:$0xff]
    %v3218 = vld [vmem:[#allocation13 + $0x168] sm:$0xff]
    %v3219 = vld [vmem:[#allocation13 + $0x170] sm:$0xff]
    %v3220 = vld [vmem:[#allocation13 + $0x178] sm:$0xff]
    %v3221 = vld [vmem:[#allocation13 + $0x180] sm:$0xff]
    %v3222 = vld [vmem:[#allocation13 + $0x188] sm:$0xff]
    %v3223 = vld [vmem:[#allocation13 + $0x190] sm:$0xff]
    %v3224 = vld [vmem:[#allocation13 + $0x198] sm:$0xff]
    %v3225 = vld [vmem:[#allocation13 + $0x1a0] sm:$0xff]
    %v3226 = vld [vmem:[#allocation13 + $0x1a8] sm:$0xff]
    %v3227 = vld [vmem:[#allocation13 + $0x1b0] sm:$0xff]
    %v3228 = vld [vmem:[#allocation13 + $0x1b8] sm:$0xff]
    %v3229 = vld [vmem:[#allocation13 + $0x1c0] sm:$0xff]
    %v3230 = vld [vmem:[#allocation13 + $0x1c8] sm:$0xff]
    %v3231 = vld [vmem:[#allocation13 + $0x1d0] sm:$0xff]
    %v3232 = vld [vmem:[#allocation13 + $0x1d8] sm:$0xff]
    %v3233 = vld [vmem:[#allocation13 + $0x1e0] sm:$0xff]
    %v3234 = vld [vmem:[#allocation13 + $0x1e8] sm:$0xff]
    %v3235 = vld [vmem:[#allocation13 + $0x1f0] sm:$0xff]
    %v3236 = vld [vmem:[#allocation13 + $0x1f8] sm:$0xff]
    %v3238 = vrot.slane %v3171, 1
    %3240 = vmatprep.subr.mxu0 %v3234
    %3241 = vmatpush1.msra.mxu0 %v3233
    %3242 = vmatprep.subr.mxu0 %v3230
    %3243 = vmatpush1.msra.mxu0 %v3229
    %3244 = vmatprep.subr.mxu0 %v3226
    %3245 = vmatpush1.msra.mxu0 %v3225
    %3246 = vmatprep.subr.mxu0 %v3222
    %3247 = vmatpush1.msra.mxu0 %v3221
    %3248 = vmatprep.subr.mxu0 %v3218
    %3249 = vmatpush1.msra.mxu0 %v3217
    %3250 = vmatprep.subr.mxu0 %v3214
    %3251 = vmatpush1.msra.mxu0 %v3213
    %3252 = vmatprep.subr.mxu0 %v3210
    %3253 = vmatpush1.msra.mxu0 %v3209
    %3254 = vmatprep.subr.mxu0 %v3206
    %3255 = vmatpush1.msra.mxu0 %v3205
    %3256 = vmatprep.subr.mxu0 %v3202
    %3257 = vmatpush1.msra.mxu0 %v3201
    %3258 = vmatprep.subr.mxu0 %v3198
    %3259 = vmatpush1.msra.mxu0 %v3197
    %3260 = vmatprep.subr.mxu0 %v3194
    %3261 = vmatpush1.msra.mxu0 %v3193
    %3262 = vmatprep.subr.mxu0 %v3190
    %3263 = vmatpush1.msra.mxu0 %v3189
    %3264 = vmatprep.subr.mxu0 %v3186
    %3265 = vmatpush1.msra.mxu0 %v3185
    %3266 = vmatprep.subr.mxu0 %v3182
    %3267 = vmatpush1.msra.mxu0 %v3181
    %3268 = vmatprep.subr.mxu0 %v3178
    %3269 = vmatpush1.msra.mxu0 %v3177
    %3270 = vmatprep.subr.mxu0 %v3174
    %3271 = vmatpush1.msra.mxu0 %v3173
    %3272 = vmatprep.subr.mxu0 0.0
    %3273 = vmatpush2.msra.mxu0 0.0
    %3274 = vmatprep.subr.mxu0 0.0
    %3275 = vmatpush2.msra.mxu0 0.0
    %3276 = vmatprep.subr.mxu0 0.0
    %3277 = vmatpush2.msra.mxu0 0.0
    %3278 = vmatprep.subr.mxu0 0.0
    %3279 = vmatpush2.msra.mxu0 0.0
    %3280 = vmatprep.subr.mxu0 0.0
    %3281 = vmatpush2.msra.mxu0 0.0
    %3282 = vmatprep.subr.mxu0 0.0
    %3283 = vmatpush2.msra.mxu0 0.0
    %3284 = vmatprep.subr.mxu0 0.0
    %3285 = vmatpush2.msra.mxu0 0.0
    %3286 = vmatprep.subr.mxu0 0.0
    %3287 = vmatpush2.msra.mxu0 0.0
    %3288 = vmatprep.subr.mxu0 0.0
    %3289 = vmatpush2.msra.mxu0 0.0
    %3290 = vmatprep.subr.mxu0 0.0
    %3291 = vmatpush2.msra.mxu0 0.0
    %3292 = vmatprep.subr.mxu0 0.0
    %3293 = vmatpush2.msra.mxu0 0.0
    %3294 = vmatprep.subr.mxu0 0.0
    %3295 = vmatpush2.msra.mxu0 0.0
    %3296 = vmatprep.subr.mxu0 0.0
    %3297 = vmatpush2.msra.mxu0 0.0
    %3298 = vmatprep.subr.mxu0 0.0
    %3299 = vmatpush2.msra.mxu0 0.0
    %3300 = vmatprep.subr.mxu0 0.0
    %3301 = vmatpush2.msra.mxu0 0.0
    %3302 = vmatprep.subr.mxu0 0.0
    %3303 = vmatpush2.msra.mxu0 0.0
    %3304 = vmatprep.mubr.f32.mxu0 0.0
    %3305 = vmatmul.mubr.f32.gmra.mxu0 %v3238
    %v3306 = vpop.f32.mrf.mxu0
    %v3307 = vadd.f32 0.0, %v3306
    %v3308 = vpop.f32.mrf.mxu0
    %v3309 = vadd.f32 0.0, %v3308
    %3310 = vdwg.mxu0
    %3311 = vmatprep.subr.mxu0 %v3236
    %3312 = vmatpush1.msra.mxu0 %v3235
    %3313 = vmatprep.subr.mxu0 %v3232
    %3314 = vmatpush1.msra.mxu0 %v3231
    %3315 = vmatprep.subr.mxu0 %v3228
    %3316 = vmatpush1.msra.mxu0 %v3227
    %3317 = vmatprep.subr.mxu0 %v3224
    %3318 = vmatpush1.msra.mxu0 %v3223
    %3319 = vmatprep.subr.mxu0 %v3220
    %3320 = vmatpush1.msra.mxu0 %v3219
    %3321 = vmatprep.subr.mxu0 %v3216
    %3322 = vmatpush1.msra.mxu0 %v3215
    %3323 = vmatprep.subr.mxu0 %v3212
    %3324 = vmatpush1.msra.mxu0 %v3211
    %3325 = vmatprep.subr.mxu0 %v3208
    %3326 = vmatpush1.msra.mxu0 %v3207
    %3327 = vmatprep.subr.mxu0 %v3204
    %3328 = vmatpush1.msra.mxu0 %v3203
    %3329 = vmatprep.subr.mxu0 %v3200
    %3330 = vmatpush1.msra.mxu0 %v3199
    %3331 = vmatprep.subr.mxu0 %v3196
    %3332 = vmatpush1.msra.mxu0 %v3195
    %3333 = vmatprep.subr.mxu0 %v3192
    %3334 = vmatpush1.msra.mxu0 %v3191
    %3335 = vmatprep.subr.mxu0 %v3188
    %3336 = vmatpush1.msra.mxu0 %v3187
    %3337 = vmatprep.subr.mxu0 %v3184
    %3338 = vmatpush1.msra.mxu0 %v3183
    %3339 = vmatprep.subr.mxu0 %v3180
    %3340 = vmatpush1.msra.mxu0 %v3179
    %3341 = vmatprep.subr.mxu0 %v3176
    %3342 = vmatpush1.msra.mxu0 %v3175
    %3343 = vmatprep.subr.mxu0 0.0
    %3344 = vmatpush2.msra.mxu0 0.0
    %3345 = vmatprep.subr.mxu0 0.0
    %3346 = vmatpush2.msra.mxu0 0.0
    %3347 = vmatprep.subr.mxu0 0.0
    %3348 = vmatpush2.msra.mxu0 0.0
    %3349 = vmatprep.subr.mxu0 0.0
    %3350 = vmatpush2.msra.mxu0 0.0
    %3351 = vmatprep.subr.mxu0 0.0
    %3352 = vmatpush2.msra.mxu0 0.0
    %3353 = vmatprep.subr.mxu0 0.0
    %3354 = vmatpush2.msra.mxu0 0.0
    %3355 = vmatprep.subr.mxu0 0.0
    %3356 = vmatpush2.msra.mxu0 0.0
    %3357 = vmatprep.subr.mxu0 0.0
    %3358 = vmatpush2.msra.mxu0 0.0
    %3359 = vmatprep.subr.mxu0 0.0
    %3360 = vmatpush2.msra.mxu0 0.0
    %3361 = vmatprep.subr.mxu0 0.0
    %3362 = vmatpush2.msra.mxu0 0.0
    %3363 = vmatprep.subr.mxu0 0.0
    %3364 = vmatpush2.msra.mxu0 0.0
    %3365 = vmatprep.subr.mxu0 0.0
    %3366 = vmatpush2.msra.mxu0 0.0
    %3367 = vmatprep.subr.mxu0 0.0
    %3368 = vmatpush2.msra.mxu0 0.0
    %3369 = vmatprep.subr.mxu0 0.0
    %3370 = vmatpush2.msra.mxu0 0.0
    %3371 = vmatprep.subr.mxu0 0.0
    %3372 = vmatpush2.msra.mxu0 0.0
    %3373 = vmatprep.subr.mxu0 0.0
    %3374 = vmatpush2.msra.mxu0 0.0
    %3375 = vmatprep.mubr.f32.mxu0 0.0
    %3376 = vmatmul.mubr.f32.gmra.mxu0 %v3238
    %v3377 = vpop.f32.mrf.mxu0
    %v3378 = vadd.f32 0.0, %v3377
    %v3379 = vpop.f32.mrf.mxu0
    %v3380 = vadd.f32 0.0, %v3379
    %3381 = vdwg.mxu0
    %v3386 = vrot.slane %v3307, 6
    %v3387 = vrot.slane %v3309, 6
    %v3388 = vrot.slane %v3378, 6
    %v3389 = vrot.slane %v3380, 6
    %v3394 = vadd.f32 %v2613, %v3386
    %v3395 = vadd.f32 %v2615, %v3387
    %v3396 = vadd.f32 %v2684, %v3388
    %v3397 = vadd.f32 %v2686, %v3389
    %v3398 = vxor.u32 %v3394, 2147483648
    %v3399 = vmul.f32 %v3398, 1.442695
    %v3400 = vpow.pop %v3399
    %v3401 = vadd.f32 %v3400, 1.0
    %v3402 = vrcp.pop %v3401
    %v3403 = vmul.f32 1.0, %v3402
    %v3404 = vxor.u32 %v3395, 2147483648
    %v3405 = vmul.f32 %v3404, 1.442695
    %v3406 = vpow.pop %v3405
    %v3407 = vadd.f32 %v3406, 1.0
    %v3408 = vrcp.pop %v3407
    %v3409 = vmul.f32 1.0, %v3408
    %v3410 = vtanh.pop %v3396
    %v3411 = vxor.u32 %v3397, 2147483648
    %v3412 = vmul.f32 %v3411, 1.442695
    %v3413 = vpow.pop %v3412
    %v3414 = vadd.f32 %v3413, 1.0
    %v3415 = vrcp.pop %v3414
    %v3416 = vmul.f32 1.0, %v3415
    %v3418 = vrot.slane %v3169, 7
    %v3420 = vmul.f32 %v3409, %v3418
    %v3421 = vmul.f32 %v3403, %v3410
    %v3422 = vadd.f32 %v3420, %v3421
    %v3423 = vtanh.pop %v3422
    %v3424 = vmul.f32 %v3416, %v3423
    %3425 = vst [vmem:[#allocation3] sm:$0x4] %v3424
    %v3426 = vld [vmem:[#allocation13] sm:$0xff]
    %v3427 = vld [vmem:[#allocation13 + $0x8] sm:$0xff]
    %v3428 = vld [vmem:[#allocation13 + $0x10] sm:$0xff]
    %v3429 = vld [vmem:[#allocation13 + $0x18] sm:$0xff]
    %v3430 = vld [vmem:[#allocation13 + $0x20] sm:$0xff]
    %v3431 = vld [vmem:[#allocation13 + $0x28] sm:$0xff]
    %v3432 = vld [vmem:[#allocation13 + $0x30] sm:$0xff]
    %v3433 = vld [vmem:[#allocation13 + $0x38] sm:$0xff]
    %v3434 = vld [vmem:[#allocation13 + $0x40] sm:$0xff]
    %v3435 = vld [vmem:[#allocation13 + $0x48] sm:$0xff]
    %v3436 = vld [vmem:[#allocation13 + $0x50] sm:$0xff]
    %v3437 = vld [vmem:[#allocation13 + $0x58] sm:$0xff]
    %v3438 = vld [vmem:[#allocation13 + $0x60] sm:$0xff]
    %v3439 = vld [vmem:[#allocation13 + $0x68] sm:$0xff]
    %v3440 = vld [vmem:[#allocation13 + $0x70] sm:$0xff]
    %v3441 = vld [vmem:[#allocation13 + $0x78] sm:$0xff]
    %v3442 = vld [vmem:[#allocation13 + $0x80] sm:$0xff]
    %v3443 = vld [vmem:[#allocation13 + $0x88] sm:$0xff]
    %v3444 = vld [vmem:[#allocation13 + $0x90] sm:$0xff]
    %v3445 = vld [vmem:[#allocation13 + $0x98] sm:$0xff]
    %v3446 = vld [vmem:[#allocation13 + $0xa0] sm:$0xff]
    %v3447 = vld [vmem:[#allocation13 + $0xa8] sm:$0xff]
    %v3448 = vld [vmem:[#allocation13 + $0xb0] sm:$0xff]
    %v3449 = vld [vmem:[#allocation13 + $0xb8] sm:$0xff]
    %v3450 = vld [vmem:[#allocation13 + $0xc0] sm:$0xff]
    %v3451 = vld [vmem:[#allocation13 + $0xc8] sm:$0xff]
    %v3452 = vld [vmem:[#allocation13 + $0xd0] sm:$0xff]
    %v3453 = vld [vmem:[#allocation13 + $0xd8] sm:$0xff]
    %v3454 = vld [vmem:[#allocation13 + $0xe0] sm:$0xff]
    %v3455 = vld [vmem:[#allocation13 + $0xe8] sm:$0xff]
    %v3456 = vld [vmem:[#allocation13 + $0xf0] sm:$0xff]
    %v3457 = vld [vmem:[#allocation13 + $0xf8] sm:$0xff]
    %v3458 = vld [vmem:[#allocation13 + $0x100] sm:$0xff]
    %v3459 = vld [vmem:[#allocation13 + $0x108] sm:$0xff]
    %v3460 = vld [vmem:[#allocation13 + $0x110] sm:$0xff]
    %v3461 = vld [vmem:[#allocation13 + $0x118] sm:$0xff]
    %v3462 = vld [vmem:[#allocation13 + $0x120] sm:$0xff]
    %v3463 = vld [vmem:[#allocation13 + $0x128] sm:$0xff]
    %v3464 = vld [vmem:[#allocation13 + $0x130] sm:$0xff]
    %v3465 = vld [vmem:[#allocation13 + $0x138] sm:$0xff]
    %v3466 = vld [vmem:[#allocation13 + $0x140] sm:$0xff]
    %v3467 = vld [vmem:[#allocation13 + $0x148] sm:$0xff]
    %v3468 = vld [vmem:[#allocation13 + $0x150] sm:$0xff]
    %v3469 = vld [vmem:[#allocation13 + $0x158] sm:$0xff]
    %v3470 = vld [vmem:[#allocation13 + $0x160] sm:$0xff]
    %v3471 = vld [vmem:[#allocation13 + $0x168] sm:$0xff]
    %v3472 = vld [vmem:[#allocation13 + $0x170] sm:$0xff]
    %v3473 = vld [vmem:[#allocation13 + $0x178] sm:$0xff]
    %v3474 = vld [vmem:[#allocation13 + $0x180] sm:$0xff]
    %v3475 = vld [vmem:[#allocation13 + $0x188] sm:$0xff]
    %v3476 = vld [vmem:[#allocation13 + $0x190] sm:$0xff]
    %v3477 = vld [vmem:[#allocation13 + $0x198] sm:$0xff]
    %v3478 = vld [vmem:[#allocation13 + $0x1a0] sm:$0xff]
    %v3479 = vld [vmem:[#allocation13 + $0x1a8] sm:$0xff]
    %v3480 = vld [vmem:[#allocation13 + $0x1b0] sm:$0xff]
    %v3481 = vld [vmem:[#allocation13 + $0x1b8] sm:$0xff]
    %v3482 = vld [vmem:[#allocation13 + $0x1c0] sm:$0xff]
    %v3483 = vld [vmem:[#allocation13 + $0x1c8] sm:$0xff]
    %v3484 = vld [vmem:[#allocation13 + $0x1d0] sm:$0xff]
    %v3485 = vld [vmem:[#allocation13 + $0x1d8] sm:$0xff]
    %v3486 = vld [vmem:[#allocation13 + $0x1e0] sm:$0xff]
    %v3487 = vld [vmem:[#allocation13 + $0x1e8] sm:$0xff]
    %v3488 = vld [vmem:[#allocation13 + $0x1f0] sm:$0xff]
    %v3489 = vld [vmem:[#allocation13 + $0x1f8] sm:$0xff]
    %v3491 = vrot.slane %v3424, 2
    %3493 = vmatprep.subr.mxu0 %v3487
    %3494 = vmatpush1.msra.mxu0 %v3486
    %3495 = vmatprep.subr.mxu0 %v3483
    %3496 = vmatpush1.msra.mxu0 %v3482
    %3497 = vmatprep.subr.mxu0 %v3479
    %3498 = vmatpush1.msra.mxu0 %v3478
    %3499 = vmatprep.subr.mxu0 %v3475
    %3500 = vmatpush1.msra.mxu0 %v3474
    %3501 = vmatprep.subr.mxu0 %v3471
    %3502 = vmatpush1.msra.mxu0 %v3470
    %3503 = vmatprep.subr.mxu0 %v3467
    %3504 = vmatpush1.msra.mxu0 %v3466
    %3505 = vmatprep.subr.mxu0 %v3463
    %3506 = vmatpush1.msra.mxu0 %v3462
    %3507 = vmatprep.subr.mxu0 %v3459
    %3508 = vmatpush1.msra.mxu0 %v3458
    %3509 = vmatprep.subr.mxu0 %v3455
    %3510 = vmatpush1.msra.mxu0 %v3454
    %3511 = vmatprep.subr.mxu0 %v3451
    %3512 = vmatpush1.msra.mxu0 %v3450
    %3513 = vmatprep.subr.mxu0 %v3447
    %3514 = vmatpush1.msra.mxu0 %v3446
    %3515 = vmatprep.subr.mxu0 %v3443
    %3516 = vmatpush1.msra.mxu0 %v3442
    %3517 = vmatprep.subr.mxu0 %v3439
    %3518 = vmatpush1.msra.mxu0 %v3438
    %3519 = vmatprep.subr.mxu0 %v3435
    %3520 = vmatpush1.msra.mxu0 %v3434
    %3521 = vmatprep.subr.mxu0 %v3431
    %3522 = vmatpush1.msra.mxu0 %v3430
    %3523 = vmatprep.subr.mxu0 %v3427
    %3524 = vmatpush1.msra.mxu0 %v3426
    %3525 = vmatprep.subr.mxu0 0.0
    %3526 = vmatpush2.msra.mxu0 0.0
    %3527 = vmatprep.subr.mxu0 0.0
    %3528 = vmatpush2.msra.mxu0 0.0
    %3529 = vmatprep.subr.mxu0 0.0
    %3530 = vmatpush2.msra.mxu0 0.0
    %3531 = vmatprep.subr.mxu0 0.0
    %3532 = vmatpush2.msra.mxu0 0.0
    %3533 = vmatprep.subr.mxu0 0.0
    %3534 = vmatpush2.msra.mxu0 0.0
    %3535 = vmatprep.subr.mxu0 0.0
    %3536 = vmatpush2.msra.mxu0 0.0
    %3537 = vmatprep.subr.mxu0 0.0
    %3538 = vmatpush2.msra.mxu0 0.0
    %3539 = vmatprep.subr.mxu0 0.0
    %3540 = vmatpush2.msra.mxu0 0.0
    %3541 = vmatprep.subr.mxu0 0.0
    %3542 = vmatpush2.msra.mxu0 0.0
    %3543 = vmatprep.subr.mxu0 0.0
    %3544 = vmatpush2.msra.mxu0 0.0
    %3545 = vmatprep.subr.mxu0 0.0
    %3546 = vmatpush2.msra.mxu0 0.0
    %3547 = vmatprep.subr.mxu0 0.0
    %3548 = vmatpush2.msra.mxu0 0.0
    %3549 = vmatprep.subr.mxu0 0.0
    %3550 = vmatpush2.msra.mxu0 0.0
    %3551 = vmatprep.subr.mxu0 0.0
    %3552 = vmatpush2.msra.mxu0 0.0
    %3553 = vmatprep.subr.mxu0 0.0
    %3554 = vmatpush2.msra.mxu0 0.0
    %3555 = vmatprep.subr.mxu0 0.0
    %3556 = vmatpush2.msra.mxu0 0.0
    %3557 = vmatprep.mubr.f32.mxu0 0.0
    %3558 = vmatmul.mubr.f32.gmra.mxu0 %v3491
    %v3559 = vpop.f32.mrf.mxu0
    %v3560 = vadd.f32 0.0, %v3559
    %v3561 = vpop.f32.mrf.mxu0
    %v3562 = vadd.f32 0.0, %v3561
    %3563 = vdwg.mxu0
    %3564 = vmatprep.subr.mxu0 %v3489
    %3565 = vmatpush1.msra.mxu0 %v3488
    %3566 = vmatprep.subr.mxu0 %v3485
    %3567 = vmatpush1.msra.mxu0 %v3484
    %3568 = vmatprep.subr.mxu0 %v3481
    %3569 = vmatpush1.msra.mxu0 %v3480
    %3570 = vmatprep.subr.mxu0 %v3477
    %3571 = vmatpush1.msra.mxu0 %v3476
    %3572 = vmatprep.subr.mxu0 %v3473
    %3573 = vmatpush1.msra.mxu0 %v3472
    %3574 = vmatprep.subr.mxu0 %v3469
    %3575 = vmatpush1.msra.mxu0 %v3468
    %3576 = vmatprep.subr.mxu0 %v3465
    %3577 = vmatpush1.msra.mxu0 %v3464
    %3578 = vmatprep.subr.mxu0 %v3461
    %3579 = vmatpush1.msra.mxu0 %v3460
    %3580 = vmatprep.subr.mxu0 %v3457
    %3581 = vmatpush1.msra.mxu0 %v3456
    %3582 = vmatprep.subr.mxu0 %v3453
    %3583 = vmatpush1.msra.mxu0 %v3452
    %3584 = vmatprep.subr.mxu0 %v3449
    %3585 = vmatpush1.msra.mxu0 %v3448
    %3586 = vmatprep.subr.mxu0 %v3445
    %3587 = vmatpush1.msra.mxu0 %v3444
    %3588 = vmatprep.subr.mxu0 %v3441
    %3589 = vmatpush1.msra.mxu0 %v3440
    %3590 = vmatprep.subr.mxu0 %v3437
    %3591 = vmatpush1.msra.mxu0 %v3436
    %3592 = vmatprep.subr.mxu0 %v3433
    %3593 = vmatpush1.msra.mxu0 %v3432
    %3594 = vmatprep.subr.mxu0 %v3429
    %3595 = vmatpush1.msra.mxu0 %v3428
    %3596 = vmatprep.subr.mxu0 0.0
    %3597 = vmatpush2.msra.mxu0 0.0
    %3598 = vmatprep.subr.mxu0 0.0
    %3599 = vmatpush2.msra.mxu0 0.0
    %3600 = vmatprep.subr.mxu0 0.0
    %3601 = vmatpush2.msra.mxu0 0.0
    %3602 = vmatprep.subr.mxu0 0.0
    %3603 = vmatpush2.msra.mxu0 0.0
    %3604 = vmatprep.subr.mxu0 0.0
    %3605 = vmatpush2.msra.mxu0 0.0
    %3606 = vmatprep.subr.mxu0 0.0
    %3607 = vmatpush2.msra.mxu0 0.0
    %3608 = vmatprep.subr.mxu0 0.0
    %3609 = vmatpush2.msra.mxu0 0.0
    %3610 = vmatprep.subr.mxu0 0.0
    %3611 = vmatpush2.msra.mxu0 0.0
    %3612 = vmatprep.subr.mxu0 0.0
    %3613 = vmatpush2.msra.mxu0 0.0
    %3614 = vmatprep.subr.mxu0 0.0
    %3615 = vmatpush2.msra.mxu0 0.0
    %3616 = vmatprep.subr.mxu0 0.0
    %3617 = vmatpush2.msra.mxu0 0.0
    %3618 = vmatprep.subr.mxu0 0.0
    %3619 = vmatpush2.msra.mxu0 0.0
    %3620 = vmatprep.subr.mxu0 0.0
    %3621 = vmatpush2.msra.mxu0 0.0
    %3622 = vmatprep.subr.mxu0 0.0
    %3623 = vmatpush2.msra.mxu0 0.0
    %3624 = vmatprep.subr.mxu0 0.0
    %3625 = vmatpush2.msra.mxu0 0.0
    %3626 = vmatprep.subr.mxu0 0.0
    %3627 = vmatpush2.msra.mxu0 0.0
    %3628 = vmatprep.mubr.f32.mxu0 0.0
    %3629 = vmatmul.mubr.f32.gmra.mxu0 %v3491
    %v3630 = vpop.f32.mrf.mxu0
    %v3631 = vadd.f32 0.0, %v3630
    %v3632 = vpop.f32.mrf.mxu0
    %v3633 = vadd.f32 0.0, %v3632
    %3634 = vdwg.mxu0
    %v3639 = vrot.slane %v3560, 5
    %v3640 = vrot.slane %v3562, 5
    %v3641 = vrot.slane %v3631, 5
    %v3642 = vrot.slane %v3633, 5
    %v3647 = vadd.f32 %v2613, %v3639
    %v3648 = vadd.f32 %v2615, %v3640
    %v3649 = vadd.f32 %v2684, %v3641
    %v3650 = vadd.f32 %v2686, %v3642
    %v3651 = vxor.u32 %v3647, 2147483648
    %v3652 = vmul.f32 %v3651, 1.442695
    %v3653 = vpow.pop %v3652
    %v3654 = vadd.f32 %v3653, 1.0
    %v3655 = vrcp.pop %v3654
    %v3656 = vmul.f32 1.0, %v3655
    %v3657 = vxor.u32 %v3648, 2147483648
    %v3658 = vmul.f32 %v3657, 1.442695
    %v3659 = vpow.pop %v3658
    %v3660 = vadd.f32 %v3659, 1.0
    %v3661 = vrcp.pop %v3660
    %v3662 = vmul.f32 1.0, %v3661
    %v3663 = vtanh.pop %v3649
    %v3664 = vxor.u32 %v3650, 2147483648
    %v3665 = vmul.f32 %v3664, 1.442695
    %v3666 = vpow.pop %v3665
    %v3667 = vadd.f32 %v3666, 1.0
    %v3668 = vrcp.pop %v3667
    %v3669 = vmul.f32 1.0, %v3668
    %v3671 = vrot.slane %v3422, 7
    %v3673 = vmul.f32 %v3662, %v3671
    %v3674 = vmul.f32 %v3656, %v3663
    %v3675 = vadd.f32 %v3673, %v3674
    %v3676 = vtanh.pop %v3675
    %v3677 = vmul.f32 %v3669, %v3676
    %3678 = vst [vmem:[#allocation3] sm:$0x8] %v3677
    %v3679 = vld [vmem:[#allocation13] sm:$0xff]
    %v3680 = vld [vmem:[#allocation13 + $0x8] sm:$0xff]
    %v3681 = vld [vmem:[#allocation13 + $0x10] sm:$0xff]
    %v3682 = vld [vmem:[#allocation13 + $0x18] sm:$0xff]
    %v3683 = vld [vmem:[#allocation13 + $0x20] sm:$0xff]
    %v3684 = vld [vmem:[#allocation13 + $0x28] sm:$0xff]
    %v3685 = vld [vmem:[#allocation13 + $0x30] sm:$0xff]
    %v3686 = vld [vmem:[#allocation13 + $0x38] sm:$0xff]
    %v3687 = vld [vmem:[#allocation13 + $0x40] sm:$0xff]
    %v3688 = vld [vmem:[#allocation13 + $0x48] sm:$0xff]
    %v3689 = vld [vmem:[#allocation13 + $0x50] sm:$0xff]
    %v3690 = vld [vmem:[#allocation13 + $0x58] sm:$0xff]
    %v3691 = vld [vmem:[#allocation13 + $0x60] sm:$0xff]
    %v3692 = vld [vmem:[#allocation13 + $0x68] sm:$0xff]
    %v3693 = vld [vmem:[#allocation13 + $0x70] sm:$0xff]
    %v3694 = vld [vmem:[#allocation13 + $0x78] sm:$0xff]
    %v3695 = vld [vmem:[#allocation13 + $0x80] sm:$0xff]
    %v3696 = vld [vmem:[#allocation13 + $0x88] sm:$0xff]
    %v3697 = vld [vmem:[#allocation13 + $0x90] sm:$0xff]
    %v3698 = vld [vmem:[#allocation13 + $0x98] sm:$0xff]
    %v3699 = vld [vmem:[#allocation13 + $0xa0] sm:$0xff]
    %v3700 = vld [vmem:[#allocation13 + $0xa8] sm:$0xff]
    %v3701 = vld [vmem:[#allocation13 + $0xb0] sm:$0xff]
    %v3702 = vld [vmem:[#allocation13 + $0xb8] sm:$0xff]
    %v3703 = vld [vmem:[#allocation13 + $0xc0] sm:$0xff]
    %v3704 = vld [vmem:[#allocation13 + $0xc8] sm:$0xff]
    %v3705 = vld [vmem:[#allocation13 + $0xd0] sm:$0xff]
    %v3706 = vld [vmem:[#allocation13 + $0xd8] sm:$0xff]
    %v3707 = vld [vmem:[#allocation13 + $0xe0] sm:$0xff]
    %v3708 = vld [vmem:[#allocation13 + $0xe8] sm:$0xff]
    %v3709 = vld [vmem:[#allocation13 + $0xf0] sm:$0xff]
    %v3710 = vld [vmem:[#allocation13 + $0xf8] sm:$0xff]
    %v3711 = vld [vmem:[#allocation13 + $0x100] sm:$0xff]
    %v3712 = vld [vmem:[#allocation13 + $0x108] sm:$0xff]
    %v3713 = vld [vmem:[#allocation13 + $0x110] sm:$0xff]
    %v3714 = vld [vmem:[#allocation13 + $0x118] sm:$0xff]
    %v3715 = vld [vmem:[#allocation13 + $0x120] sm:$0xff]
    %v3716 = vld [vmem:[#allocation13 + $0x128] sm:$0xff]
    %v3717 = vld [vmem:[#allocation13 + $0x130] sm:$0xff]
    %v3718 = vld [vmem:[#allocation13 + $0x138] sm:$0xff]
    %v3719 = vld [vmem:[#allocation13 + $0x140] sm:$0xff]
    %v3720 = vld [vmem:[#allocation13 + $0x148] sm:$0xff]
    %v3721 = vld [vmem:[#allocation13 + $0x150] sm:$0xff]
    %v3722 = vld [vmem:[#allocation13 + $0x158] sm:$0xff]
    %v3723 = vld [vmem:[#allocation13 + $0x160] sm:$0xff]
    %v3724 = vld [vmem:[#allocation13 + $0x168] sm:$0xff]
    %v3725 = vld [vmem:[#allocation13 + $0x170] sm:$0xff]
    %v3726 = vld [vmem:[#allocation13 + $0x178] sm:$0xff]
    %v3727 = vld [vmem:[#allocation13 + $0x180] sm:$0xff]
    %v3728 = vld [vmem:[#allocation13 + $0x188] sm:$0xff]
    %v3729 = vld [vmem:[#allocation13 + $0x190] sm:$0xff]
    %v3730 = vld [vmem:[#allocation13 + $0x198] sm:$0xff]
    %v3731 = vld [vmem:[#allocation13 + $0x1a0] sm:$0xff]
    %v3732 = vld [vmem:[#allocation13 + $0x1a8] sm:$0xff]
    %v3733 = vld [vmem:[#allocation13 + $0x1b0] sm:$0xff]
    %v3734 = vld [vmem:[#allocation13 + $0x1b8] sm:$0xff]
    %v3735 = vld [vmem:[#allocation13 + $0x1c0] sm:$0xff]
    %v3736 = vld [vmem:[#allocation13 + $0x1c8] sm:$0xff]
    %v3737 = vld [vmem:[#allocation13 + $0x1d0] sm:$0xff]
    %v3738 = vld [vmem:[#allocation13 + $0x1d8] sm:$0xff]
    %v3739 = vld [vmem:[#allocation13 + $0x1e0] sm:$0xff]
    %v3740 = vld [vmem:[#allocation13 + $0x1e8] sm:$0xff]
    %v3741 = vld [vmem:[#allocation13 + $0x1f0] sm:$0xff]
    %v3742 = vld [vmem:[#allocation13 + $0x1f8] sm:$0xff]
    %v3744 = vrot.slane %v3677, 3
    %3746 = vmatprep.subr.mxu0 %v3740
    %3747 = vmatpush1.msra.mxu0 %v3739
    %3748 = vmatprep.subr.mxu0 %v3736
    %3749 = vmatpush1.msra.mxu0 %v3735
    %3750 = vmatprep.subr.mxu0 %v3732
    %3751 = vmatpush1.msra.mxu0 %v3731
    %3752 = vmatprep.subr.mxu0 %v3728
    %3753 = vmatpush1.msra.mxu0 %v3727
    %3754 = vmatprep.subr.mxu0 %v3724
    %3755 = vmatpush1.msra.mxu0 %v3723
    %3756 = vmatprep.subr.mxu0 %v3720
    %3757 = vmatpush1.msra.mxu0 %v3719
    %3758 = vmatprep.subr.mxu0 %v3716
    %3759 = vmatpush1.msra.mxu0 %v3715
    %3760 = vmatprep.subr.mxu0 %v3712
    %3761 = vmatpush1.msra.mxu0 %v3711
    %3762 = vmatprep.subr.mxu0 %v3708
    %3763 = vmatpush1.msra.mxu0 %v3707
    %3764 = vmatprep.subr.mxu0 %v3704
    %3765 = vmatpush1.msra.mxu0 %v3703
    %3766 = vmatprep.subr.mxu0 %v3700
    %3767 = vmatpush1.msra.mxu0 %v3699
    %3768 = vmatprep.subr.mxu0 %v3696
    %3769 = vmatpush1.msra.mxu0 %v3695
    %3770 = vmatprep.subr.mxu0 %v3692
    %3771 = vmatpush1.msra.mxu0 %v3691
    %3772 = vmatprep.subr.mxu0 %v3688
    %3773 = vmatpush1.msra.mxu0 %v3687
    %3774 = vmatprep.subr.mxu0 %v3684
    %3775 = vmatpush1.msra.mxu0 %v3683
    %3776 = vmatprep.subr.mxu0 %v3680
    %3777 = vmatpush1.msra.mxu0 %v3679
    %3778 = vmatprep.subr.mxu0 0.0
    %3779 = vmatpush2.msra.mxu0 0.0
    %3780 = vmatprep.subr.mxu0 0.0
    %3781 = vmatpush2.msra.mxu0 0.0
    %3782 = vmatprep.subr.mxu0 0.0
    %3783 = vmatpush2.msra.mxu0 0.0
    %3784 = vmatprep.subr.mxu0 0.0
    %3785 = vmatpush2.msra.mxu0 0.0
    %3786 = vmatprep.subr.mxu0 0.0
    %3787 = vmatpush2.msra.mxu0 0.0
    %3788 = vmatprep.subr.mxu0 0.0
    %3789 = vmatpush2.msra.mxu0 0.0
    %3790 = vmatprep.subr.mxu0 0.0
    %3791 = vmatpush2.msra.mxu0 0.0
    %3792 = vmatprep.subr.mxu0 0.0
    %3793 = vmatpush2.msra.mxu0 0.0
    %3794 = vmatprep.subr.mxu0 0.0
    %3795 = vmatpush2.msra.mxu0 0.0
    %3796 = vmatprep.subr.mxu0 0.0
    %3797 = vmatpush2.msra.mxu0 0.0
    %3798 = vmatprep.subr.mxu0 0.0
    %3799 = vmatpush2.msra.mxu0 0.0
    %3800 = vmatprep.subr.mxu0 0.0
    %3801 = vmatpush2.msra.mxu0 0.0
    %3802 = vmatprep.subr.mxu0 0.0
    %3803 = vmatpush2.msra.mxu0 0.0
    %3804 = vmatprep.subr.mxu0 0.0
    %3805 = vmatpush2.msra.mxu0 0.0
    %3806 = vmatprep.subr.mxu0 0.0
    %3807 = vmatpush2.msra.mxu0 0.0
    %3808 = vmatprep.subr.mxu0 0.0
    %3809 = vmatpush2.msra.mxu0 0.0
    %3810 = vmatprep.mubr.f32.mxu0 0.0
    %3811 = vmatmul.mubr.f32.gmra.mxu0 %v3744
    %v3812 = vpop.f32.mrf.mxu0
    %v3813 = vadd.f32 0.0, %v3812
    %v3814 = vpop.f32.mrf.mxu0
    %v3815 = vadd.f32 0.0, %v3814
    %3816 = vdwg.mxu0
    %3817 = vmatprep.subr.mxu0 %v3742
    %3818 = vmatpush1.msra.mxu0 %v3741
    %3819 = vmatprep.subr.mxu0 %v3738
    %3820 = vmatpush1.msra.mxu0 %v3737
    %3821 = vmatprep.subr.mxu0 %v3734
    %3822 = vmatpush1.msra.mxu0 %v3733
    %3823 = vmatprep.subr.mxu0 %v3730
    %3824 = vmatpush1.msra.mxu0 %v3729
    %3825 = vmatprep.subr.mxu0 %v3726
    %3826 = vmatpush1.msra.mxu0 %v3725
    %3827 = vmatprep.subr.mxu0 %v3722
    %3828 = vmatpush1.msra.mxu0 %v3721
    %3829 = vmatprep.subr.mxu0 %v3718
    %3830 = vmatpush1.msra.mxu0 %v3717
    %3831 = vmatprep.subr.mxu0 %v3714
    %3832 = vmatpush1.msra.mxu0 %v3713
    %3833 = vmatprep.subr.mxu0 %v3710
    %3834 = vmatpush1.msra.mxu0 %v3709
    %3835 = vmatprep.subr.mxu0 %v3706
    %3836 = vmatpush1.msra.mxu0 %v3705
    %3837 = vmatprep.subr.mxu0 %v3702
    %3838 = vmatpush1.msra.mxu0 %v3701
    %3839 = vmatprep.subr.mxu0 %v3698
    %3840 = vmatpush1.msra.mxu0 %v3697
    %3841 = vmatprep.subr.mxu0 %v3694
    %3842 = vmatpush1.msra.mxu0 %v3693
    %3843 = vmatprep.subr.mxu0 %v3690
    %3844 = vmatpush1.msra.mxu0 %v3689
    %3845 = vmatprep.subr.mxu0 %v3686
    %3846 = vmatpush1.msra.mxu0 %v3685
    %3847 = vmatprep.subr.mxu0 %v3682
    %3848 = vmatpush1.msra.mxu0 %v3681
    %3849 = vmatprep.subr.mxu0 0.0
    %3850 = vmatpush2.msra.mxu0 0.0
    %3851 = vmatprep.subr.mxu0 0.0
    %3852 = vmatpush2.msra.mxu0 0.0
    %3853 = vmatprep.subr.mxu0 0.0
    %3854 = vmatpush2.msra.mxu0 0.0
    %3855 = vmatprep.subr.mxu0 0.0
    %3856 = vmatpush2.msra.mxu0 0.0
    %3857 = vmatprep.subr.mxu0 0.0
    %3858 = vmatpush2.msra.mxu0 0.0
    %3859 = vmatprep.subr.mxu0 0.0
    %3860 = vmatpush2.msra.mxu0 0.0
    %3861 = vmatprep.subr.mxu0 0.0
    %3862 = vmatpush2.msra.mxu0 0.0
    %3863 = vmatprep.subr.mxu0 0.0
    %3864 = vmatpush2.msra.mxu0 0.0
    %3865 = vmatprep.subr.mxu0 0.0
    %3866 = vmatpush2.msra.mxu0 0.0
    %3867 = vmatprep.subr.mxu0 0.0
    %3868 = vmatpush2.msra.mxu0 0.0
    %3869 = vmatprep.subr.mxu0 0.0
    %3870 = vmatpush2.msra.mxu0 0.0
    %3871 = vmatprep.subr.mxu0 0.0
    %3872 = vmatpush2.msra.mxu0 0.0
    %3873 = vmatprep.subr.mxu0 0.0
    %3874 = vmatpush2.msra.mxu0 0.0
    %3875 = vmatprep.subr.mxu0 0.0
    %3876 = vmatpush2.msra.mxu0 0.0
    %3877 = vmatprep.subr.mxu0 0.0
    %3878 = vmatpush2.msra.mxu0 0.0
    %3879 = vmatprep.subr.mxu0 0.0
    %3880 = vmatpush2.msra.mxu0 0.0
    %3881 = vmatprep.mubr.f32.mxu0 0.0
    %3882 = vmatmul.mubr.f32.gmra.mxu0 %v3744
    %v3883 = vpop.f32.mrf.mxu0
    %v3884 = vadd.f32 0.0, %v3883
    %v3885 = vpop.f32.mrf.mxu0
    %v3886 = vadd.f32 0.0, %v3885
    %3887 = vdwg.mxu0
    %v3892 = vrot.slane %v3813, 4
    %v3893 = vrot.slane %v3815, 4
    %v3894 = vrot.slane %v3884, 4
    %v3895 = vrot.slane %v3886, 4
    %v3900 = vadd.f32 %v2613, %v3892
    %v3901 = vadd.f32 %v2615, %v3893
    %v3902 = vadd.f32 %v2684, %v3894
    %v3903 = vadd.f32 %v2686, %v3895
    %v3904 = vxor.u32 %v3900, 2147483648
    %v3905 = vmul.f32 %v3904, 1.442695
    %v3906 = vpow.pop %v3905
    %v3907 = vadd.f32 %v3906, 1.0
    %v3908 = vrcp.pop %v3907
    %v3909 = vmul.f32 1.0, %v3908
    %v3910 = vxor.u32 %v3901, 2147483648
    %v3911 = vmul.f32 %v3910, 1.442695
    %v3912 = vpow.pop %v3911
    %v3913 = vadd.f32 %v3912, 1.0
    %v3914 = vrcp.pop %v3913
    %v3915 = vmul.f32 1.0, %v3914
    %v3916 = vtanh.pop %v3902
    %v3917 = vxor.u32 %v3903, 2147483648
    %v3918 = vmul.f32 %v3917, 1.442695
    %v3919 = vpow.pop %v3918
    %v3920 = vadd.f32 %v3919, 1.0
    %v3921 = vrcp.pop %v3920
    %v3922 = vmul.f32 1.0, %v3921
    %v3924 = vrot.slane %v3675, 7
    %v3926 = vmul.f32 %v3915, %v3924
    %v3927 = vmul.f32 %v3909, %v3916
    %v3928 = vadd.f32 %v3926, %v3927
    %v3929 = vtanh.pop %v3928
    %v3930 = vmul.f32 %v3922, %v3929
    %3931 = vst [vmem:[#allocation3] sm:$0x10] %v3930
    %v3932 = vld [vmem:[#allocation13] sm:$0xff]
    %v3933 = vld [vmem:[#allocation13 + $0x8] sm:$0xff]
    %v3934 = vld [vmem:[#allocation13 + $0x10] sm:$0xff]
    %v3935 = vld [vmem:[#allocation13 + $0x18] sm:$0xff]
    %v3936 = vld [vmem:[#allocation13 + $0x20] sm:$0xff]
    %v3937 = vld [vmem:[#allocation13 + $0x28] sm:$0xff]
    %v3938 = vld [vmem:[#allocation13 + $0x30] sm:$0xff]
    %v3939 = vld [vmem:[#allocation13 + $0x38] sm:$0xff]
    %v3940 = vld [vmem:[#allocation13 + $0x40] sm:$0xff]
    %v3941 = vld [vmem:[#allocation13 + $0x48] sm:$0xff]
    %v3942 = vld [vmem:[#allocation13 + $0x50] sm:$0xff]
    %v3943 = vld [vmem:[#allocation13 + $0x58] sm:$0xff]
    %v3944 = vld [vmem:[#allocation13 + $0x60] sm:$0xff]
    %v3945 = vld [vmem:[#allocation13 + $0x68] sm:$0xff]
    %v3946 = vld [vmem:[#allocation13 + $0x70] sm:$0xff]
    %v3947 = vld [vmem:[#allocation13 + $0x78] sm:$0xff]
    %v3948 = vld [vmem:[#allocation13 + $0x80] sm:$0xff]
    %v3949 = vld [vmem:[#allocation13 + $0x88] sm:$0xff]
    %v3950 = vld [vmem:[#allocation13 + $0x90] sm:$0xff]
    %v3951 = vld [vmem:[#allocation13 + $0x98] sm:$0xff]
    %v3952 = vld [vmem:[#allocation13 + $0xa0] sm:$0xff]
    %v3953 = vld [vmem:[#allocation13 + $0xa8] sm:$0xff]
    %v3954 = vld [vmem:[#allocation13 + $0xb0] sm:$0xff]
    %v3955 = vld [vmem:[#allocation13 + $0xb8] sm:$0xff]
    %v3956 = vld [vmem:[#allocation13 + $0xc0] sm:$0xff]
    %v3957 = vld [vmem:[#allocation13 + $0xc8] sm:$0xff]
    %v3958 = vld [vmem:[#allocation13 + $0xd0] sm:$0xff]
    %v3959 = vld [vmem:[#allocation13 + $0xd8] sm:$0xff]
    %v3960 = vld [vmem:[#allocation13 + $0xe0] sm:$0xff]
    %v3961 = vld [vmem:[#allocation13 + $0xe8] sm:$0xff]
    %v3962 = vld [vmem:[#allocation13 + $0xf0] sm:$0xff]
    %v3963 = vld [vmem:[#allocation13 + $0xf8] sm:$0xff]
    %v3964 = vld [vmem:[#allocation13 + $0x100] sm:$0xff]
    %v3965 = vld [vmem:[#allocation13 + $0x108] sm:$0xff]
    %v3966 = vld [vmem:[#allocation13 + $0x110] sm:$0xff]
    %v3967 = vld [vmem:[#allocation13 + $0x118] sm:$0xff]
    %v3968 = vld [vmem:[#allocation13 + $0x120] sm:$0xff]
    %v3969 = vld [vmem:[#allocation13 + $0x128] sm:$0xff]
    %v3970 = vld [vmem:[#allocation13 + $0x130] sm:$0xff]
    %v3971 = vld [vmem:[#allocation13 + $0x138] sm:$0xff]
    %v3972 = vld [vmem:[#allocation13 + $0x140] sm:$0xff]
    %v3973 = vld [vmem:[#allocation13 + $0x148] sm:$0xff]
    %v3974 = vld [vmem:[#allocation13 + $0x150] sm:$0xff]
    %v3975 = vld [vmem:[#allocation13 + $0x158] sm:$0xff]
    %v3976 = vld [vmem:[#allocation13 + $0x160] sm:$0xff]
    %v3977 = vld [vmem:[#allocation13 + $0x168] sm:$0xff]
    %v3978 = vld [vmem:[#allocation13 + $0x170] sm:$0xff]
    %v3979 = vld [vmem:[#allocation13 + $0x178] sm:$0xff]
    %v3980 = vld [vmem:[#allocation13 + $0x180] sm:$0xff]
    %v3981 = vld [vmem:[#allocation13 + $0x188] sm:$0xff]
    %v3982 = vld [vmem:[#allocation13 + $0x190] sm:$0xff]
    %v3983 = vld [vmem:[#allocation13 + $0x198] sm:$0xff]
    %v3984 = vld [vmem:[#allocation13 + $0x1a0] sm:$0xff]
    %v3985 = vld [vmem:[#allocation13 + $0x1a8] sm:$0xff]
    %v3986 = vld [vmem:[#allocation13 + $0x1b0] sm:$0xff]
    %v3987 = vld [vmem:[#allocation13 + $0x1b8] sm:$0xff]
    %v3988 = vld [vmem:[#allocation13 + $0x1c0] sm:$0xff]
    %v3989 = vld [vmem:[#allocation13 + $0x1c8] sm:$0xff]
    %v3990 = vld [vmem:[#allocation13 + $0x1d0] sm:$0xff]
    %v3991 = vld [vmem:[#allocation13 + $0x1d8] sm:$0xff]
    %v3992 = vld [vmem:[#allocation13 + $0x1e0] sm:$0xff]
    %v3993 = vld [vmem:[#allocation13 + $0x1e8] sm:$0xff]
    %v3994 = vld [vmem:[#allocation13 + $0x1f0] sm:$0xff]
    %v3995 = vld [vmem:[#allocation13 + $0x1f8] sm:$0xff]
    %v3997 = vrot.slane %v3930, 4
    %3999 = vmatprep.subr.mxu0 %v3993
    %4000 = vmatpush1.msra.mxu0 %v3992
    %4001 = vmatprep.subr.mxu0 %v3989
    %4002 = vmatpush1.msra.mxu0 %v3988
    %4003 = vmatprep.subr.mxu0 %v3985
    %4004 = vmatpush1.msra.mxu0 %v3984
    %4005 = vmatprep.subr.mxu0 %v3981
    %4006 = vmatpush1.msra.mxu0 %v3980
    %4007 = vmatprep.subr.mxu0 %v3977
    %4008 = vmatpush1.msra.mxu0 %v3976
    %4009 = vmatprep.subr.mxu0 %v3973
    %4010 = vmatpush1.msra.mxu0 %v3972
    %4011 = vmatprep.subr.mxu0 %v3969
    %4012 = vmatpush1.msra.mxu0 %v3968
    %4013 = vmatprep.subr.mxu0 %v3965
    %4014 = vmatpush1.msra.mxu0 %v3964
    %4015 = vmatprep.subr.mxu0 %v3961
    %4016 = vmatpush1.msra.mxu0 %v3960
    %4017 = vmatprep.subr.mxu0 %v3957
    %4018 = vmatpush1.msra.mxu0 %v3956
    %4019 = vmatprep.subr.mxu0 %v3953
    %4020 = vmatpush1.msra.mxu0 %v3952
    %4021 = vmatprep.subr.mxu0 %v3949
    %4022 = vmatpush1.msra.mxu0 %v3948
    %4023 = vmatprep.subr.mxu0 %v3945
    %4024 = vmatpush1.msra.mxu0 %v3944
    %4025 = vmatprep.subr.mxu0 %v3941
    %4026 = vmatpush1.msra.mxu0 %v3940
    %4027 = vmatprep.subr.mxu0 %v3937
    %4028 = vmatpush1.msra.mxu0 %v3936
    %4029 = vmatprep.subr.mxu0 %v3933
    %4030 = vmatpush1.msra.mxu0 %v3932
    %4031 = vmatprep.subr.mxu0 0.0
    %4032 = vmatpush2.msra.mxu0 0.0
    %4033 = vmatprep.subr.mxu0 0.0
    %4034 = vmatpush2.msra.mxu0 0.0
    %4035 = vmatprep.subr.mxu0 0.0
    %4036 = vmatpush2.msra.mxu0 0.0
    %4037 = vmatprep.subr.mxu0 0.0
    %4038 = vmatpush2.msra.mxu0 0.0
    %4039 = vmatprep.subr.mxu0 0.0
    %4040 = vmatpush2.msra.mxu0 0.0
    %4041 = vmatprep.subr.mxu0 0.0
    %4042 = vmatpush2.msra.mxu0 0.0
    %4043 = vmatprep.subr.mxu0 0.0
    %4044 = vmatpush2.msra.mxu0 0.0
    %4045 = vmatprep.subr.mxu0 0.0
    %4046 = vmatpush2.msra.mxu0 0.0
    %4047 = vmatprep.subr.mxu0 0.0
    %4048 = vmatpush2.msra.mxu0 0.0
    %4049 = vmatprep.subr.mxu0 0.0
    %4050 = vmatpush2.msra.mxu0 0.0
    %4051 = vmatprep.subr.mxu0 0.0
    %4052 = vmatpush2.msra.mxu0 0.0
    %4053 = vmatprep.subr.mxu0 0.0
    %4054 = vmatpush2.msra.mxu0 0.0
    %4055 = vmatprep.subr.mxu0 0.0
    %4056 = vmatpush2.msra.mxu0 0.0
    %4057 = vmatprep.subr.mxu0 0.0
    %4058 = vmatpush2.msra.mxu0 0.0
    %4059 = vmatprep.subr.mxu0 0.0
    %4060 = vmatpush2.msra.mxu0 0.0
    %4061 = vmatprep.subr.mxu0 0.0
    %4062 = vmatpush2.msra.mxu0 0.0
    %4063 = vmatprep.mubr.f32.mxu0 0.0
    %4064 = vmatmul.mubr.f32.gmra.mxu0 %v3997
    %v4065 = vpop.f32.mrf.mxu0
    %v4066 = vadd.f32 0.0, %v4065
    %v4067 = vpop.f32.mrf.mxu0
    %v4068 = vadd.f32 0.0, %v4067
    %4069 = vdwg.mxu0
    %4070 = vmatprep.subr.mxu0 %v3995
    %4071 = vmatpush1.msra.mxu0 %v3994
    %4072 = vmatprep.subr.mxu0 %v3991
    %4073 = vmatpush1.msra.mxu0 %v3990
    %4074 = vmatprep.subr.mxu0 %v3987
    %4075 = vmatpush1.msra.mxu0 %v3986
    %4076 = vmatprep.subr.mxu0 %v3983
    %4077 = vmatpush1.msra.mxu0 %v3982
    %4078 = vmatprep.subr.mxu0 %v3979
    %4079 = vmatpush1.msra.mxu0 %v3978
    %4080 = vmatprep.subr.mxu0 %v3975
    %4081 = vmatpush1.msra.mxu0 %v3974
    %4082 = vmatprep.subr.mxu0 %v3971
    %4083 = vmatpush1.msra.mxu0 %v3970
    %4084 = vmatprep.subr.mxu0 %v3967
    %4085 = vmatpush1.msra.mxu0 %v3966
    %4086 = vmatprep.subr.mxu0 %v3963
    %4087 = vmatpush1.msra.mxu0 %v3962
    %4088 = vmatprep.subr.mxu0 %v3959
    %4089 = vmatpush1.msra.mxu0 %v3958
    %4090 = vmatprep.subr.mxu0 %v3955
    %4091 = vmatpush1.msra.mxu0 %v3954
    %4092 = vmatprep.subr.mxu0 %v3951
    %4093 = vmatpush1.msra.mxu0 %v3950
    %4094 = vmatprep.subr.mxu0 %v3947
    %4095 = vmatpush1.msra.mxu0 %v3946
    %4096 = vmatprep.subr.mxu0 %v3943
    %4097 = vmatpush1.msra.mxu0 %v3942
    %4098 = vmatprep.subr.mxu0 %v3939
    %4099 = vmatpush1.msra.mxu0 %v3938
    %4100 = vmatprep.subr.mxu0 %v3935
    %4101 = vmatpush1.msra.mxu0 %v3934
    %4102 = vmatprep.subr.mxu0 0.0
    %4103 = vmatpush2.msra.mxu0 0.0
    %4104 = vmatprep.subr.mxu0 0.0
    %4105 = vmatpush2.msra.mxu0 0.0
    %4106 = vmatprep.subr.mxu0 0.0
    %4107 = vmatpush2.msra.mxu0 0.0
    %4108 = vmatprep.subr.mxu0 0.0
    %4109 = vmatpush2.msra.mxu0 0.0
    %4110 = vmatprep.subr.mxu0 0.0
    %4111 = vmatpush2.msra.mxu0 0.0
    %4112 = vmatprep.subr.mxu0 0.0
    %4113 = vmatpush2.msra.mxu0 0.0
    %4114 = vmatprep.subr.mxu0 0.0
    %4115 = vmatpush2.msra.mxu0 0.0
    %4116 = vmatprep.subr.mxu0 0.0
    %4117 = vmatpush2.msra.mxu0 0.0
    %4118 = vmatprep.subr.mxu0 0.0
    %4119 = vmatpush2.msra.mxu0 0.0
    %4120 = vmatprep.subr.mxu0 0.0
    %4121 = vmatpush2.msra.mxu0 0.0
    %4122 = vmatprep.subr.mxu0 0.0
    %4123 = vmatpush2.msra.mxu0 0.0
    %4124 = vmatprep.subr.mxu0 0.0
    %4125 = vmatpush2.msra.mxu0 0.0
    %4126 = vmatprep.subr.mxu0 0.0
    %4127 = vmatpush2.msra.mxu0 0.0
    %4128 = vmatprep.subr.mxu0 0.0
    %4129 = vmatpush2.msra.mxu0 0.0
    %4130 = vmatprep.subr.mxu0 0.0
    %4131 = vmatpush2.msra.mxu0 0.0
    %4132 = vmatprep.subr.mxu0 0.0
    %4133 = vmatpush2.msra.mxu0 0.0
    %4134 = vmatprep.mubr.f32.mxu0 0.0
    %4135 = vmatmul.mubr.f32.gmra.mxu0 %v3997
    %v4136 = vpop.f32.mrf.mxu0
    %v4137 = vadd.f32 0.0, %v4136
    %v4138 = vpop.f32.mrf.mxu0
    %v4139 = vadd.f32 0.0, %v4138
    %4140 = vdwg.mxu0
    %v4145 = vrot.slane %v4066, 3
    %v4146 = vrot.slane %v4068, 3
    %v4147 = vrot.slane %v4137, 3
    %v4148 = vrot.slane %v4139, 3
    %v4153 = vadd.f32 %v2613, %v4145
    %v4154 = vadd.f32 %v2615, %v4146
    %v4155 = vadd.f32 %v2684, %v4147
    %v4156 = vadd.f32 %v2686, %v4148
    %v4157 = vxor.u32 %v4153, 2147483648
    %v4158 = vmul.f32 %v4157, 1.442695
    %v4159 = vpow.pop %v4158
    %v4160 = vadd.f32 %v4159, 1.0
    %v4161 = vrcp.pop %v4160
    %v4162 = vmul.f32 1.0, %v4161
    %v4163 = vxor.u32 %v4154, 2147483648
    %v4164 = vmul.f32 %v4163, 1.442695
    %v4165 = vpow.pop %v4164
    %v4166 = vadd.f32 %v4165, 1.0
    %v4167 = vrcp.pop %v4166
    %v4168 = vmul.f32 1.0, %v4167
    %v4169 = vtanh.pop %v4155
    %v4170 = vxor.u32 %v4156, 2147483648
    %v4171 = vmul.f32 %v4170, 1.442695
    %v4172 = vpow.pop %v4171
    %v4173 = vadd.f32 %v4172, 1.0
    %v4174 = vrcp.pop %v4173
    %v4175 = vmul.f32 1.0, %v4174
    %v4177 = vrot.slane %v3928, 7
    %v4179 = vmul.f32 %v4168, %v4177
    %v4180 = vmul.f32 %v4162, %v4169
    %v4181 = vadd.f32 %v4179, %v4180
    %v4182 = vtanh.pop %v4181
    %v4183 = vmul.f32 %v4175, %v4182
    %4184 = vst [vmem:[#allocation3] sm:$0x20] %v4183
    %v4185 = vld [vmem:[#allocation13] sm:$0xff]
    %v4186 = vld [vmem:[#allocation13 + $0x8] sm:$0xff]
    %v4187 = vld [vmem:[#allocation13 + $0x10] sm:$0xff]
    %v4188 = vld [vmem:[#allocation13 + $0x18] sm:$0xff]
    %v4189 = vld [vmem:[#allocation13 + $0x20] sm:$0xff]
    %v4190 = vld [vmem:[#allocation13 + $0x28] sm:$0xff]
    %v4191 = vld [vmem:[#allocation13 + $0x30] sm:$0xff]
    %v4192 = vld [vmem:[#allocation13 + $0x38] sm:$0xff]
    %v4193 = vld [vmem:[#allocation13 + $0x40] sm:$0xff]
    %v4194 = vld [vmem:[#allocation13 + $0x48] sm:$0xff]
    %v4195 = vld [vmem:[#allocation13 + $0x50] sm:$0xff]
    %v4196 = vld [vmem:[#allocation13 + $0x58] sm:$0xff]
    %v4197 = vld [vmem:[#allocation13 + $0x60] sm:$0xff]
    %v4198 = vld [vmem:[#allocation13 + $0x68] sm:$0xff]
    %v4199 = vld [vmem:[#allocation13 + $0x70] sm:$0xff]
    %v4200 = vld [vmem:[#allocation13 + $0x78] sm:$0xff]
    %v4201 = vld [vmem:[#allocation13 + $0x80] sm:$0xff]
    %v4202 = vld [vmem:[#allocation13 + $0x88] sm:$0xff]
    %v4203 = vld [vmem:[#allocation13 + $0x90] sm:$0xff]
    %v4204 = vld [vmem:[#allocation13 + $0x98] sm:$0xff]
    %v4205 = vld [vmem:[#allocation13 + $0xa0] sm:$0xff]
    %v4206 = vld [vmem:[#allocation13 + $0xa8] sm:$0xff]
    %v4207 = vld [vmem:[#allocation13 + $0xb0] sm:$0xff]
    %v4208 = vld [vmem:[#allocation13 + $0xb8] sm:$0xff]
    %v4209 = vld [vmem:[#allocation13 + $0xc0] sm:$0xff]
    %v4210 = vld [vmem:[#allocation13 + $0xc8] sm:$0xff]
    %v4211 = vld [vmem:[#allocation13 + $0xd0] sm:$0xff]
    %v4212 = vld [vmem:[#allocation13 + $0xd8] sm:$0xff]
    %v4213 = vld [vmem:[#allocation13 + $0xe0] sm:$0xff]
    %v4214 = vld [vmem:[#allocation13 + $0xe8] sm:$0xff]
    %v4215 = vld [vmem:[#allocation13 + $0xf0] sm:$0xff]
    %v4216 = vld [vmem:[#allocation13 + $0xf8] sm:$0xff]
    %v4217 = vld [vmem:[#allocation13 + $0x100] sm:$0xff]
    %v4218 = vld [vmem:[#allocation13 + $0x108] sm:$0xff]
    %v4219 = vld [vmem:[#allocation13 + $0x110] sm:$0xff]
    %v4220 = vld [vmem:[#allocation13 + $0x118] sm:$0xff]
    %v4221 = vld [vmem:[#allocation13 + $0x120] sm:$0xff]
    %v4222 = vld [vmem:[#allocation13 + $0x128] sm:$0xff]
    %v4223 = vld [vmem:[#allocation13 + $0x130] sm:$0xff]
    %v4224 = vld [vmem:[#allocation13 + $0x138] sm:$0xff]
    %v4225 = vld [vmem:[#allocation13 + $0x140] sm:$0xff]
    %v4226 = vld [vmem:[#allocation13 + $0x148] sm:$0xff]
    %v4227 = vld [vmem:[#allocation13 + $0x150] sm:$0xff]
    %v4228 = vld [vmem:[#allocation13 + $0x158] sm:$0xff]
    %v4229 = vld [vmem:[#allocation13 + $0x160] sm:$0xff]
    %v4230 = vld [vmem:[#allocation13 + $0x168] sm:$0xff]
    %v4231 = vld [vmem:[#allocation13 + $0x170] sm:$0xff]
    %v4232 = vld [vmem:[#allocation13 + $0x178] sm:$0xff]
    %v4233 = vld [vmem:[#allocation13 + $0x180] sm:$0xff]
    %v4234 = vld [vmem:[#allocation13 + $0x188] sm:$0xff]
    %v4235 = vld [vmem:[#allocation13 + $0x190] sm:$0xff]
    %v4236 = vld [vmem:[#allocation13 + $0x198] sm:$0xff]
    %v4237 = vld [vmem:[#allocation13 + $0x1a0] sm:$0xff]
    %v4238 = vld [vmem:[#allocation13 + $0x1a8] sm:$0xff]
    %v4239 = vld [vmem:[#allocation13 + $0x1b0] sm:$0xff]
    %v4240 = vld [vmem:[#allocation13 + $0x1b8] sm:$0xff]
    %v4241 = vld [vmem:[#allocation13 + $0x1c0] sm:$0xff]
    %v4242 = vld [vmem:[#allocation13 + $0x1c8] sm:$0xff]
    %v4243 = vld [vmem:[#allocation13 + $0x1d0] sm:$0xff]
    %v4244 = vld [vmem:[#allocation13 + $0x1d8] sm:$0xff]
    %v4245 = vld [vmem:[#allocation13 + $0x1e0] sm:$0xff]
    %v4246 = vld [vmem:[#allocation13 + $0x1e8] sm:$0xff]
    %v4247 = vld [vmem:[#allocation13 + $0x1f0] sm:$0xff]
    %v4248 = vld [vmem:[#allocation13 + $0x1f8] sm:$0xff]
    %v4250 = vrot.slane %v4183, 5
    %4252 = vmatprep.subr.mxu0 %v4246
    %4253 = vmatpush1.msra.mxu0 %v4245
    %4254 = vmatprep.subr.mxu0 %v4242
    %4255 = vmatpush1.msra.mxu0 %v4241
    %4256 = vmatprep.subr.mxu0 %v4238
    %4257 = vmatpush1.msra.mxu0 %v4237
    %4258 = vmatprep.subr.mxu0 %v4234
    %4259 = vmatpush1.msra.mxu0 %v4233
    %4260 = vmatprep.subr.mxu0 %v4230
    %4261 = vmatpush1.msra.mxu0 %v4229
    %4262 = vmatprep.subr.mxu0 %v4226
    %4263 = vmatpush1.msra.mxu0 %v4225
    %4264 = vmatprep.subr.mxu0 %v4222
    %4265 = vmatpush1.msra.mxu0 %v4221
    %4266 = vmatprep.subr.mxu0 %v4218
    %4267 = vmatpush1.msra.mxu0 %v4217
    %4268 = vmatprep.subr.mxu0 %v4214
    %4269 = vmatpush1.msra.mxu0 %v4213
    %4270 = vmatprep.subr.mxu0 %v4210
    %4271 = vmatpush1.msra.mxu0 %v4209
    %4272 = vmatprep.subr.mxu0 %v4206
    %4273 = vmatpush1.msra.mxu0 %v4205
    %4274 = vmatprep.subr.mxu0 %v4202
    %4275 = vmatpush1.msra.mxu0 %v4201
    %4276 = vmatprep.subr.mxu0 %v4198
    %4277 = vmatpush1.msra.mxu0 %v4197
    %4278 = vmatprep.subr.mxu0 %v4194
    %4279 = vmatpush1.msra.mxu0 %v4193
    %4280 = vmatprep.subr.mxu0 %v4190
    %4281 = vmatpush1.msra.mxu0 %v4189
    %4282 = vmatprep.subr.mxu0 %v4186
    %4283 = vmatpush1.msra.mxu0 %v4185
    %4284 = vmatprep.subr.mxu0 0.0
    %4285 = vmatpush2.msra.mxu0 0.0
    %4286 = vmatprep.subr.mxu0 0.0
    %4287 = vmatpush2.msra.mxu0 0.0
    %4288 = vmatprep.subr.mxu0 0.0
    %4289 = vmatpush2.msra.mxu0 0.0
    %4290 = vmatprep.subr.mxu0 0.0
    %4291 = vmatpush2.msra.mxu0 0.0
    %4292 = vmatprep.subr.mxu0 0.0
    %4293 = vmatpush2.msra.mxu0 0.0
    %4294 = vmatprep.subr.mxu0 0.0
    %4295 = vmatpush2.msra.mxu0 0.0
    %4296 = vmatprep.subr.mxu0 0.0
    %4297 = vmatpush2.msra.mxu0 0.0
    %4298 = vmatprep.subr.mxu0 0.0
    %4299 = vmatpush2.msra.mxu0 0.0
    %4300 = vmatprep.subr.mxu0 0.0
    %4301 = vmatpush2.msra.mxu0 0.0
    %4302 = vmatprep.subr.mxu0 0.0
    %4303 = vmatpush2.msra.mxu0 0.0
    %4304 = vmatprep.subr.mxu0 0.0
    %4305 = vmatpush2.msra.mxu0 0.0
    %4306 = vmatprep.subr.mxu0 0.0
    %4307 = vmatpush2.msra.mxu0 0.0
    %4308 = vmatprep.subr.mxu0 0.0
    %4309 = vmatpush2.msra.mxu0 0.0
    %4310 = vmatprep.subr.mxu0 0.0
    %4311 = vmatpush2.msra.mxu0 0.0
    %4312 = vmatprep.subr.mxu0 0.0
    %4313 = vmatpush2.msra.mxu0 0.0
    %4314 = vmatprep.subr.mxu0 0.0
    %4315 = vmatpush2.msra.mxu0 0.0
    %4316 = vmatprep.mubr.f32.mxu0 0.0
    %4317 = vmatmul.mubr.f32.gmra.mxu0 %v4250
    %v4318 = vpop.f32.mrf.mxu0
    %v4319 = vadd.f32 0.0, %v4318
    %v4320 = vpop.f32.mrf.mxu0
    %v4321 = vadd.f32 0.0, %v4320
    %4322 = vdwg.mxu0
    %4323 = vmatprep.subr.mxu0 %v4248
    %4324 = vmatpush1.msra.mxu0 %v4247
    %4325 = vmatprep.subr.mxu0 %v4244
    %4326 = vmatpush1.msra.mxu0 %v4243
    %4327 = vmatprep.subr.mxu0 %v4240
    %4328 = vmatpush1.msra.mxu0 %v4239
    %4329 = vmatprep.subr.mxu0 %v4236
    %4330 = vmatpush1.msra.mxu0 %v4235
    %4331 = vmatprep.subr.mxu0 %v4232
    %4332 = vmatpush1.msra.mxu0 %v4231
    %4333 = vmatprep.subr.mxu0 %v4228
    %4334 = vmatpush1.msra.mxu0 %v4227
    %4335 = vmatprep.subr.mxu0 %v4224
    %4336 = vmatpush1.msra.mxu0 %v4223
    %4337 = vmatprep.subr.mxu0 %v4220
    %4338 = vmatpush1.msra.mxu0 %v4219
    %4339 = vmatprep.subr.mxu0 %v4216
    %4340 = vmatpush1.msra.mxu0 %v4215
    %4341 = vmatprep.subr.mxu0 %v4212
    %4342 = vmatpush1.msra.mxu0 %v4211
    %4343 = vmatprep.subr.mxu0 %v4208
    %4344 = vmatpush1.msra.mxu0 %v4207
    %4345 = vmatprep.subr.mxu0 %v4204
    %4346 = vmatpush1.msra.mxu0 %v4203
    %4347 = vmatprep.subr.mxu0 %v4200
    %4348 = vmatpush1.msra.mxu0 %v4199
    %4349 = vmatprep.subr.mxu0 %v4196
    %4350 = vmatpush1.msra.mxu0 %v4195
    %4351 = vmatprep.subr.mxu0 %v4192
    %4352 = vmatpush1.msra.mxu0 %v4191
    %4353 = vmatprep.subr.mxu0 %v4188
    %4354 = vmatpush1.msra.mxu0 %v4187
    %4355 = vmatprep.subr.mxu0 0.0
    %4356 = vmatpush2.msra.mxu0 0.0
    %4357 = vmatprep.subr.mxu0 0.0
    %4358 = vmatpush2.msra.mxu0 0.0
    %4359 = vmatprep.subr.mxu0 0.0
    %4360 = vmatpush2.msra.mxu0 0.0
    %4361 = vmatprep.subr.mxu0 0.0
    %4362 = vmatpush2.msra.mxu0 0.0
    %4363 = vmatprep.subr.mxu0 0.0
    %4364 = vmatpush2.msra.mxu0 0.0
    %4365 = vmatprep.subr.mxu0 0.0
    %4366 = vmatpush2.msra.mxu0 0.0
    %4367 = vmatprep.subr.mxu0 0.0
    %4368 = vmatpush2.msra.mxu0 0.0
    %4369 = vmatprep.subr.mxu0 0.0
    %4370 = vmatpush2.msra.mxu0 0.0
    %4371 = vmatprep.subr.mxu0 0.0
    %4372 = vmatpush2.msra.mxu0 0.0
    %4373 = vmatprep.subr.mxu0 0.0
    %4374 = vmatpush2.msra.mxu0 0.0
    %4375 = vmatprep.subr.mxu0 0.0
    %4376 = vmatpush2.msra.mxu0 0.0
    %4377 = vmatprep.subr.mxu0 0.0
    %4378 = vmatpush2.msra.mxu0 0.0
    %4379 = vmatprep.subr.mxu0 0.0
    %4380 = vmatpush2.msra.mxu0 0.0
    %4381 = vmatprep.subr.mxu0 0.0
    %4382 = vmatpush2.msra.mxu0 0.0
    %4383 = vmatprep.subr.mxu0 0.0
    %4384 = vmatpush2.msra.mxu0 0.0
    %4385 = vmatprep.subr.mxu0 0.0
    %4386 = vmatpush2.msra.mxu0 0.0
    %4387 = vmatprep.mubr.f32.mxu0 0.0
    %4388 = vmatmul.mubr.f32.gmra.mxu0 %v4250
    %v4389 = vpop.f32.mrf.mxu0
    %v4390 = vadd.f32 0.0, %v4389
    %v4391 = vpop.f32.mrf.mxu0
    %v4392 = vadd.f32 0.0, %v4391
    %4393 = vdwg.mxu0
    %v4398 = vrot.slane %v4319, 2
    %v4399 = vrot.slane %v4321, 2
    %v4400 = vrot.slane %v4390, 2
    %v4401 = vrot.slane %v4392, 2
    %v4406 = vadd.f32 %v2613, %v4398
    %v4407 = vadd.f32 %v2615, %v4399
    %v4408 = vadd.f32 %v2684, %v4400
    %v4409 = vadd.f32 %v2686, %v4401
    %v4410 = vxor.u32 %v4406, 2147483648
    %v4411 = vmul.f32 %v4410, 1.442695
    %v4412 = vpow.pop %v4411
    %v4413 = vadd.f32 %v4412, 1.0
    %v4414 = vrcp.pop %v4413
    %v4415 = vmul.f32 1.0, %v4414
    %v4416 = vxor.u32 %v4407, 2147483648
    %v4417 = vmul.f32 %v4416, 1.442695
    %v4418 = vpow.pop %v4417
    %v4419 = vadd.f32 %v4418, 1.0
    %v4420 = vrcp.pop %v4419
    %v4421 = vmul.f32 1.0, %v4420
    %v4422 = vtanh.pop %v4408
    %v4423 = vxor.u32 %v4409, 2147483648
    %v4424 = vmul.f32 %v4423, 1.442695
    %v4425 = vpow.pop %v4424
    %v4426 = vadd.f32 %v4425, 1.0
    %v4427 = vrcp.pop %v4426
    %v4428 = vmul.f32 1.0, %v4427
    %v4430 = vrot.slane %v4181, 7
    %v4432 = vmul.f32 %v4421, %v4430
    %v4433 = vmul.f32 %v4415, %v4422
    %v4434 = vadd.f32 %v4432, %v4433
    %v4435 = vtanh.pop %v4434
    %v4436 = vmul.f32 %v4428, %v4435
    %4437 = vst [vmem:[#allocation3] sm:$0x40] %v4436
    %v4438 = vld [vmem:[#allocation13] sm:$0xff]
    %v4439 = vld [vmem:[#allocation13 + $0x8] sm:$0xff]
    %v4440 = vld [vmem:[#allocation13 + $0x10] sm:$0xff]
    %v4441 = vld [vmem:[#allocation13 + $0x18] sm:$0xff]
    %v4442 = vld [vmem:[#allocation13 + $0x20] sm:$0xff]
    %v4443 = vld [vmem:[#allocation13 + $0x28] sm:$0xff]
    %v4444 = vld [vmem:[#allocation13 + $0x30] sm:$0xff]
    %v4445 = vld [vmem:[#allocation13 + $0x38] sm:$0xff]
    %v4446 = vld [vmem:[#allocation13 + $0x40] sm:$0xff]
    %v4447 = vld [vmem:[#allocation13 + $0x48] sm:$0xff]
    %v4448 = vld [vmem:[#allocation13 + $0x50] sm:$0xff]
    %v4449 = vld [vmem:[#allocation13 + $0x58] sm:$0xff]
    %v4450 = vld [vmem:[#allocation13 + $0x60] sm:$0xff]
    %v4451 = vld [vmem:[#allocation13 + $0x68] sm:$0xff]
    %v4452 = vld [vmem:[#allocation13 + $0x70] sm:$0xff]
    %v4453 = vld [vmem:[#allocation13 + $0x78] sm:$0xff]
    %v4454 = vld [vmem:[#allocation13 + $0x80] sm:$0xff]
    %v4455 = vld [vmem:[#allocation13 + $0x88] sm:$0xff]
    %v4456 = vld [vmem:[#allocation13 + $0x90] sm:$0xff]
    %v4457 = vld [vmem:[#allocation13 + $0x98] sm:$0xff]
    %v4458 = vld [vmem:[#allocation13 + $0xa0] sm:$0xff]
    %v4459 = vld [vmem:[#allocation13 + $0xa8] sm:$0xff]
    %v4460 = vld [vmem:[#allocation13 + $0xb0] sm:$0xff]
    %v4461 = vld [vmem:[#allocation13 + $0xb8] sm:$0xff]
    %v4462 = vld [vmem:[#allocation13 + $0xc0] sm:$0xff]
    %v4463 = vld [vmem:[#allocation13 + $0xc8] sm:$0xff]
    %v4464 = vld [vmem:[#allocation13 + $0xd0] sm:$0xff]
    %v4465 = vld [vmem:[#allocation13 + $0xd8] sm:$0xff]
    %v4466 = vld [vmem:[#allocation13 + $0xe0] sm:$0xff]
    %v4467 = vld [vmem:[#allocation13 + $0xe8] sm:$0xff]
    %v4468 = vld [vmem:[#allocation13 + $0xf0] sm:$0xff]
    %v4469 = vld [vmem:[#allocation13 + $0xf8] sm:$0xff]
    %v4470 = vld [vmem:[#allocation13 + $0x100] sm:$0xff]
    %v4471 = vld [vmem:[#allocation13 + $0x108] sm:$0xff]
    %v4472 = vld [vmem:[#allocation13 + $0x110] sm:$0xff]
    %v4473 = vld [vmem:[#allocation13 + $0x118] sm:$0xff]
    %v4474 = vld [vmem:[#allocation13 + $0x120] sm:$0xff]
    %v4475 = vld [vmem:[#allocation13 + $0x128] sm:$0xff]
    %v4476 = vld [vmem:[#allocation13 + $0x130] sm:$0xff]
    %v4477 = vld [vmem:[#allocation13 + $0x138] sm:$0xff]
    %v4478 = vld [vmem:[#allocation13 + $0x140] sm:$0xff]
    %v4479 = vld [vmem:[#allocation13 + $0x148] sm:$0xff]
    %v4480 = vld [vmem:[#allocation13 + $0x150] sm:$0xff]
    %v4481 = vld [vmem:[#allocation13 + $0x158] sm:$0xff]
    %v4482 = vld [vmem:[#allocation13 + $0x160] sm:$0xff]
    %v4483 = vld [vmem:[#allocation13 + $0x168] sm:$0xff]
    %v4484 = vld [vmem:[#allocation13 + $0x170] sm:$0xff]
    %v4485 = vld [vmem:[#allocation13 + $0x178] sm:$0xff]
    %v4486 = vld [vmem:[#allocation13 + $0x180] sm:$0xff]
    %v4487 = vld [vmem:[#allocation13 + $0x188] sm:$0xff]
    %v4488 = vld [vmem:[#allocation13 + $0x190] sm:$0xff]
    %v4489 = vld [vmem:[#allocation13 + $0x198] sm:$0xff]
    %v4490 = vld [vmem:[#allocation13 + $0x1a0] sm:$0xff]
    %v4491 = vld [vmem:[#allocation13 + $0x1a8] sm:$0xff]
    %v4492 = vld [vmem:[#allocation13 + $0x1b0] sm:$0xff]
    %v4493 = vld [vmem:[#allocation13 + $0x1b8] sm:$0xff]
    %v4494 = vld [vmem:[#allocation13 + $0x1c0] sm:$0xff]
    %v4495 = vld [vmem:[#allocation13 + $0x1c8] sm:$0xff]
    %v4496 = vld [vmem:[#allocation13 + $0x1d0] sm:$0xff]
    %v4497 = vld [vmem:[#allocation13 + $0x1d8] sm:$0xff]
    %v4498 = vld [vmem:[#allocation13 + $0x1e0] sm:$0xff]
    %v4499 = vld [vmem:[#allocation13 + $0x1e8] sm:$0xff]
    %v4500 = vld [vmem:[#allocation13 + $0x1f0] sm:$0xff]
    %v4501 = vld [vmem:[#allocation13 + $0x1f8] sm:$0xff]
    %v4503 = vrot.slane %v4436, 6
    %4505 = vmatprep.subr.mxu0 %v4499
    %4506 = vmatpush1.msra.mxu0 %v4498
    %4507 = vmatprep.subr.mxu0 %v4495
    %4508 = vmatpush1.msra.mxu0 %v4494
    %4509 = vmatprep.subr.mxu0 %v4491
    %4510 = vmatpush1.msra.mxu0 %v4490
    %4511 = vmatprep.subr.mxu0 %v4487
    %4512 = vmatpush1.msra.mxu0 %v4486
    %4513 = vmatprep.subr.mxu0 %v4483
    %4514 = vmatpush1.msra.mxu0 %v4482
    %4515 = vmatprep.subr.mxu0 %v4479
    %4516 = vmatpush1.msra.mxu0 %v4478
    %4517 = vmatprep.subr.mxu0 %v4475
    %4518 = vmatpush1.msra.mxu0 %v4474
    %4519 = vmatprep.subr.mxu0 %v4471
    %4520 = vmatpush1.msra.mxu0 %v4470
    %4521 = vmatprep.subr.mxu0 %v4467
    %4522 = vmatpush1.msra.mxu0 %v4466
    %4523 = vmatprep.subr.mxu0 %v4463
    %4524 = vmatpush1.msra.mxu0 %v4462
    %4525 = vmatprep.subr.mxu0 %v4459
    %4526 = vmatpush1.msra.mxu0 %v4458
    %4527 = vmatprep.subr.mxu0 %v4455
    %4528 = vmatpush1.msra.mxu0 %v4454
    %4529 = vmatprep.subr.mxu0 %v4451
    %4530 = vmatpush1.msra.mxu0 %v4450
    %4531 = vmatprep.subr.mxu0 %v4447
    %4532 = vmatpush1.msra.mxu0 %v4446
    %4533 = vmatprep.subr.mxu0 %v4443
    %4534 = vmatpush1.msra.mxu0 %v4442
    %4535 = vmatprep.subr.mxu0 %v4439
    %4536 = vmatpush1.msra.mxu0 %v4438
    %4537 = vmatprep.subr.mxu0 0.0
    %4538 = vmatpush2.msra.mxu0 0.0
    %4539 = vmatprep.subr.mxu0 0.0
    %4540 = vmatpush2.msra.mxu0 0.0
    %4541 = vmatprep.subr.mxu0 0.0
    %4542 = vmatpush2.msra.mxu0 0.0
    %4543 = vmatprep.subr.mxu0 0.0
    %4544 = vmatpush2.msra.mxu0 0.0
    %4545 = vmatprep.subr.mxu0 0.0
    %4546 = vmatpush2.msra.mxu0 0.0
    %4547 = vmatprep.subr.mxu0 0.0
    %4548 = vmatpush2.msra.mxu0 0.0
    %4549 = vmatprep.subr.mxu0 0.0
    %4550 = vmatpush2.msra.mxu0 0.0
    %4551 = vmatprep.subr.mxu0 0.0
    %4552 = vmatpush2.msra.mxu0 0.0
    %4553 = vmatprep.subr.mxu0 0.0
    %4554 = vmatpush2.msra.mxu0 0.0
    %4555 = vmatprep.subr.mxu0 0.0
    %4556 = vmatpush2.msra.mxu0 0.0
    %4557 = vmatprep.subr.mxu0 0.0
    %4558 = vmatpush2.msra.mxu0 0.0
    %4559 = vmatprep.subr.mxu0 0.0
    %4560 = vmatpush2.msra.mxu0 0.0
    %4561 = vmatprep.subr.mxu0 0.0
    %4562 = vmatpush2.msra.mxu0 0.0
    %4563 = vmatprep.subr.mxu0 0.0
    %4564 = vmatpush2.msra.mxu0 0.0
    %4565 = vmatprep.subr.mxu0 0.0
    %4566 = vmatpush2.msra.mxu0 0.0
    %4567 = vmatprep.subr.mxu0 0.0
    %4568 = vmatpush2.msra.mxu0 0.0
    %4569 = vmatprep.mubr.f32.mxu0 0.0
    %4570 = vmatmul.mubr.f32.gmra.mxu0 %v4503
    %v4571 = vpop.f32.mrf.mxu0
    %v4572 = vadd.f32 0.0, %v4571
    %v4573 = vpop.f32.mrf.mxu0
    %v4574 = vadd.f32 0.0, %v4573
    %4575 = vdwg.mxu0
    %4576 = vmatprep.subr.mxu0 %v4501
    %4577 = vmatpush1.msra.mxu0 %v4500
    %4578 = vmatprep.subr.mxu0 %v4497
    %4579 = vmatpush1.msra.mxu0 %v4496
    %4580 = vmatprep.subr.mxu0 %v4493
    %4581 = vmatpush1.msra.mxu0 %v4492
    %4582 = vmatprep.subr.mxu0 %v4489
    %4583 = vmatpush1.msra.mxu0 %v4488
    %4584 = vmatprep.subr.mxu0 %v4485
    %4585 = vmatpush1.msra.mxu0 %v4484
    %4586 = vmatprep.subr.mxu0 %v4481
    %4587 = vmatpush1.msra.mxu0 %v4480
    %4588 = vmatprep.subr.mxu0 %v4477
    %4589 = vmatpush1.msra.mxu0 %v4476
    %4590 = vmatprep.subr.mxu0 %v4473
    %4591 = vmatpush1.msra.mxu0 %v4472
    %4592 = vmatprep.subr.mxu0 %v4469
    %4593 = vmatpush1.msra.mxu0 %v4468
    %4594 = vmatprep.subr.mxu0 %v4465
    %4595 = vmatpush1.msra.mxu0 %v4464
    %4596 = vmatprep.subr.mxu0 %v4461
    %4597 = vmatpush1.msra.mxu0 %v4460
    %4598 = vmatprep.subr.mxu0 %v4457
    %4599 = vmatpush1.msra.mxu0 %v4456
    %4600 = vmatprep.subr.mxu0 %v4453
    %4601 = vmatpush1.msra.mxu0 %v4452
    %4602 = vmatprep.subr.mxu0 %v4449
    %4603 = vmatpush1.msra.mxu0 %v4448
    %4604 = vmatprep.subr.mxu0 %v4445
    %4605 = vmatpush1.msra.mxu0 %v4444
    %4606 = vmatprep.subr.mxu0 %v4441
    %4607 = vmatpush1.msra.mxu0 %v4440
    %4608 = vmatprep.subr.mxu0 0.0
    %4609 = vmatpush2.msra.mxu0 0.0
    %4610 = vmatprep.subr.mxu0 0.0
    %4611 = vmatpush2.msra.mxu0 0.0
    %4612 = vmatprep.subr.mxu0 0.0
    %4613 = vmatpush2.msra.mxu0 0.0
    %4614 = vmatprep.subr.mxu0 0.0
    %4615 = vmatpush2.msra.mxu0 0.0
    %4616 = vmatprep.subr.mxu0 0.0
    %4617 = vmatpush2.msra.mxu0 0.0
    %4618 = vmatprep.subr.mxu0 0.0
    %4619 = vmatpush2.msra.mxu0 0.0
    %4620 = vmatprep.subr.mxu0 0.0
    %4621 = vmatpush2.msra.mxu0 0.0
    %4622 = vmatprep.subr.mxu0 0.0
    %4623 = vmatpush2.msra.mxu0 0.0
    %4624 = vmatprep.subr.mxu0 0.0
    %4625 = vmatpush2.msra.mxu0 0.0
    %4626 = vmatprep.subr.mxu0 0.0
    %4627 = vmatpush2.msra.mxu0 0.0
    %4628 = vmatprep.subr.mxu0 0.0
    %4629 = vmatpush2.msra.mxu0 0.0
    %4630 = vmatprep.subr.mxu0 0.0
    %4631 = vmatpush2.msra.mxu0 0.0
    %4632 = vmatprep.subr.mxu0 0.0
    %4633 = vmatpush2.msra.mxu0 0.0
    %4634 = vmatprep.subr.mxu0 0.0
    %4635 = vmatpush2.msra.mxu0 0.0
    %4636 = vmatprep.subr.mxu0 0.0
    %4637 = vmatpush2.msra.mxu0 0.0
    %4638 = vmatprep.subr.mxu0 0.0
    %4639 = vmatpush2.msra.mxu0 0.0
    %4640 = vmatprep.mubr.f32.mxu0 0.0
    %4641 = vmatmul.mubr.f32.gmra.mxu0 %v4503
    %v4642 = vpop.f32.mrf.mxu0
    %v4643 = vadd.f32 0.0, %v4642
    %v4644 = vpop.f32.mrf.mxu0
    %v4645 = vadd.f32 0.0, %v4644
    %4646 = vdwg.mxu0
    %v4651 = vrot.slane %v4572, 1
    %v4652 = vrot.slane %v4574, 1
    %v4653 = vrot.slane %v4643, 1
    %v4654 = vrot.slane %v4645, 1
    %v4659 = vadd.f32 %v2613, %v4651
    %v4660 = vadd.f32 %v2615, %v4652
    %v4661 = vadd.f32 %v2684, %v4653
    %v4662 = vadd.f32 %v2686, %v4654
    %v4663 = vxor.u32 %v4659, 2147483648
    %v4664 = vmul.f32 %v4663, 1.442695
    %v4665 = vpow.pop %v4664
    %v4666 = vadd.f32 %v4665, 1.0
    %v4667 = vrcp.pop %v4666
    %v4668 = vmul.f32 1.0, %v4667
    %v4669 = vxor.u32 %v4660, 2147483648
    %v4670 = vmul.f32 %v4669, 1.442695
    %v4671 = vpow.pop %v4670
    %v4672 = vadd.f32 %v4671, 1.0
    %v4673 = vrcp.pop %v4672
    %v4674 = vmul.f32 1.0, %v4673
    %v4675 = vtanh.pop %v4661
    %v4676 = vxor.u32 %v4662, 2147483648
    %v4677 = vmul.f32 %v4676, 1.442695
    %v4678 = vpow.pop %v4677
    %v4679 = vadd.f32 %v4678, 1.0
    %v4680 = vrcp.pop %v4679
    %v4681 = vmul.f32 1.0, %v4680
    %v4683 = vrot.slane %v4434, 7
    %v4685 = vmul.f32 %v4674, %v4683
    %v4686 = vmul.f32 %v4668, %v4675
    %v4687 = vadd.f32 %v4685, %v4686
    %v4688 = vtanh.pop %v4687
    %v4689 = vmul.f32 %v4681, %v4688
    %4690 = vst [vmem:[#allocation3] sm:$0x80] %v4689
    %4691 = vst [vmem:[#allocation17 - $0x6] sm:$0x80] %v4689
    %4692 = vst [vmem:[#allocation19 - $0x6] sm:$0x80] %v4687
    %v4693 = vld [vmem:[#allocation3] sm:$0xff]
    %v4694 = vld [vmem:[#allocation15] sm:$0xff]
    %v4695 = vld [vmem:[#allocation15 + $0x8] sm:$0xff]
    %v4696 = vld [vmem:[#allocation15 + $0x10] sm:$0xff]
    %v4697 = vld [vmem:[#allocation15 + $0x18] sm:$0xff]
    %v4698 = vld [vmem:[#allocation15 + $0x20] sm:$0xff]
    %v4699 = vld [vmem:[#allocation15 + $0x28] sm:$0xff]
    %v4700 = vld [vmem:[#allocation15 + $0x30] sm:$0xff]
    %v4701 = vld [vmem:[#allocation15 + $0x38] sm:$0xff]
    %v4702 = vld [vmem:[#allocation15 + $0x40] sm:$0xff]
    %v4703 = vld [vmem:[#allocation15 + $0x48] sm:$0xff]
    %v4704 = vld [vmem:[#allocation15 + $0x50] sm:$0xff]
    %v4705 = vld [vmem:[#allocation15 + $0x58] sm:$0xff]
    %v4706 = vld [vmem:[#allocation15 + $0x60] sm:$0xff]
    %v4707 = vld [vmem:[#allocation15 + $0x68] sm:$0xff]
    %v4708 = vld [vmem:[#allocation15 + $0x70] sm:$0xff]
    %v4709 = vld [vmem:[#allocation15 + $0x78] sm:$0xff]
    %v4710 = vld [vmem:[%s10] sm:$0x1]
    %v4712 = vlaneseq
    %v4713 = vshrl.u32 %v4712, 7
    %v4714 = vsub.s32 0, %v4713
    %v4715 = vrot.slane %v4710, %v4714
    %4717 = vmatprep.subr.mxu0 0.0
    %4718 = vmatpush1.msra.mxu0 %v4709
    %4719 = vmatprep.subr.mxu0 0.0
    %4720 = vmatpush1.msra.mxu0 %v4708
    %4721 = vmatprep.subr.mxu0 0.0
    %4722 = vmatpush1.msra.mxu0 %v4707
    %4723 = vmatprep.subr.mxu0 0.0
    %4724 = vmatpush1.msra.mxu0 %v4706
    %4725 = vmatprep.subr.mxu0 0.0
    %4726 = vmatpush1.msra.mxu0 %v4705
    %4727 = vmatprep.subr.mxu0 0.0
    %4728 = vmatpush1.msra.mxu0 %v4704
    %4729 = vmatprep.subr.mxu0 0.0
    %4730 = vmatpush1.msra.mxu0 %v4703
    %4731 = vmatprep.subr.mxu0 0.0
    %4732 = vmatpush1.msra.mxu0 %v4702
    %4733 = vmatprep.subr.mxu0 0.0
    %4734 = vmatpush1.msra.mxu0 %v4701
    %4735 = vmatprep.subr.mxu0 0.0
    %4736 = vmatpush1.msra.mxu0 %v4700
    %4737 = vmatprep.subr.mxu0 0.0
    %4738 = vmatpush1.msra.mxu0 %v4699
    %4739 = vmatprep.subr.mxu0 0.0
    %4740 = vmatpush1.msra.mxu0 %v4698
    %4741 = vmatprep.subr.mxu0 0.0
    %4742 = vmatpush1.msra.mxu0 %v4697
    %4743 = vmatprep.subr.mxu0 0.0
    %4744 = vmatpush1.msra.mxu0 %v4696
    %4745 = vmatprep.subr.mxu0 0.0
    %4746 = vmatpush1.msra.mxu0 %v4695
    %4747 = vmatprep.subr.mxu0 0.0
    %4748 = vmatpush1.msra.mxu0 %v4694
    %4749 = vmatprep.subr.mxu0 0.0
    %4750 = vmatpush2.msra.mxu0 0.0
    %4751 = vmatprep.subr.mxu0 0.0
    %4752 = vmatpush2.msra.mxu0 0.0
    %4753 = vmatprep.subr.mxu0 0.0
    %4754 = vmatpush2.msra.mxu0 0.0
    %4755 = vmatprep.subr.mxu0 0.0
    %4756 = vmatpush2.msra.mxu0 0.0
    %4757 = vmatprep.subr.mxu0 0.0
    %4758 = vmatpush2.msra.mxu0 0.0
    %4759 = vmatprep.subr.mxu0 0.0
    %4760 = vmatpush2.msra.mxu0 0.0
    %4761 = vmatprep.subr.mxu0 0.0
    %4762 = vmatpush2.msra.mxu0 0.0
    %4763 = vmatprep.subr.mxu0 0.0
    %4764 = vmatpush2.msra.mxu0 0.0
    %4765 = vmatprep.subr.mxu0 0.0
    %4766 = vmatpush2.msra.mxu0 0.0
    %4767 = vmatprep.subr.mxu0 0.0
    %4768 = vmatpush2.msra.mxu0 0.0
    %4769 = vmatprep.subr.mxu0 0.0
    %4770 = vmatpush2.msra.mxu0 0.0
    %4771 = vmatprep.subr.mxu0 0.0
    %4772 = vmatpush2.msra.mxu0 0.0
    %4773 = vmatprep.subr.mxu0 0.0
    %4774 = vmatpush2.msra.mxu0 0.0
    %4775 = vmatprep.subr.mxu0 0.0
    %4776 = vmatpush2.msra.mxu0 0.0
    %4777 = vmatprep.subr.mxu0 0.0
    %4778 = vmatpush2.msra.mxu0 0.0
    %4779 = vmatprep.subr.mxu0 0.0
    %4780 = vmatpush2.msra.mxu0 0.0
    %4781 = vmatprep.mubr.f32.mxu0 0.0
    %4782 = vmatmul.mubr.f32.gmra.mxu0 %v4693
    %v4783 = vpop.f32.mrf.mxu0
    %v4784 = vadd.f32 %v4715, %v4783
    %v4785 = vpop.f32.mrf.mxu0
    %4786 = vdwg.mxu0
    %4787 = vst [vmem:[#allocation16] sm:$0xff] %v4784
    // Predicated region
    $region74: #{tpu_custom_call.1} parent=1 // pred_check
      _
    $region75: #{tpu_custom_call.1} parent=1 // pred_check_branch
      %4789 = sbr.rel (0) target = $region77
    $region76: #{tpu_custom_call.1} parent=1 // pred_region
      %s4791 = ssub.s32 128, 128
      %4792 = vsyncadd [#allocation6], %s4791
      %s4794 = sshll.u32 [#allocation16], 4
      %s4795 = int_to_ptr.vmem [resolvable:$true] %s4794
      %4797 = dma.vmem_to_hbm [thread:$0]  %s4795, 128, %s11, [#allocation6]
    $region77: #{tpu_custom_call.1} parent=1 // pred_fallthru
      _
    // Predicated region
    $region78: #{tpu_custom_call.1} parent=1 // pred_check
      _
    $region79: #{tpu_custom_call.1} parent=1 // pred_check_branch
      %4799 = sbr.rel (0) target = $region81
    $region80: #{tpu_custom_call.1} parent=1 // pred_region
      %s4801 = ssub.s32 32, 32
      %4802 = vsyncadd [#allocation18], %s4801
      %s4804 = sshll.u32 [#allocation17], 4
      %s4805 = int_to_ptr.vmem [resolvable:$true] %s4804
      %4807 = dma.vmem_to_hbm [thread:$0]  %s4805, 32, %s12, [#allocation18]
    $region81: #{tpu_custom_call.1} parent=1 // pred_fallthru
      _
    // Predicated region
    $region82: #{tpu_custom_call.1} parent=1 // pred_check
      _
    $region83: #{tpu_custom_call.1} parent=1 // pred_check_branch
      %4809 = sbr.rel (0) target = $region85
    $region84: #{tpu_custom_call.1} parent=1 // pred_region
      %s4811 = ssub.s32 32, 32
      %4812 = vsyncadd [#allocation18], %s4811
      %s4814 = sshll.u32 [#allocation19], 4
      %s4815 = int_to_ptr.vmem [resolvable:$true] %s4814
      %4817 = dma.vmem_to_hbm [thread:$0]  %s4815, 32, %s13, [#allocation18]
    $region85: #{tpu_custom_call.1} parent=1 // pred_fallthru
      _
    // Predicated region
    $region86: #{tpu_custom_call.1} parent=1 // pred_check
      _
    $region87: #{tpu_custom_call.1} parent=1 // pred_check_branch
      %4819 = sbr.rel (0) target = $region89
    $region88: #{tpu_custom_call.1} parent=1 // pred_region
      %4820 = dma.done [#allocation6], 128
    $region89: #{tpu_custom_call.1} parent=1 // pred_fallthru
      _
    // Predicated region
    $region90: #{tpu_custom_call.1} parent=1 // pred_check
      _
    $region91: #{tpu_custom_call.1} parent=1 // pred_check_branch
      %4822 = sbr.rel (0) target = $region93
    $region92: #{tpu_custom_call.1} parent=1 // pred_region
      %4823 = dma.done [#allocation18], 32
    $region93: #{tpu_custom_call.1} parent=1 // pred_fallthru
      _
    // Predicated region
    $region94: #{tpu_custom_call.1} parent=1 // pred_check
      _
    $region95: #{tpu_custom_call.1} parent=1 // pred_check_branch
      %4825 = sbr.rel (0) target = $region97
    $region96: #{tpu_custom_call.1} parent=1 // pred_region
      %4826 = dma.done [#allocation18], 32
    $region97: #{tpu_custom_call.1} parent=1 // pred_fallthru
      _
    %4827 = vsyncpa [#allocation5], 1
    %4828 = vsyncpa [#allocation8], 1
    %4829 = vsyncpa [#allocation11], 1
    %4830 = vsyncpa [#allocation14], 1
    %4831 = vsyncpa [#allocation6], 1
    %4832 = vsyncpa [#allocation18], 1

</llo_original>
